<compile_context>
chip_gen: v5e
topology: v5e:2x2
jax: 0.10.0
libtpu: 0.0.40
codegen_flags: <defaults>
</compile_context>

<pallas_src>
import jax
import jax.numpy as jnp
from jax.experimental import pallas as pl
from jax.experimental.pallas import tpu as pltpu

# ---- tiny synthetic flan-T5-style config (MXU / lane friendly) ----
D_MODEL = 128
N_HEADS = 4
D_HEAD  = D_MODEL // N_HEADS   # 32
D_FF    = 256
VOCAB   = 128
EPS     = 1e-6
NEG     = -1e9

B, S, T = 2, 8, 8
NE = B * S                     # encoder rows
ND = B * T                     # decoder rows

# packed-weight column offsets
QKV_ENC, QKV_DSELF, QKV_DCROSS = 0, 3 * D_MODEL, 6 * D_MODEL          # in wqkv (128,1152)
WO_ENC, WO_DSELF, WO_DCROSS, WO_LMHEAD = 0, D_MODEL, 2 * D_MODEL, 3 * D_MODEL  # in wo (128,512)
WI_ENC, WI_DEC = 0, 2 * D_FF                                          # in wi (128,1024)
WFFO_ENC, WFFO_DEC = 0, D_MODEL                                       # in wff_out (256,256)
# packed RMSNorm scale rows in ln (8,128)
LN_E1, LN_E2, LN_EF, LN_D1, LN_D2, LN_D3, LN_DF = 0, 1, 2, 3, 4, 5, 6


def _model_kernel(
    # data
    ids_enc_ref, ids_dec_ref, labels_ref, mask_ref,
    # packed weights
    embed_ref, ln_ref, wqkv_ref, wo_ref, wi_ref, wffo_ref,
    # output
    loss_ref,
):
    f32, bf16 = jnp.float32, jnp.bfloat16

    def embed_lookup(ids):                      # ids: (N, 1) int32
        n = ids.shape[0]
        col = jax.lax.broadcasted_iota(jnp.int32, (n, VOCAB), 1)
        onehot = (col == ids).astype(bf16)      # (N, VOCAB) one-hot on the MXU
        # TODO(synk): at real vocab size use a scalar-prefetch row gather instead.
        return jnp.dot(onehot, embed_ref[...], preferred_element_type=f32)   # (N, D) f32

    def rms(x, row):                            # x: (N, D) f32; static ln row index
        var = jnp.mean(x * x, axis=-1, keepdims=True)
        return x * jax.lax.rsqrt(var + EPS) * ln_ref[row:row + 1, :]

    def mha(xq, xkv, bias, qkv_col, o_col, tq, tk, self_attn):
        xq16 = xq.astype(bf16)
        if self_attn:
            # ONE fused (N,128)@(128,384) bf16 matmul for q, k, v.
            qkv = jnp.dot(xq16, wqkv_ref[:, qkv_col:qkv_col + 3 * D_MODEL],
                          preferred_element_type=f32)                         # (N, 3D)
            q = qkv[:, :D_MODEL]
            k = qkv[:, D_MODEL:2 * D_MODEL]
            v = qkv[:, 2 * D_MODEL:]
        else:
            # cross-attn: q from xq, k/v from xkv
            q = jnp.dot(xq16, wqkv_ref[:, qkv_col:qkv_col + D_MODEL],
                        preferred_element_type=f32)                           # (Nq, D)
            kv = jnp.dot(xkv.astype(bf16),
                         wqkv_ref[:, qkv_col + D_MODEL:qkv_col + 3 * D_MODEL],
                         preferred_element_type=f32)                          # (Nk, 2D)
            k = kv[:, :D_MODEL]
            v = kv[:, D_MODEL:]
        q3 = q.reshape(B, tq, D_MODEL).astype(bf16)
        k3 = k.reshape(B, tk, D_MODEL).astype(bf16)
        v3 = v.reshape(B, tk, D_MODEL).astype(bf16)
        outs = []
        for h in range(N_HEADS):                # static unroll over heads
            lo, hi = h * D_HEAD, (h + 1) * D_HEAD
            qh, kh, vh = q3[:, :, lo:hi], k3[:, :, lo:hi], v3[:, :, lo:hi]
            # NOTE: T5 attention intentionally has NO 1/sqrt(d) scaling.
            s = jnp.einsum('bqd,bkd->bqk', qh, kh,
                           preferred_element_type=f32) + bias                 # (B,tq,tk) f32
            m = jnp.max(s, axis=-1, keepdims=True)
            p = jnp.exp(s - m)                                                # unnormalized
            inv_l = pl.reciprocal(jnp.sum(p, axis=-1, keepdims=True), approx=True)  # EUP
            oh = jnp.einsum('bqk,bkd->bqd', p.astype(bf16), vh,
                            preferred_element_type=f32)                       # (B,tq,dh)
            outs.append(oh * inv_l)             # deferred softmax normalization
        o = jnp.concatenate(outs, axis=-1).reshape(B * tq, D_MODEL).astype(bf16)
        return jnp.dot(o, wo_ref[:, o_col:o_col + D_MODEL],
                       preferred_element_type=f32)

    def ffn(x, wi_col, wo_col):
        # gated-GELU: single fused (D, 2F) input projection, split on a 256 boundary.
        hcat = jnp.dot(x.astype(bf16), wi_ref[:, wi_col:wi_col + 2 * D_FF],
                       preferred_element_type=f32)                            # (N, 2F) f32
        g = jax.nn.gelu(hcat[:, :D_FF], approximate=True)
        u = hcat[:, D_FF:]
        return jnp.dot((g * u).astype(bf16),
                       wffo_ref[:, wo_col:wo_col + D_MODEL],
                       preferred_element_type=f32)

    # ---- attention biases built in-kernel (never materialized in HBM), f32 ----
    key_bias = ((1.0 - mask_ref[...]) * NEG)[:, None, :]          # (B, 1, S)
    rowi = jax.lax.broadcasted_iota(jnp.int32, (T, T), 0)
    coli = jax.lax.broadcasted_iota(jnp.int32, (T, T), 1)
    causal_bias = jnp.where(rowi >= coli, 0.0, NEG)[None, :, :]   # (1, T, T)
    # TODO(synk): T5 relative-position attention bias omitted in this synthetic model.
    # NOTE: decoder self-attn keys at padded label positions are not masked, matching
    # HF T5 behavior when no decoder_attention_mask is supplied.

    # ---- encoder ----
    x = embed_lookup(ids_enc_ref[...])                            # (B*S, D) f32
    x = x + mha(rms(x, LN_E1), None, key_bias, QKV_ENC, WO_ENC, S, S, self_attn=True)
    x = x + ffn(rms(x, LN_E2), WI_ENC, WFFO_ENC)
    enc_out = rms(x, LN_EF)                                       # (B*S, D)

    # ---- decoder ----
    y = embed_lookup(ids_dec_ref[...])                            # (B*T, D) f32
    y = y + mha(rms(y, LN_D1), None, causal_bias, QKV_DSELF, WO_DSELF, T, T, self_attn=True)
    y = y + mha(rms(y, LN_D2), enc_out, key_bias, QKV_DCROSS, WO_DCROSS, T, S, self_attn=False)
    y = y + ffn(rms(y, LN_D3), WI_DEC, WFFO_DEC)
    dec_h = rms(y, LN_DF)                                         # (B*T, D)

    # ---- LM head + cross-entropy (ignore_index=-100); logits never leave VMEM ----
    logits = jnp.dot(dec_h.astype(bf16), wo_ref[:, WO_LMHEAD:WO_LMHEAD + D_MODEL],
                     preferred_element_type=f32)                  # (B*T, V) f32
    labels = labels_ref[...]                                      # (B*T, 1) int32
    m = jnp.max(logits, axis=-1, keepdims=True)
    lse = jnp.log(jnp.sum(jnp.exp(logits - m), axis=-1, keepdims=True)) + m
    col = jax.lax.broadcasted_iota(jnp.int32, (ND, VOCAB), 1)
    picked = jnp.sum(jnp.where(col == labels, logits, 0.0), axis=-1, keepdims=True)
    valid = (labels != -100).astype(f32)
    total = jnp.sum((lse - picked) * valid, keepdims=True)        # (1, 1)
    count = jnp.maximum(jnp.sum(valid, keepdims=True), 1.0)       # (1, 1)
    # NOTE: if every label is -100 the loss is 0 here (PyTorch would return NaN).
    loss_ref[0] = (total * pl.reciprocal(count, approx=True))[0, 0]


# ---------------- params & wrapper (plain JAX glue only) ----------------

def init_params(key):
    ks = iter(jax.random.split(key, 8))

    def w(shape, scale=0.02):
        # weights stored in bf16 (MXU-native), accumulation stays f32 in-kernel
        return (jax.random.normal(next(ks), shape, jnp.float32) * scale).astype(jnp.bfloat16)

    return dict(
        embed=w((VOCAB, D_MODEL), 1.0),
        # 7 RMSNorm scales packed into one (8,128) f32 operand (row 7 unused)
        ln=jnp.ones((8, D_MODEL), jnp.float32),
        # [enc_self | dec_self | dec_cross] fused (wq|wk|wv) projections
        wqkv=w((D_MODEL, 3 * 3 * D_MODEL)),
        # [enc_o | dec_self_o | dec_cross_o | lm_head]
        wo=w((D_MODEL, 4 * D_MODEL)),
        # [enc (wi_0|wi_1) | dec (wi_0|wi_1)] gated-FFN input projections
        wi=w((D_MODEL, 2 * 2 * D_FF)),
        # [enc_ffn_out | dec_ffn_out]
        wff_out=w((D_FF, 2 * D_MODEL)),
    )


def stance_classifier_forward(params, input_ids, attention_mask, labels, train=True):
    """train=True path of stance_classifier.forward: seq2seq LM loss (scalar)."""
    if not train:
        # TODO(synk): eval path (bert.generate greedy decode + tokenizer.batch_decode)
        # has no clean Pallas equivalent (autoregressive loop over a tokenizer vocab).
        raise NotImplementedError("generate/decode path not implemented")

    # T5 shift-right (decoder_start_token_id=0, replace -100 with pad id 0): cheap JAX glue.
    dec_ids = jnp.concatenate([jnp.zeros((B, 1), labels.dtype), labels[:, :-1]], axis=1)
    dec_ids = jnp.where(dec_ids == -100, 0, dec_ids)

    ids_enc = input_ids.reshape(NE, 1).astype(jnp.int32)
    ids_dec = dec_ids.reshape(ND, 1).astype(jnp.int32)
    labels_col = labels.reshape(ND, 1).astype(jnp.int32)
    mask_f = attention_mask.astype(jnp.float32)               # (B, S)

    inputs = [
        ids_enc, ids_dec, labels_col, mask_f,
        params['embed'], params['ln'], params['wqkv'],
        params['wo'], params['wi'], params['wff_out'],
    ]

    def full_spec(a):                    # every operand is a single full VMEM block
        return pl.BlockSpec(a.shape, lambda i: (0, 0))

    # TODO(synk): at real sizes give the grid a leading "parallel" axis (batch / row tiles)
    # with per-block (total,count) partials so v7x's second TensorCore is used, and set
    # vmem_limit_bytes with headroom once the vocab-tiled lm_head+CE stage is added.
    loss = pl.pallas_call(
        _model_kernel,
        out_shape=jax.ShapeDtypeStruct((1,), jnp.float32),
        grid=(1,),
        in_specs=[full_spec(a) for a in inputs],
        out_specs=pl.BlockSpec(memory_space=pltpu.SMEM),      # scalar loss, no HBM tile
        compiler_params=pltpu.CompilerParams(dimension_semantics=("arbitrary",)),
    )(*inputs)
    return loss[0]


if __name__ == "__main__":
    key = jax.random.PRNGKey(0)
    k_param, k_in, k_lab = jax.random.split(key, 3)

    params = init_params(k_param)

    input_ids = jax.random.randint(k_in, (B, S), 0, VOCAB, dtype=jnp.int32)
    attention_mask = (jnp.arange(S)[None, :] < jnp.array([[8], [6]])).astype(jnp.int32)
    labels = jax.random.randint(k_lab, (B, T), 0, VOCAB, dtype=jnp.int32)
    labels = labels.at[1, 6:].set(-100)   # exercise ignore_index=-100

    loss = stance_classifier_forward(params, input_ids, attention_mask, labels, train=True)
    jax.block_until_ready(loss)
    assert loss.shape == () and jnp.isfinite(loss)
    print("KERNEL_OK")
</pallas_src>

<mosaic_0001>
module attributes {stable_mosaic.version = 11 : i64} {
  func.func @_model_kernel(%arg0: i32, %arg1: memref<16x1xi32, #tpu.memory_space<vmem>>, %arg2: memref<16x1xi32, #tpu.memory_space<vmem>>, %arg3: memref<16x1xi32, #tpu.memory_space<vmem>>, %arg4: memref<2x8xf32, #tpu.memory_space<vmem>>, %arg5: memref<128x128xbf16, #tpu.memory_space<vmem>>, %arg6: memref<8x128xf32, #tpu.memory_space<vmem>>, %arg7: memref<128x1152xbf16, #tpu.memory_space<vmem>>, %arg8: memref<128x512xbf16, #tpu.memory_space<vmem>>, %arg9: memref<128x1024xbf16, #tpu.memory_space<vmem>>, %arg10: memref<256x256xbf16, #tpu.memory_space<vmem>>, %arg11: memref<1xf32, #tpu.memory_space<smem>>) attributes {dimension_semantics = [#tpu.dimension_semantics<arbitrary>], iteration_bounds = array<i64: 1>, scalar_prefetch = 0 : i64, scratch_operands = 0 : i64, tpu.core_type = #tpu.core_type<tc>, window_params = [{pipeline_mode = #tpu.pipeline_mode<synchronous>, transform_indices = @transform_0, window_bounds = array<i64: 16, 1>}, {pipeline_mode = #tpu.pipeline_mode<synchronous>, transform_indices = @transform_1, window_bounds = array<i64: 16, 1>}, {pipeline_mode = #tpu.pipeline_mode<synchronous>, transform_indices = @transform_2, window_bounds = array<i64: 16, 1>}, {pipeline_mode = #tpu.pipeline_mode<synchronous>, transform_indices = @transform_3, window_bounds = array<i64: 2, 8>}, {pipeline_mode = #tpu.pipeline_mode<synchronous>, transform_indices = @transform_4, window_bounds = array<i64: 128, 128>}, {pipeline_mode = #tpu.pipeline_mode<synchronous>, transform_indices = @transform_5, window_bounds = array<i64: 8, 128>}, {pipeline_mode = #tpu.pipeline_mode<synchronous>, transform_indices = @transform_6, window_bounds = array<i64: 128, 1152>}, {pipeline_mode = #tpu.pipeline_mode<synchronous>, transform_indices = @transform_7, window_bounds = array<i64: 128, 512>}, {pipeline_mode = #tpu.pipeline_mode<synchronous>, transform_indices = @transform_8, window_bounds = array<i64: 128, 1024>}, {pipeline_mode = #tpu.pipeline_mode<synchronous>, transform_indices = @transform_9, window_bounds = array<i64: 256, 256>}, {transform_indices = @transform_10, window_bounds = array<i64: 1>}]} {
    %c0 = arith.constant 0 : index
    %c0_0 = arith.constant 0 : index
    %0 = vector.load %arg4[%c0, %c0_0] : memref<2x8xf32, #tpu.memory_space<vmem>>, vector<2x8xf32>
    %cst = arith.constant 1.000000e+00 : f32
    %1 = vector.broadcast %cst : f32 to vector<2x8xf32>
    %2 = arith.subf %1, %0 : vector<2x8xf32>
    %cst_1 = arith.constant -1.000000e+09 : f32
    %3 = vector.broadcast %cst_1 : f32 to vector<2x8xf32>
    %4 = arith.mulf %2, %3 : vector<2x8xf32>
    %5 = vector.shape_cast %4 : vector<2x8xf32> to vector<2x1x8xf32>
    %6 = tpu.iota {dimensions = array<i32: 0>} : vector<8x8xi32>
    %7 = tpu.iota {dimensions = array<i32: 1>} : vector<8x8xi32>
    %8 = arith.cmpi sge, %6, %7 : vector<8x8xi32>
    %cst_2 = arith.constant 0.000000e+00 : f32
    %cst_3 = arith.constant -1.000000e+09 : f32
    %9 = vector.broadcast %cst_2 : f32 to vector<8x8xf32>
    %10 = vector.broadcast %cst_3 : f32 to vector<8x8xf32>
    %11 = arith.select %8, %9, %10 : vector<8x8xi1>, vector<8x8xf32>
    %12 = vector.shape_cast %11 : vector<8x8xf32> to vector<1x8x8xf32>
    %c0_4 = arith.constant 0 : index
    %c0_5 = arith.constant 0 : index
    %13 = vector.load %arg1[%c0_4, %c0_5] : memref<16x1xi32, #tpu.memory_space<vmem>>, vector<16x1xi32>
    %14 = tpu.iota {dimensions = array<i32: 1>} : vector<16x128xi32>
    %15 = vector.broadcast %13 : vector<16x1xi32> to vector<16x128xi32>
    %16 = arith.cmpi eq, %14, %15 : vector<16x128xi32>
    %17 = arith.extui %16 : vector<16x128xi1> to vector<16x128xi32>
    %18 = arith.sitofp %17 : vector<16x128xi32> to vector<16x128xf32>
    %19 = arith.truncf %18 : vector<16x128xf32> to vector<16x128xbf16>
    %c0_6 = arith.constant 0 : index
    %c0_7 = arith.constant 0 : index
    %20 = vector.load %arg5[%c0_6, %c0_7] : memref<128x128xbf16, #tpu.memory_space<vmem>>, vector<128x128xbf16>
    %cst_8 = arith.constant dense<0.000000e+00> : vector<16x128xf32>
    %21 = tpu.matmul %19, %20, %cst_8 {dimension_numbers = #tpu.dot_dimension_numbers<[1], [0], [0], [1], [0, 0, 1, 1], [], []>} : vector<16x128xbf16>, vector<128x128xbf16>, vector<16x128xf32> -> vector<16x128xf32>
    %22 = arith.mulf %21, %21 : vector<16x128xf32>
    %cst_9 = arith.constant dense<0.000000e+00> : vector<16xf32>
    %23 = vector.multi_reduction <add>, %22, %cst_9 [1] : vector<16x128xf32> to vector<16xf32>
    %24 = vector.shape_cast %23 : vector<16xf32> to vector<16x1xf32>
    %cst_10 = arith.constant 1.280000e+02 : f32
    %25 = vector.broadcast %cst_10 : f32 to vector<16x1xf32>
    %26 = arith.divf %24, %25 : vector<16x1xf32>
    %cst_11 = arith.constant 9.99999997E-7 : f32
    %27 = vector.broadcast %cst_11 : f32 to vector<16x1xf32>
    %28 = arith.addf %26, %27 : vector<16x1xf32>
    %29 = math.rsqrt %28 : vector<16x1xf32>
    %30 = vector.broadcast %29 : vector<16x1xf32> to vector<16x128xf32>
    %31 = arith.mulf %21, %30 : vector<16x128xf32>
    %c0_12 = arith.constant 0 : index
    %c0_13 = arith.constant 0 : index
    %32 = vector.load %arg6[%c0_12, %c0_13] : memref<8x128xf32, #tpu.memory_space<vmem>>, vector<1x128xf32>
    %33 = vector.broadcast %32 : vector<1x128xf32> to vector<16x128xf32>
    %34 = arith.mulf %31, %33 : vector<16x128xf32>
    %35 = arith.truncf %34 : vector<16x128xf32> to vector<16x128xbf16>
    %c0_14 = arith.constant 0 : index
    %c0_15 = arith.constant 0 : index
    %36 = vector.load %arg7[%c0_14, %c0_15] : memref<128x1152xbf16, #tpu.memory_space<vmem>>, vector<128x384xbf16>
    %cst_16 = arith.constant dense<0.000000e+00> : vector<16x384xf32>
    %37 = tpu.matmul %35, %36, %cst_16 {dimension_numbers = #tpu.dot_dimension_numbers<[1], [0], [0], [1], [0, 0, 1, 1], [], []>} : vector<16x128xbf16>, vector<128x384xbf16>, vector<16x384xf32> -> vector<16x384xf32>
    %38 = vector.extract_strided_slice %37 {offsets = [0, 0], sizes = [16, 128], strides = [1, 1]} : vector<16x384xf32> to vector<16x128xf32>
    %39 = vector.extract_strided_slice %37 {offsets = [0, 128], sizes = [16, 128], strides = [1, 1]} : vector<16x384xf32> to vector<16x128xf32>
    %40 = vector.extract_strided_slice %37 {offsets = [0, 256], sizes = [16, 128], strides = [1, 1]} : vector<16x384xf32> to vector<16x128xf32>
    %41 = vector.shape_cast %38 : vector<16x128xf32> to vector<2x8x128xf32>
    %42 = arith.truncf %41 : vector<2x8x128xf32> to vector<2x8x128xbf16>
    %43 = vector.shape_cast %39 : vector<16x128xf32> to vector<2x8x128xf32>
    %44 = arith.truncf %43 : vector<2x8x128xf32> to vector<2x8x128xbf16>
    %45 = vector.shape_cast %40 : vector<16x128xf32> to vector<2x8x128xf32>
    %46 = arith.truncf %45 : vector<2x8x128xf32> to vector<2x8x128xbf16>
    %47 = vector.extract_strided_slice %42 {offsets = [0, 0, 0], sizes = [2, 8, 32], strides = [1, 1, 1]} : vector<2x8x128xbf16> to vector<2x8x32xbf16>
    %48 = vector.extract_strided_slice %44 {offsets = [0, 0, 0], sizes = [2, 8, 32], strides = [1, 1, 1]} : vector<2x8x128xbf16> to vector<2x8x32xbf16>
    %49 = vector.extract_strided_slice %46 {offsets = [0, 0, 0], sizes = [2, 8, 32], strides = [1, 1, 1]} : vector<2x8x128xbf16> to vector<2x8x32xbf16>
    "tpu.trace_start"() <{level = 10 : i32, message = "bqd,bkd->bqk"}> : () -> ()
    %cst_17 = arith.constant dense<0.000000e+00> : vector<2x8x8xf32>
    %50 = tpu.matmul %47, %48, %cst_17 {dimension_numbers = #tpu.dot_dimension_numbers<[2], [2], [1], [1], [0, 0, 0, 1, 1, 1], [0], [0]>} : vector<2x8x32xbf16>, vector<2x8x32xbf16>, vector<2x8x8xf32> -> vector<2x8x8xf32>
    "tpu.trace_stop"() : () -> ()
    %51 = vector.broadcast %5 : vector<2x1x8xf32> to vector<2x8x8xf32>
    %52 = arith.addf %50, %51 : vector<2x8x8xf32>
    %cst_18 = arith.constant dense<0xFF800000> : vector<2x8xf32>
    %53 = vector.multi_reduction <maximumf>, %52, %cst_18 [2] : vector<2x8x8xf32> to vector<2x8xf32>
    %54 = vector.shape_cast %53 : vector<2x8xf32> to vector<2x8x1xf32>
    %55 = vector.broadcast %54 : vector<2x8x1xf32> to vector<2x8x8xf32>
    %56 = arith.subf %52, %55 : vector<2x8x8xf32>
    %57 = math.exp %56 : vector<2x8x8xf32>
    %cst_19 = arith.constant dense<0.000000e+00> : vector<2x8xf32>
    %58 = vector.multi_reduction <add>, %57, %cst_19 [2] : vector<2x8x8xf32> to vector<2x8xf32>
    %59 = vector.shape_cast %58 : vector<2x8xf32> to vector<2x8x1xf32>
    %60 = tpu.reciprocal %59 {approx = true} : vector<2x8x1xf32> -> vector<2x8x1xf32>
    %61 = arith.truncf %57 : vector<2x8x8xf32> to vector<2x8x8xbf16>
    "tpu.trace_start"() <{level = 10 : i32, message = "bqk,bkd->bqd"}> : () -> ()
    %cst_20 = arith.constant dense<0.000000e+00> : vector<2x8x32xf32>
    %62 = tpu.matmul %61, %49, %cst_20 {dimension_numbers = #tpu.dot_dimension_numbers<[2], [1], [1], [2], [0, 0, 0, 1, 1, 2], [0], [0]>} : vector<2x8x8xbf16>, vector<2x8x32xbf16>, vector<2x8x32xf32> -> vector<2x8x32xf32>
    "tpu.trace_stop"() : () -> ()
    %63 = vector.broadcast %60 : vector<2x8x1xf32> to vector<2x8x32xf32>
    %64 = arith.mulf %62, %63 : vector<2x8x32xf32>
    %65 = vector.extract_strided_slice %42 {offsets = [0, 0, 32], sizes = [2, 8, 32], strides = [1, 1, 1]} : vector<2x8x128xbf16> to vector<2x8x32xbf16>
    %66 = vector.extract_strided_slice %44 {offsets = [0, 0, 32], sizes = [2, 8, 32], strides = [1, 1, 1]} : vector<2x8x128xbf16> to vector<2x8x32xbf16>
    %67 = vector.extract_strided_slice %46 {offsets = [0, 0, 32], sizes = [2, 8, 32], strides = [1, 1, 1]} : vector<2x8x128xbf16> to vector<2x8x32xbf16>
    "tpu.trace_start"() <{level = 10 : i32, message = "bqd,bkd->bqk"}> : () -> ()
    %cst_21 = arith.constant dense<0.000000e+00> : vector<2x8x8xf32>
    %68 = tpu.matmul %65, %66, %cst_21 {dimension_numbers = #tpu.dot_dimension_numbers<[2], [2], [1], [1], [0, 0, 0, 1, 1, 1], [0], [0]>} : vector<2x8x32xbf16>, vector<2x8x32xbf16>, vector<2x8x8xf32> -> vector<2x8x8xf32>
    "tpu.trace_stop"() : () -> ()
    %69 = vector.broadcast %5 : vector<2x1x8xf32> to vector<2x8x8xf32>
    %70 = arith.addf %68, %69 : vector<2x8x8xf32>
    %cst_22 = arith.constant dense<0xFF800000> : vector<2x8xf32>
    %71 = vector.multi_reduction <maximumf>, %70, %cst_22 [2] : vector<2x8x8xf32> to vector<2x8xf32>
    %72 = vector.shape_cast %71 : vector<2x8xf32> to vector<2x8x1xf32>
    %73 = vector.broadcast %72 : vector<2x8x1xf32> to vector<2x8x8xf32>
    %74 = arith.subf %70, %73 : vector<2x8x8xf32>
    %75 = math.exp %74 : vector<2x8x8xf32>
    %cst_23 = arith.constant dense<0.000000e+00> : vector<2x8xf32>
    %76 = vector.multi_reduction <add>, %75, %cst_23 [2] : vector<2x8x8xf32> to vector<2x8xf32>
    %77 = vector.shape_cast %76 : vector<2x8xf32> to vector<2x8x1xf32>
    %78 = tpu.reciprocal %77 {approx = true} : vector<2x8x1xf32> -> vector<2x8x1xf32>
    %79 = arith.truncf %75 : vector<2x8x8xf32> to vector<2x8x8xbf16>
    "tpu.trace_start"() <{level = 10 : i32, message = "bqk,bkd->bqd"}> : () -> ()
    %cst_24 = arith.constant dense<0.000000e+00> : vector<2x8x32xf32>
    %80 = tpu.matmul %79, %67, %cst_24 {dimension_numbers = #tpu.dot_dimension_numbers<[2], [1], [1], [2], [0, 0, 0, 1, 1, 2], [0], [0]>} : vector<2x8x8xbf16>, vector<2x8x32xbf16>, vector<2x8x32xf32> -> vector<2x8x32xf32>
    "tpu.trace_stop"() : () -> ()
    %81 = vector.broadcast %78 : vector<2x8x1xf32> to vector<2x8x32xf32>
    %82 = arith.mulf %80, %81 : vector<2x8x32xf32>
    %83 = vector.extract_strided_slice %42 {offsets = [0, 0, 64], sizes = [2, 8, 32], strides = [1, 1, 1]} : vector<2x8x128xbf16> to vector<2x8x32xbf16>
    %84 = vector.extract_strided_slice %44 {offsets = [0, 0, 64], sizes = [2, 8, 32], strides = [1, 1, 1]} : vector<2x8x128xbf16> to vector<2x8x32xbf16>
    %85 = vector.extract_strided_slice %46 {offsets = [0, 0, 64], sizes = [2, 8, 32], strides = [1, 1, 1]} : vector<2x8x128xbf16> to vector<2x8x32xbf16>
    "tpu.trace_start"() <{level = 10 : i32, message = "bqd,bkd->bqk"}> : () -> ()
    %cst_25 = arith.constant dense<0.000000e+00> : vector<2x8x8xf32>
    %86 = tpu.matmul %83, %84, %cst_25 {dimension_numbers = #tpu.dot_dimension_numbers<[2], [2], [1], [1], [0, 0, 0, 1, 1, 1], [0], [0]>} : vector<2x8x32xbf16>, vector<2x8x32xbf16>, vector<2x8x8xf32> -> vector<2x8x8xf32>
    "tpu.trace_stop"() : () -> ()
    %87 = vector.broadcast %5 : vector<2x1x8xf32> to vector<2x8x8xf32>
    %88 = arith.addf %86, %87 : vector<2x8x8xf32>
    %cst_26 = arith.constant dense<0xFF800000> : vector<2x8xf32>
    %89 = vector.multi_reduction <maximumf>, %88, %cst_26 [2] : vector<2x8x8xf32> to vector<2x8xf32>
    %90 = vector.shape_cast %89 : vector<2x8xf32> to vector<2x8x1xf32>
    %91 = vector.broadcast %90 : vector<2x8x1xf32> to vector<2x8x8xf32>
    %92 = arith.subf %88, %91 : vector<2x8x8xf32>
    %93 = math.exp %92 : vector<2x8x8xf32>
    %cst_27 = arith.constant dense<0.000000e+00> : vector<2x8xf32>
    %94 = vector.multi_reduction <add>, %93, %cst_27 [2] : vector<2x8x8xf32> to vector<2x8xf32>
    %95 = vector.shape_cast %94 : vector<2x8xf32> to vector<2x8x1xf32>
    %96 = tpu.reciprocal %95 {approx = true} : vector<2x8x1xf32> -> vector<2x8x1xf32>
    %97 = arith.truncf %93 : vector<2x8x8xf32> to vector<2x8x8xbf16>
    "tpu.trace_start"() <{level = 10 : i32, message = "bqk,bkd->bqd"}> : () -> ()
    %cst_28 = arith.constant dense<0.000000e+00> : vector<2x8x32xf32>
    %98 = tpu.matmul %97, %85, %cst_28 {dimension_numbers = #tpu.dot_dimension_numbers<[2], [1], [1], [2], [0, 0, 0, 1, 1, 2], [0], [0]>} : vector<2x8x8xbf16>, vector<2x8x32xbf16>, vector<2x8x32xf32> -> vector<2x8x32xf32>
    "tpu.trace_stop"() : () -> ()
    %99 = vector.broadcast %96 : vector<2x8x1xf32> to vector<2x8x32xf32>
    %100 = arith.mulf %98, %99 : vector<2x8x32xf32>
    %101 = vector.extract_strided_slice %42 {offsets = [0, 0, 96], sizes = [2, 8, 32], strides = [1, 1, 1]} : vector<2x8x128xbf16> to vector<2x8x32xbf16>
    %102 = vector.extract_strided_slice %44 {offsets = [0, 0, 96], sizes = [2, 8, 32], strides = [1, 1, 1]} : vector<2x8x128xbf16> to vector<2x8x32xbf16>
    %103 = vector.extract_strided_slice %46 {offsets = [0, 0, 96], sizes = [2, 8, 32], strides = [1, 1, 1]} : vector<2x8x128xbf16> to vector<2x8x32xbf16>
    "tpu.trace_start"() <{level = 10 : i32, message = "bqd,bkd->bqk"}> : () -> ()
    %cst_29 = arith.constant dense<0.000000e+00> : vector<2x8x8xf32>
    %104 = tpu.matmul %101, %102, %cst_29 {dimension_numbers = #tpu.dot_dimension_numbers<[2], [2], [1], [1], [0, 0, 0, 1, 1, 1], [0], [0]>} : vector<2x8x32xbf16>, vector<2x8x32xbf16>, vector<2x8x8xf32> -> vector<2x8x8xf32>
    "tpu.trace_stop"() : () -> ()
    %105 = vector.broadcast %5 : vector<2x1x8xf32> to vector<2x8x8xf32>
    %106 = arith.addf %104, %105 : vector<2x8x8xf32>
    %cst_30 = arith.constant dense<0xFF800000> : vector<2x8xf32>
    %107 = vector.multi_reduction <maximumf>, %106, %cst_30 [2] : vector<2x8x8xf32> to vector<2x8xf32>
    %108 = vector.shape_cast %107 : vector<2x8xf32> to vector<2x8x1xf32>
    %109 = vector.broadcast %108 : vector<2x8x1xf32> to vector<2x8x8xf32>
    %110 = arith.subf %106, %109 : vector<2x8x8xf32>
    %111 = math.exp %110 : vector<2x8x8xf32>
    %cst_31 = arith.constant dense<0.000000e+00> : vector<2x8xf32>
    %112 = vector.multi_reduction <add>, %111, %cst_31 [2] : vector<2x8x8xf32> to vector<2x8xf32>
    %113 = vector.shape_cast %112 : vector<2x8xf32> to vector<2x8x1xf32>
    %114 = tpu.reciprocal %113 {approx = true} : vector<2x8x1xf32> -> vector<2x8x1xf32>
    %115 = arith.truncf %111 : vector<2x8x8xf32> to vector<2x8x8xbf16>
    "tpu.trace_start"() <{level = 10 : i32, message = "bqk,bkd->bqd"}> : () -> ()
    %cst_32 = arith.constant dense<0.000000e+00> : vector<2x8x32xf32>
    %116 = tpu.matmul %115, %103, %cst_32 {dimension_numbers = #tpu.dot_dimension_numbers<[2], [1], [1], [2], [0, 0, 0, 1, 1, 2], [0], [0]>} : vector<2x8x8xbf16>, vector<2x8x32xbf16>, vector<2x8x32xf32> -> vector<2x8x32xf32>
    "tpu.trace_stop"() : () -> ()
    %117 = vector.broadcast %114 : vector<2x8x1xf32> to vector<2x8x32xf32>
    %118 = arith.mulf %116, %117 : vector<2x8x32xf32>
    %119 = tpu.concatenate %64, %82, %100, %118 in 2 : vector<2x8x32xf32>, vector<2x8x32xf32>, vector<2x8x32xf32>, vector<2x8x32xf32> -> vector<2x8x128xf32>
    %120 = vector.shape_cast %119 : vector<2x8x128xf32> to vector<16x128xf32>
    %121 = arith.truncf %120 : vector<16x128xf32> to vector<16x128xbf16>
    %c0_33 = arith.constant 0 : index
    %c0_34 = arith.constant 0 : index
    %122 = vector.load %arg8[%c0_33, %c0_34] : memref<128x512xbf16, #tpu.memory_space<vmem>>, vector<128x128xbf16>
    %cst_35 = arith.constant dense<0.000000e+00> : vector<16x128xf32>
    %123 = tpu.matmul %121, %122, %cst_35 {dimension_numbers = #tpu.dot_dimension_numbers<[1], [0], [0], [1], [0, 0, 1, 1], [], []>} : vector<16x128xbf16>, vector<128x128xbf16>, vector<16x128xf32> -> vector<16x128xf32>
    %124 = arith.addf %21, %123 : vector<16x128xf32>
    %125 = arith.mulf %124, %124 : vector<16x128xf32>
    %cst_36 = arith.constant dense<0.000000e+00> : vector<16xf32>
    %126 = vector.multi_reduction <add>, %125, %cst_36 [1] : vector<16x128xf32> to vector<16xf32>
    %127 = vector.shape_cast %126 : vector<16xf32> to vector<16x1xf32>
    %cst_37 = arith.constant 1.280000e+02 : f32
    %128 = vector.broadcast %cst_37 : f32 to vector<16x1xf32>
    %129 = arith.divf %127, %128 : vector<16x1xf32>
    %cst_38 = arith.constant 9.99999997E-7 : f32
    %130 = vector.broadcast %cst_38 : f32 to vector<16x1xf32>
    %131 = arith.addf %129, %130 : vector<16x1xf32>
    %132 = math.rsqrt %131 : vector<16x1xf32>
    %133 = vector.broadcast %132 : vector<16x1xf32> to vector<16x128xf32>
    %134 = arith.mulf %124, %133 : vector<16x128xf32>
    %c1 = arith.constant 1 : index
    %c0_39 = arith.constant 0 : index
    %135 = vector.load %arg6[%c1, %c0_39] : memref<8x128xf32, #tpu.memory_space<vmem>>, vector<1x128xf32>
    %136 = vector.broadcast %135 : vector<1x128xf32> to vector<16x128xf32>
    %137 = arith.mulf %134, %136 : vector<16x128xf32>
    %138 = arith.truncf %137 : vector<16x128xf32> to vector<16x128xbf16>
    %c0_40 = arith.constant 0 : index
    %c0_41 = arith.constant 0 : index
    %139 = vector.load %arg9[%c0_40, %c0_41] : memref<128x1024xbf16, #tpu.memory_space<vmem>>, vector<128x512xbf16>
    %cst_42 = arith.constant dense<0.000000e+00> : vector<16x512xf32>
    %140 = tpu.matmul %138, %139, %cst_42 {dimension_numbers = #tpu.dot_dimension_numbers<[1], [0], [0], [1], [0, 0, 1, 1], [], []>} : vector<16x128xbf16>, vector<128x512xbf16>, vector<16x512xf32> -> vector<16x512xf32>
    %141 = vector.extract_strided_slice %140 {offsets = [0, 0], sizes = [16, 256], strides = [1, 1]} : vector<16x512xf32> to vector<16x256xf32>
    %142 = arith.mulf %141, %141 : vector<16x256xf32>
    %143 = arith.mulf %141, %142 : vector<16x256xf32>
    %cst_43 = arith.constant 4.471500e-02 : f32
    %144 = vector.broadcast %cst_43 : f32 to vector<16x256xf32>
    %145 = arith.mulf %144, %143 : vector<16x256xf32>
    %146 = arith.addf %141, %145 : vector<16x256xf32>
    %cst_44 = arith.constant 0.797884583 : f32
    %147 = vector.broadcast %cst_44 : f32 to vector<16x256xf32>
    %148 = arith.mulf %147, %146 : vector<16x256xf32>
    %149 = math.tanh %148 : vector<16x256xf32>
    %cst_45 = arith.constant 1.000000e+00 : f32
    %150 = vector.broadcast %cst_45 : f32 to vector<16x256xf32>
    %151 = arith.addf %150, %149 : vector<16x256xf32>
    %cst_46 = arith.constant 5.000000e-01 : f32
    %152 = vector.broadcast %cst_46 : f32 to vector<16x256xf32>
    %153 = arith.mulf %152, %151 : vector<16x256xf32>
    %154 = arith.mulf %141, %153 : vector<16x256xf32>
    %155 = vector.extract_strided_slice %140 {offsets = [0, 256], sizes = [16, 256], strides = [1, 1]} : vector<16x512xf32> to vector<16x256xf32>
    %156 = arith.mulf %154, %155 : vector<16x256xf32>
    %157 = arith.truncf %156 : vector<16x256xf32> to vector<16x256xbf16>
    %c0_47 = arith.constant 0 : index
    %c0_48 = arith.constant 0 : index
    %158 = vector.load %arg10[%c0_47, %c0_48] : memref<256x256xbf16, #tpu.memory_space<vmem>>, vector<256x128xbf16>
    %cst_49 = arith.constant dense<0.000000e+00> : vector<16x128xf32>
    %159 = tpu.matmul %157, %158, %cst_49 {dimension_numbers = #tpu.dot_dimension_numbers<[1], [0], [0], [1], [0, 0, 1, 1], [], []>} : vector<16x256xbf16>, vector<256x128xbf16>, vector<16x128xf32> -> vector<16x128xf32>
    %160 = arith.addf %124, %159 : vector<16x128xf32>
    %161 = arith.mulf %160, %160 : vector<16x128xf32>
    %cst_50 = arith.constant dense<0.000000e+00> : vector<16xf32>
    %162 = vector.multi_reduction <add>, %161, %cst_50 [1] : vector<16x128xf32> to vector<16xf32>
    %163 = vector.shape_cast %162 : vector<16xf32> to vector<16x1xf32>
    %cst_51 = arith.constant 1.280000e+02 : f32
    %164 = vector.broadcast %cst_51 : f32 to vector<16x1xf32>
    %165 = arith.divf %163, %164 : vector<16x1xf32>
    %cst_52 = arith.constant 9.99999997E-7 : f32
    %166 = vector.broadcast %cst_52 : f32 to vector<16x1xf32>
    %167 = arith.addf %165, %166 : vector<16x1xf32>
    %168 = math.rsqrt %167 : vector<16x1xf32>
    %169 = vector.broadcast %168 : vector<16x1xf32> to vector<16x128xf32>
    %170 = arith.mulf %160, %169 : vector<16x128xf32>
    %c2 = arith.constant 2 : index
    %c0_53 = arith.constant 0 : index
    %171 = vector.load %arg6[%c2, %c0_53] : memref<8x128xf32, #tpu.memory_space<vmem>>, vector<1x128xf32>
    %172 = vector.broadcast %171 : vector<1x128xf32> to vector<16x128xf32>
    %173 = arith.mulf %170, %172 : vector<16x128xf32>
    %c0_54 = arith.constant 0 : index
    %c0_55 = arith.constant 0 : index
    %174 = vector.load %arg2[%c0_54, %c0_55] : memref<16x1xi32, #tpu.memory_space<vmem>>, vector<16x1xi32>
    %175 = tpu.iota {dimensions = array<i32: 1>} : vector<16x128xi32>
    %176 = vector.broadcast %174 : vector<16x1xi32> to vector<16x128xi32>
    %177 = arith.cmpi eq, %175, %176 : vector<16x128xi32>
    %178 = arith.extui %177 : vector<16x128xi1> to vector<16x128xi32>
    %179 = arith.sitofp %178 : vector<16x128xi32> to vector<16x128xf32>
    %180 = arith.truncf %179 : vector<16x128xf32> to vector<16x128xbf16>
    %c0_56 = arith.constant 0 : index
    %c0_57 = arith.constant 0 : index
    %181 = vector.load %arg5[%c0_56, %c0_57] : memref<128x128xbf16, #tpu.memory_space<vmem>>, vector<128x128xbf16>
    %cst_58 = arith.constant dense<0.000000e+00> : vector<16x128xf32>
    %182 = tpu.matmul %180, %181, %cst_58 {dimension_numbers = #tpu.dot_dimension_numbers<[1], [0], [0], [1], [0, 0, 1, 1], [], []>} : vector<16x128xbf16>, vector<128x128xbf16>, vector<16x128xf32> -> vector<16x128xf32>
    %183 = arith.mulf %182, %182 : vector<16x128xf32>
    %cst_59 = arith.constant dense<0.000000e+00> : vector<16xf32>
    %184 = vector.multi_reduction <add>, %183, %cst_59 [1] : vector<16x128xf32> to vector<16xf32>
    %185 = vector.shape_cast %184 : vector<16xf32> to vector<16x1xf32>
    %cst_60 = arith.constant 1.280000e+02 : f32
    %186 = vector.broadcast %cst_60 : f32 to vector<16x1xf32>
    %187 = arith.divf %185, %186 : vector<16x1xf32>
    %cst_61 = arith.constant 9.99999997E-7 : f32
    %188 = vector.broadcast %cst_61 : f32 to vector<16x1xf32>
    %189 = arith.addf %187, %188 : vector<16x1xf32>
    %190 = math.rsqrt %189 : vector<16x1xf32>
    %191 = vector.broadcast %190 : vector<16x1xf32> to vector<16x128xf32>
    %192 = arith.mulf %182, %191 : vector<16x128xf32>
    %c3 = arith.constant 3 : index
    %c0_62 = arith.constant 0 : index
    %193 = vector.load %arg6[%c3, %c0_62] : memref<8x128xf32, #tpu.memory_space<vmem>>, vector<1x128xf32>
    %194 = vector.broadcast %193 : vector<1x128xf32> to vector<16x128xf32>
    %195 = arith.mulf %192, %194 : vector<16x128xf32>
    %196 = arith.truncf %195 : vector<16x128xf32> to vector<16x128xbf16>
    %c0_63 = arith.constant 0 : index
    %c384 = arith.constant 384 : index
    %197 = vector.load %arg7[%c0_63, %c384] : memref<128x1152xbf16, #tpu.memory_space<vmem>>, vector<128x384xbf16>
    %cst_64 = arith.constant dense<0.000000e+00> : vector<16x384xf32>
    %198 = tpu.matmul %196, %197, %cst_64 {dimension_numbers = #tpu.dot_dimension_numbers<[1], [0], [0], [1], [0, 0, 1, 1], [], []>} : vector<16x128xbf16>, vector<128x384xbf16>, vector<16x384xf32> -> vector<16x384xf32>
    %199 = vector.extract_strided_slice %198 {offsets = [0, 0], sizes = [16, 128], strides = [1, 1]} : vector<16x384xf32> to vector<16x128xf32>
    %200 = vector.extract_strided_slice %198 {offsets = [0, 128], sizes = [16, 128], strides = [1, 1]} : vector<16x384xf32> to vector<16x128xf32>
    %201 = vector.extract_strided_slice %198 {offsets = [0, 256], sizes = [16, 128], strides = [1, 1]} : vector<16x384xf32> to vector<16x128xf32>
    %202 = vector.shape_cast %199 : vector<16x128xf32> to vector<2x8x128xf32>
    %203 = arith.truncf %202 : vector<2x8x128xf32> to vector<2x8x128xbf16>
    %204 = vector.shape_cast %200 : vector<16x128xf32> to vector<2x8x128xf32>
    %205 = arith.truncf %204 : vector<2x8x128xf32> to vector<2x8x128xbf16>
    %206 = vector.shape_cast %201 : vector<16x128xf32> to vector<2x8x128xf32>
    %207 = arith.truncf %206 : vector<2x8x128xf32> to vector<2x8x128xbf16>
    %208 = vector.extract_strided_slice %203 {offsets = [0, 0, 0], sizes = [2, 8, 32], strides = [1, 1, 1]} : vector<2x8x128xbf16> to vector<2x8x32xbf16>
    %209 = vector.extract_strided_slice %205 {offsets = [0, 0, 0], sizes = [2, 8, 32], strides = [1, 1, 1]} : vector<2x8x128xbf16> to vector<2x8x32xbf16>
    %210 = vector.extract_strided_slice %207 {offsets = [0, 0, 0], sizes = [2, 8, 32], strides = [1, 1, 1]} : vector<2x8x128xbf16> to vector<2x8x32xbf16>
    "tpu.trace_start"() <{level = 10 : i32, message = "bqd,bkd->bqk"}> : () -> ()
    %cst_65 = arith.constant dense<0.000000e+00> : vector<2x8x8xf32>
    %211 = tpu.matmul %208, %209, %cst_65 {dimension_numbers = #tpu.dot_dimension_numbers<[2], [2], [1], [1], [0, 0, 0, 1, 1, 1], [0], [0]>} : vector<2x8x32xbf16>, vector<2x8x32xbf16>, vector<2x8x8xf32> -> vector<2x8x8xf32>
    "tpu.trace_stop"() : () -> ()
    %212 = vector.broadcast %12 : vector<1x8x8xf32> to vector<2x8x8xf32>
    %213 = arith.addf %211, %212 : vector<2x8x8xf32>
    %cst_66 = arith.constant dense<0xFF800000> : vector<2x8xf32>
    %214 = vector.multi_reduction <maximumf>, %213, %cst_66 [2] : vector<2x8x8xf32> to vector<2x8xf32>
    %215 = vector.shape_cast %214 : vector<2x8xf32> to vector<2x8x1xf32>
    %216 = vector.broadcast %215 : vector<2x8x1xf32> to vector<2x8x8xf32>
    %217 = arith.subf %213, %216 : vector<2x8x8xf32>
    %218 = math.exp %217 : vector<2x8x8xf32>
    %cst_67 = arith.constant dense<0.000000e+00> : vector<2x8xf32>
    %219 = vector.multi_reduction <add>, %218, %cst_67 [2] : vector<2x8x8xf32> to vector<2x8xf32>
    %220 = vector.shape_cast %219 : vector<2x8xf32> to vector<2x8x1xf32>
    %221 = tpu.reciprocal %220 {approx = true} : vector<2x8x1xf32> -> vector<2x8x1xf32>
    %222 = arith.truncf %218 : vector<2x8x8xf32> to vector<2x8x8xbf16>
    "tpu.trace_start"() <{level = 10 : i32, message = "bqk,bkd->bqd"}> : () -> ()
    %cst_68 = arith.constant dense<0.000000e+00> : vector<2x8x32xf32>
    %223 = tpu.matmul %222, %210, %cst_68 {dimension_numbers = #tpu.dot_dimension_numbers<[2], [1], [1], [2], [0, 0, 0, 1, 1, 2], [0], [0]>} : vector<2x8x8xbf16>, vector<2x8x32xbf16>, vector<2x8x32xf32> -> vector<2x8x32xf32>
    "tpu.trace_stop"() : () -> ()
    %224 = vector.broadcast %221 : vector<2x8x1xf32> to vector<2x8x32xf32>
    %225 = arith.mulf %223, %224 : vector<2x8x32xf32>
    %226 = vector.extract_strided_slice %203 {offsets = [0, 0, 32], sizes = [2, 8, 32], strides = [1, 1, 1]} : vector<2x8x128xbf16> to vector<2x8x32xbf16>
    %227 = vector.extract_strided_slice %205 {offsets = [0, 0, 32], sizes = [2, 8, 32], strides = [1, 1, 1]} : vector<2x8x128xbf16> to vector<2x8x32xbf16>
    %228 = vector.extract_strided_slice %207 {offsets = [0, 0, 32], sizes = [2, 8, 32], strides = [1, 1, 1]} : vector<2x8x128xbf16> to vector<2x8x32xbf16>
    "tpu.trace_start"() <{level = 10 : i32, message = "bqd,bkd->bqk"}> : () -> ()
    %cst_69 = arith.constant dense<0.000000e+00> : vector<2x8x8xf32>
    %229 = tpu.matmul %226, %227, %cst_69 {dimension_numbers = #tpu.dot_dimension_numbers<[2], [2], [1], [1], [0, 0, 0, 1, 1, 1], [0], [0]>} : vector<2x8x32xbf16>, vector<2x8x32xbf16>, vector<2x8x8xf32> -> vector<2x8x8xf32>
    "tpu.trace_stop"() : () -> ()
    %230 = vector.broadcast %12 : vector<1x8x8xf32> to vector<2x8x8xf32>
    %231 = arith.addf %229, %230 : vector<2x8x8xf32>
    %cst_70 = arith.constant dense<0xFF800000> : vector<2x8xf32>
    %232 = vector.multi_reduction <maximumf>, %231, %cst_70 [2] : vector<2x8x8xf32> to vector<2x8xf32>
    %233 = vector.shape_cast %232 : vector<2x8xf32> to vector<2x8x1xf32>
    %234 = vector.broadcast %233 : vector<2x8x1xf32> to vector<2x8x8xf32>
    %235 = arith.subf %231, %234 : vector<2x8x8xf32>
    %236 = math.exp %235 : vector<2x8x8xf32>
    %cst_71 = arith.constant dense<0.000000e+00> : vector<2x8xf32>
    %237 = vector.multi_reduction <add>, %236, %cst_71 [2] : vector<2x8x8xf32> to vector<2x8xf32>
    %238 = vector.shape_cast %237 : vector<2x8xf32> to vector<2x8x1xf32>
    %239 = tpu.reciprocal %238 {approx = true} : vector<2x8x1xf32> -> vector<2x8x1xf32>
    %240 = arith.truncf %236 : vector<2x8x8xf32> to vector<2x8x8xbf16>
    "tpu.trace_start"() <{level = 10 : i32, message = "bqk,bkd->bqd"}> : () -> ()
    %cst_72 = arith.constant dense<0.000000e+00> : vector<2x8x32xf32>
    %241 = tpu.matmul %240, %228, %cst_72 {dimension_numbers = #tpu.dot_dimension_numbers<[2], [1], [1], [2], [0, 0, 0, 1, 1, 2], [0], [0]>} : vector<2x8x8xbf16>, vector<2x8x32xbf16>, vector<2x8x32xf32> -> vector<2x8x32xf32>
    "tpu.trace_stop"() : () -> ()
    %242 = vector.broadcast %239 : vector<2x8x1xf32> to vector<2x8x32xf32>
    %243 = arith.mulf %241, %242 : vector<2x8x32xf32>
    %244 = vector.extract_strided_slice %203 {offsets = [0, 0, 64], sizes = [2, 8, 32], strides = [1, 1, 1]} : vector<2x8x128xbf16> to vector<2x8x32xbf16>
    %245 = vector.extract_strided_slice %205 {offsets = [0, 0, 64], sizes = [2, 8, 32], strides = [1, 1, 1]} : vector<2x8x128xbf16> to vector<2x8x32xbf16>
    %246 = vector.extract_strided_slice %207 {offsets = [0, 0, 64], sizes = [2, 8, 32], strides = [1, 1, 1]} : vector<2x8x128xbf16> to vector<2x8x32xbf16>
    "tpu.trace_start"() <{level = 10 : i32, message = "bqd,bkd->bqk"}> : () -> ()
    %cst_73 = arith.constant dense<0.000000e+00> : vector<2x8x8xf32>
    %247 = tpu.matmul %244, %245, %cst_73 {dimension_numbers = #tpu.dot_dimension_numbers<[2], [2], [1], [1], [0, 0, 0, 1, 1, 1], [0], [0]>} : vector<2x8x32xbf16>, vector<2x8x32xbf16>, vector<2x8x8xf32> -> vector<2x8x8xf32>
    "tpu.trace_stop"() : () -> ()
    %248 = vector.broadcast %12 : vector<1x8x8xf32> to vector<2x8x8xf32>
    %249 = arith.addf %247, %248 : vector<2x8x8xf32>
    %cst_74 = arith.constant dense<0xFF800000> : vector<2x8xf32>
    %250 = vector.multi_reduction <maximumf>, %249, %cst_74 [2] : vector<2x8x8xf32> to vector<2x8xf32>
    %251 = vector.shape_cast %250 : vector<2x8xf32> to vector<2x8x1xf32>
    %252 = vector.broadcast %251 : vector<2x8x1xf32> to vector<2x8x8xf32>
    %253 = arith.subf %249, %252 : vector<2x8x8xf32>
    %254 = math.exp %253 : vector<2x8x8xf32>
    %cst_75 = arith.constant dense<0.000000e+00> : vector<2x8xf32>
    %255 = vector.multi_reduction <add>, %254, %cst_75 [2] : vector<2x8x8xf32> to vector<2x8xf32>
    %256 = vector.shape_cast %255 : vector<2x8xf32> to vector<2x8x1xf32>
    %257 = tpu.reciprocal %256 {approx = true} : vector<2x8x1xf32> -> vector<2x8x1xf32>
    %258 = arith.truncf %254 : vector<2x8x8xf32> to vector<2x8x8xbf16>
    "tpu.trace_start"() <{level = 10 : i32, message = "bqk,bkd->bqd"}> : () -> ()
    %cst_76 = arith.constant dense<0.000000e+00> : vector<2x8x32xf32>
    %259 = tpu.matmul %258, %246, %cst_76 {dimension_numbers = #tpu.dot_dimension_numbers<[2], [1], [1], [2], [0, 0, 0, 1, 1, 2], [0], [0]>} : vector<2x8x8xbf16>, vector<2x8x32xbf16>, vector<2x8x32xf32> -> vector<2x8x32xf32>
    "tpu.trace_stop"() : () -> ()
    %260 = vector.broadcast %257 : vector<2x8x1xf32> to vector<2x8x32xf32>
    %261 = arith.mulf %259, %260 : vector<2x8x32xf32>
    %262 = vector.extract_strided_slice %203 {offsets = [0, 0, 96], sizes = [2, 8, 32], strides = [1, 1, 1]} : vector<2x8x128xbf16> to vector<2x8x32xbf16>
    %263 = vector.extract_strided_slice %205 {offsets = [0, 0, 96], sizes = [2, 8, 32], strides = [1, 1, 1]} : vector<2x8x128xbf16> to vector<2x8x32xbf16>
    %264 = vector.extract_strided_slice %207 {offsets = [0, 0, 96], sizes = [2, 8, 32], strides = [1, 1, 1]} : vector<2x8x128xbf16> to vector<2x8x32xbf16>
    "tpu.trace_start"() <{level = 10 : i32, message = "bqd,bkd->bqk"}> : () -> ()
    %cst_77 = arith.constant dense<0.000000e+00> : vector<2x8x8xf32>
    %265 = tpu.matmul %262, %263, %cst_77 {dimension_numbers = #tpu.dot_dimension_numbers<[2], [2], [1], [1], [0, 0, 0, 1, 1, 1], [0], [0]>} : vector<2x8x32xbf16>, vector<2x8x32xbf16>, vector<2x8x8xf32> -> vector<2x8x8xf32>
    "tpu.trace_stop"() : () -> ()
    %266 = vector.broadcast %12 : vector<1x8x8xf32> to vector<2x8x8xf32>
    %267 = arith.addf %265, %266 : vector<2x8x8xf32>
    %cst_78 = arith.constant dense<0xFF800000> : vector<2x8xf32>
    %268 = vector.multi_reduction <maximumf>, %267, %cst_78 [2] : vector<2x8x8xf32> to vector<2x8xf32>
    %269 = vector.shape_cast %268 : vector<2x8xf32> to vector<2x8x1xf32>
    %270 = vector.broadcast %269 : vector<2x8x1xf32> to vector<2x8x8xf32>
    %271 = arith.subf %267, %270 : vector<2x8x8xf32>
    %272 = math.exp %271 : vector<2x8x8xf32>
    %cst_79 = arith.constant dense<0.000000e+00> : vector<2x8xf32>
    %273 = vector.multi_reduction <add>, %272, %cst_79 [2] : vector<2x8x8xf32> to vector<2x8xf32>
    %274 = vector.shape_cast %273 : vector<2x8xf32> to vector<2x8x1xf32>
    %275 = tpu.reciprocal %274 {approx = true} : vector<2x8x1xf32> -> vector<2x8x1xf32>
    %276 = arith.truncf %272 : vector<2x8x8xf32> to vector<2x8x8xbf16>
    "tpu.trace_start"() <{level = 10 : i32, message = "bqk,bkd->bqd"}> : () -> ()
    %cst_80 = arith.constant dense<0.000000e+00> : vector<2x8x32xf32>
    %277 = tpu.matmul %276, %264, %cst_80 {dimension_numbers = #tpu.dot_dimension_numbers<[2], [1], [1], [2], [0, 0, 0, 1, 1, 2], [0], [0]>} : vector<2x8x8xbf16>, vector<2x8x32xbf16>, vector<2x8x32xf32> -> vector<2x8x32xf32>
    "tpu.trace_stop"() : () -> ()
    %278 = vector.broadcast %275 : vector<2x8x1xf32> to vector<2x8x32xf32>
    %279 = arith.mulf %277, %278 : vector<2x8x32xf32>
    %280 = tpu.concatenate %225, %243, %261, %279 in 2 : vector<2x8x32xf32>, vector<2x8x32xf32>, vector<2x8x32xf32>, vector<2x8x32xf32> -> vector<2x8x128xf32>
    %281 = vector.shape_cast %280 : vector<2x8x128xf32> to vector<16x128xf32>
    %282 = arith.truncf %281 : vector<16x128xf32> to vector<16x128xbf16>
    %c0_81 = arith.constant 0 : index
    %c128 = arith.constant 128 : index
    %283 = vector.load %arg8[%c0_81, %c128] : memref<128x512xbf16, #tpu.memory_space<vmem>>, vector<128x128xbf16>
    %cst_82 = arith.constant dense<0.000000e+00> : vector<16x128xf32>
    %284 = tpu.matmul %282, %283, %cst_82 {dimension_numbers = #tpu.dot_dimension_numbers<[1], [0], [0], [1], [0, 0, 1, 1], [], []>} : vector<16x128xbf16>, vector<128x128xbf16>, vector<16x128xf32> -> vector<16x128xf32>
    %285 = arith.addf %182, %284 : vector<16x128xf32>
    %286 = arith.mulf %285, %285 : vector<16x128xf32>
    %cst_83 = arith.constant dense<0.000000e+00> : vector<16xf32>
    %287 = vector.multi_reduction <add>, %286, %cst_83 [1] : vector<16x128xf32> to vector<16xf32>
    %288 = vector.shape_cast %287 : vector<16xf32> to vector<16x1xf32>
    %cst_84 = arith.constant 1.280000e+02 : f32
    %289 = vector.broadcast %cst_84 : f32 to vector<16x1xf32>
    %290 = arith.divf %288, %289 : vector<16x1xf32>
    %cst_85 = arith.constant 9.99999997E-7 : f32
    %291 = vector.broadcast %cst_85 : f32 to vector<16x1xf32>
    %292 = arith.addf %290, %291 : vector<16x1xf32>
    %293 = math.rsqrt %292 : vector<16x1xf32>
    %294 = vector.broadcast %293 : vector<16x1xf32> to vector<16x128xf32>
    %295 = arith.mulf %285, %294 : vector<16x128xf32>
    %c4 = arith.constant 4 : index
    %c0_86 = arith.constant 0 : index
    %296 = vector.load %arg6[%c4, %c0_86] : memref<8x128xf32, #tpu.memory_space<vmem>>, vector<1x128xf32>
    %297 = vector.broadcast %296 : vector<1x128xf32> to vector<16x128xf32>
    %298 = arith.mulf %295, %297 : vector<16x128xf32>
    %299 = arith.truncf %298 : vector<16x128xf32> to vector<16x128xbf16>
    %c0_87 = arith.constant 0 : index
    %c768 = arith.constant 768 : index
    %300 = vector.load %arg7[%c0_87, %c768] : memref<128x1152xbf16, #tpu.memory_space<vmem>>, vector<128x128xbf16>
    %cst_88 = arith.constant dense<0.000000e+00> : vector<16x128xf32>
    %301 = tpu.matmul %299, %300, %cst_88 {dimension_numbers = #tpu.dot_dimension_numbers<[1], [0], [0], [1], [0, 0, 1, 1], [], []>} : vector<16x128xbf16>, vector<128x128xbf16>, vector<16x128xf32> -> vector<16x128xf32>
    %302 = arith.truncf %173 : vector<16x128xf32> to vector<16x128xbf16>
    %c0_89 = arith.constant 0 : index
    %c896 = arith.constant 896 : index
    %303 = vector.load %arg7[%c0_89, %c896] : memref<128x1152xbf16, #tpu.memory_space<vmem>>, vector<128x256xbf16>
    %cst_90 = arith.constant dense<0.000000e+00> : vector<16x256xf32>
    %304 = tpu.matmul %302, %303, %cst_90 {dimension_numbers = #tpu.dot_dimension_numbers<[1], [0], [0], [1], [0, 0, 1, 1], [], []>} : vector<16x128xbf16>, vector<128x256xbf16>, vector<16x256xf32> -> vector<16x256xf32>
    %305 = vector.extract_strided_slice %304 {offsets = [0, 0], sizes = [16, 128], strides = [1, 1]} : vector<16x256xf32> to vector<16x128xf32>
    %306 = vector.extract_strided_slice %304 {offsets = [0, 128], sizes = [16, 128], strides = [1, 1]} : vector<16x256xf32> to vector<16x128xf32>
    %307 = vector.shape_cast %301 : vector<16x128xf32> to vector<2x8x128xf32>
    %308 = arith.truncf %307 : vector<2x8x128xf32> to vector<2x8x128xbf16>
    %309 = vector.shape_cast %305 : vector<16x128xf32> to vector<2x8x128xf32>
    %310 = arith.truncf %309 : vector<2x8x128xf32> to vector<2x8x128xbf16>
    %311 = vector.shape_cast %306 : vector<16x128xf32> to vector<2x8x128xf32>
    %312 = arith.truncf %311 : vector<2x8x128xf32> to vector<2x8x128xbf16>
    %313 = vector.extract_strided_slice %308 {offsets = [0, 0, 0], sizes = [2, 8, 32], strides = [1, 1, 1]} : vector<2x8x128xbf16> to vector<2x8x32xbf16>
    %314 = vector.extract_strided_slice %310 {offsets = [0, 0, 0], sizes = [2, 8, 32], strides = [1, 1, 1]} : vector<2x8x128xbf16> to vector<2x8x32xbf16>
    %315 = vector.extract_strided_slice %312 {offsets = [0, 0, 0], sizes = [2, 8, 32], strides = [1, 1, 1]} : vector<2x8x128xbf16> to vector<2x8x32xbf16>
    "tpu.trace_start"() <{level = 10 : i32, message = "bqd,bkd->bqk"}> : () -> ()
    %cst_91 = arith.constant dense<0.000000e+00> : vector<2x8x8xf32>
    %316 = tpu.matmul %313, %314, %cst_91 {dimension_numbers = #tpu.dot_dimension_numbers<[2], [2], [1], [1], [0, 0, 0, 1, 1, 1], [0], [0]>} : vector<2x8x32xbf16>, vector<2x8x32xbf16>, vector<2x8x8xf32> -> vector<2x8x8xf32>
    "tpu.trace_stop"() : () -> ()
    %317 = vector.broadcast %5 : vector<2x1x8xf32> to vector<2x8x8xf32>
    %318 = arith.addf %316, %317 : vector<2x8x8xf32>
    %cst_92 = arith.constant dense<0xFF800000> : vector<2x8xf32>
    %319 = vector.multi_reduction <maximumf>, %318, %cst_92 [2] : vector<2x8x8xf32> to vector<2x8xf32>
    %320 = vector.shape_cast %319 : vector<2x8xf32> to vector<2x8x1xf32>
    %321 = vector.broadcast %320 : vector<2x8x1xf32> to vector<2x8x8xf32>
    %322 = arith.subf %318, %321 : vector<2x8x8xf32>
    %323 = math.exp %322 : vector<2x8x8xf32>
    %cst_93 = arith.constant dense<0.000000e+00> : vector<2x8xf32>
    %324 = vector.multi_reduction <add>, %323, %cst_93 [2] : vector<2x8x8xf32> to vector<2x8xf32>
    %325 = vector.shape_cast %324 : vector<2x8xf32> to vector<2x8x1xf32>
    %326 = tpu.reciprocal %325 {approx = true} : vector<2x8x1xf32> -> vector<2x8x1xf32>
    %327 = arith.truncf %323 : vector<2x8x8xf32> to vector<2x8x8xbf16>
    "tpu.trace_start"() <{level = 10 : i32, message = "bqk,bkd->bqd"}> : () -> ()
    %cst_94 = arith.constant dense<0.000000e+00> : vector<2x8x32xf32>
    %328 = tpu.matmul %327, %315, %cst_94 {dimension_numbers = #tpu.dot_dimension_numbers<[2], [1], [1], [2], [0, 0, 0, 1, 1, 2], [0], [0]>} : vector<2x8x8xbf16>, vector<2x8x32xbf16>, vector<2x8x32xf32> -> vector<2x8x32xf32>
    "tpu.trace_stop"() : () -> ()
    %329 = vector.broadcast %326 : vector<2x8x1xf32> to vector<2x8x32xf32>
    %330 = arith.mulf %328, %329 : vector<2x8x32xf32>
    %331 = vector.extract_strided_slice %308 {offsets = [0, 0, 32], sizes = [2, 8, 32], strides = [1, 1, 1]} : vector<2x8x128xbf16> to vector<2x8x32xbf16>
    %332 = vector.extract_strided_slice %310 {offsets = [0, 0, 32], sizes = [2, 8, 32], strides = [1, 1, 1]} : vector<2x8x128xbf16> to vector<2x8x32xbf16>
    %333 = vector.extract_strided_slice %312 {offsets = [0, 0, 32], sizes = [2, 8, 32], strides = [1, 1, 1]} : vector<2x8x128xbf16> to vector<2x8x32xbf16>
    "tpu.trace_start"() <{level = 10 : i32, message = "bqd,bkd->bqk"}> : () -> ()
    %cst_95 = arith.constant dense<0.000000e+00> : vector<2x8x8xf32>
    %334 = tpu.matmul %331, %332, %cst_95 {dimension_numbers = #tpu.dot_dimension_numbers<[2], [2], [1], [1], [0, 0, 0, 1, 1, 1], [0], [0]>} : vector<2x8x32xbf16>, vector<2x8x32xbf16>, vector<2x8x8xf32> -> vector<2x8x8xf32>
    "tpu.trace_stop"() : () -> ()
    %335 = vector.broadcast %5 : vector<2x1x8xf32> to vector<2x8x8xf32>
    %336 = arith.addf %334, %335 : vector<2x8x8xf32>
    %cst_96 = arith.constant dense<0xFF800000> : vector<2x8xf32>
    %337 = vector.multi_reduction <maximumf>, %336, %cst_96 [2] : vector<2x8x8xf32> to vector<2x8xf32>
    %338 = vector.shape_cast %337 : vector<2x8xf32> to vector<2x8x1xf32>
    %339 = vector.broadcast %338 : vector<2x8x1xf32> to vector<2x8x8xf32>
    %340 = arith.subf %336, %339 : vector<2x8x8xf32>
    %341 = math.exp %340 : vector<2x8x8xf32>
    %cst_97 = arith.constant dense<0.000000e+00> : vector<2x8xf32>
    %342 = vector.multi_reduction <add>, %341, %cst_97 [2] : vector<2x8x8xf32> to vector<2x8xf32>
    %343 = vector.shape_cast %342 : vector<2x8xf32> to vector<2x8x1xf32>
    %344 = tpu.reciprocal %343 {approx = true} : vector<2x8x1xf32> -> vector<2x8x1xf32>
    %345 = arith.truncf %341 : vector<2x8x8xf32> to vector<2x8x8xbf16>
    "tpu.trace_start"() <{level = 10 : i32, message = "bqk,bkd->bqd"}> : () -> ()
    %cst_98 = arith.constant dense<0.000000e+00> : vector<2x8x32xf32>
    %346 = tpu.matmul %345, %333, %cst_98 {dimension_numbers = #tpu.dot_dimension_numbers<[2], [1], [1], [2], [0, 0, 0, 1, 1, 2], [0], [0]>} : vector<2x8x8xbf16>, vector<2x8x32xbf16>, vector<2x8x32xf32> -> vector<2x8x32xf32>
    "tpu.trace_stop"() : () -> ()
    %347 = vector.broadcast %344 : vector<2x8x1xf32> to vector<2x8x32xf32>
    %348 = arith.mulf %346, %347 : vector<2x8x32xf32>
    %349 = vector.extract_strided_slice %308 {offsets = [0, 0, 64], sizes = [2, 8, 32], strides = [1, 1, 1]} : vector<2x8x128xbf16> to vector<2x8x32xbf16>
    %350 = vector.extract_strided_slice %310 {offsets = [0, 0, 64], sizes = [2, 8, 32], strides = [1, 1, 1]} : vector<2x8x128xbf16> to vector<2x8x32xbf16>
    %351 = vector.extract_strided_slice %312 {offsets = [0, 0, 64], sizes = [2, 8, 32], strides = [1, 1, 1]} : vector<2x8x128xbf16> to vector<2x8x32xbf16>
    "tpu.trace_start"() <{level = 10 : i32, message = "bqd,bkd->bqk"}> : () -> ()
    %cst_99 = arith.constant dense<0.000000e+00> : vector<2x8x8xf32>
    %352 = tpu.matmul %349, %350, %cst_99 {dimension_numbers = #tpu.dot_dimension_numbers<[2], [2], [1], [1], [0, 0, 0, 1, 1, 1], [0], [0]>} : vector<2x8x32xbf16>, vector<2x8x32xbf16>, vector<2x8x8xf32> -> vector<2x8x8xf32>
    "tpu.trace_stop"() : () -> ()
    %353 = vector.broadcast %5 : vector<2x1x8xf32> to vector<2x8x8xf32>
    %354 = arith.addf %352, %353 : vector<2x8x8xf32>
    %cst_100 = arith.constant dense<0xFF800000> : vector<2x8xf32>
    %355 = vector.multi_reduction <maximumf>, %354, %cst_100 [2] : vector<2x8x8xf32> to vector<2x8xf32>
    %356 = vector.shape_cast %355 : vector<2x8xf32> to vector<2x8x1xf32>
    %357 = vector.broadcast %356 : vector<2x8x1xf32> to vector<2x8x8xf32>
    %358 = arith.subf %354, %357 : vector<2x8x8xf32>
    %359 = math.exp %358 : vector<2x8x8xf32>
    %cst_101 = arith.constant dense<0.000000e+00> : vector<2x8xf32>
    %360 = vector.multi_reduction <add>, %359, %cst_101 [2] : vector<2x8x8xf32> to vector<2x8xf32>
    %361 = vector.shape_cast %360 : vector<2x8xf32> to vector<2x8x1xf32>
    %362 = tpu.reciprocal %361 {approx = true} : vector<2x8x1xf32> -> vector<2x8x1xf32>
    %363 = arith.truncf %359 : vector<2x8x8xf32> to vector<2x8x8xbf16>
    "tpu.trace_start"() <{level = 10 : i32, message = "bqk,bkd->bqd"}> : () -> ()
    %cst_102 = arith.constant dense<0.000000e+00> : vector<2x8x32xf32>
    %364 = tpu.matmul %363, %351, %cst_102 {dimension_numbers = #tpu.dot_dimension_numbers<[2], [1], [1], [2], [0, 0, 0, 1, 1, 2], [0], [0]>} : vector<2x8x8xbf16>, vector<2x8x32xbf16>, vector<2x8x32xf32> -> vector<2x8x32xf32>
    "tpu.trace_stop"() : () -> ()
    %365 = vector.broadcast %362 : vector<2x8x1xf32> to vector<2x8x32xf32>
    %366 = arith.mulf %364, %365 : vector<2x8x32xf32>
    %367 = vector.extract_strided_slice %308 {offsets = [0, 0, 96], sizes = [2, 8, 32], strides = [1, 1, 1]} : vector<2x8x128xbf16> to vector<2x8x32xbf16>
    %368 = vector.extract_strided_slice %310 {offsets = [0, 0, 96], sizes = [2, 8, 32], strides = [1, 1, 1]} : vector<2x8x128xbf16> to vector<2x8x32xbf16>
    %369 = vector.extract_strided_slice %312 {offsets = [0, 0, 96], sizes = [2, 8, 32], strides = [1, 1, 1]} : vector<2x8x128xbf16> to vector<2x8x32xbf16>
    "tpu.trace_start"() <{level = 10 : i32, message = "bqd,bkd->bqk"}> : () -> ()
    %cst_103 = arith.constant dense<0.000000e+00> : vector<2x8x8xf32>
    %370 = tpu.matmul %367, %368, %cst_103 {dimension_numbers = #tpu.dot_dimension_numbers<[2], [2], [1], [1], [0, 0, 0, 1, 1, 1], [0], [0]>} : vector<2x8x32xbf16>, vector<2x8x32xbf16>, vector<2x8x8xf32> -> vector<2x8x8xf32>
    "tpu.trace_stop"() : () -> ()
    %371 = vector.broadcast %5 : vector<2x1x8xf32> to vector<2x8x8xf32>
    %372 = arith.addf %370, %371 : vector<2x8x8xf32>
    %cst_104 = arith.constant dense<0xFF800000> : vector<2x8xf32>
    %373 = vector.multi_reduction <maximumf>, %372, %cst_104 [2] : vector<2x8x8xf32> to vector<2x8xf32>
    %374 = vector.shape_cast %373 : vector<2x8xf32> to vector<2x8x1xf32>
    %375 = vector.broadcast %374 : vector<2x8x1xf32> to vector<2x8x8xf32>
    %376 = arith.subf %372, %375 : vector<2x8x8xf32>
    %377 = math.exp %376 : vector<2x8x8xf32>
    %cst_105 = arith.constant dense<0.000000e+00> : vector<2x8xf32>
    %378 = vector.multi_reduction <add>, %377, %cst_105 [2] : vector<2x8x8xf32> to vector<2x8xf32>
    %379 = vector.shape_cast %378 : vector<2x8xf32> to vector<2x8x1xf32>
    %380 = tpu.reciprocal %379 {approx = true} : vector<2x8x1xf32> -> vector<2x8x1xf32>
    %381 = arith.truncf %377 : vector<2x8x8xf32> to vector<2x8x8xbf16>
    "tpu.trace_start"() <{level = 10 : i32, message = "bqk,bkd->bqd"}> : () -> ()
    %cst_106 = arith.constant dense<0.000000e+00> : vector<2x8x32xf32>
    %382 = tpu.matmul %381, %369, %cst_106 {dimension_numbers = #tpu.dot_dimension_numbers<[2], [1], [1], [2], [0, 0, 0, 1, 1, 2], [0], [0]>} : vector<2x8x8xbf16>, vector<2x8x32xbf16>, vector<2x8x32xf32> -> vector<2x8x32xf32>
    "tpu.trace_stop"() : () -> ()
    %383 = vector.broadcast %380 : vector<2x8x1xf32> to vector<2x8x32xf32>
    %384 = arith.mulf %382, %383 : vector<2x8x32xf32>
    %385 = tpu.concatenate %330, %348, %366, %384 in 2 : vector<2x8x32xf32>, vector<2x8x32xf32>, vector<2x8x32xf32>, vector<2x8x32xf32> -> vector<2x8x128xf32>
    %386 = vector.shape_cast %385 : vector<2x8x128xf32> to vector<16x128xf32>
    %387 = arith.truncf %386 : vector<16x128xf32> to vector<16x128xbf16>
    %c0_107 = arith.constant 0 : index
    %c256 = arith.constant 256 : index
    %388 = vector.load %arg8[%c0_107, %c256] : memref<128x512xbf16, #tpu.memory_space<vmem>>, vector<128x128xbf16>
    %cst_108 = arith.constant dense<0.000000e+00> : vector<16x128xf32>
    %389 = tpu.matmul %387, %388, %cst_108 {dimension_numbers = #tpu.dot_dimension_numbers<[1], [0], [0], [1], [0, 0, 1, 1], [], []>} : vector<16x128xbf16>, vector<128x128xbf16>, vector<16x128xf32> -> vector<16x128xf32>
    %390 = arith.addf %285, %389 : vector<16x128xf32>
    %391 = arith.mulf %390, %390 : vector<16x128xf32>
    %cst_109 = arith.constant dense<0.000000e+00> : vector<16xf32>
    %392 = vector.multi_reduction <add>, %391, %cst_109 [1] : vector<16x128xf32> to vector<16xf32>
    %393 = vector.shape_cast %392 : vector<16xf32> to vector<16x1xf32>
    %cst_110 = arith.constant 1.280000e+02 : f32
    %394 = vector.broadcast %cst_110 : f32 to vector<16x1xf32>
    %395 = arith.divf %393, %394 : vector<16x1xf32>
    %cst_111 = arith.constant 9.99999997E-7 : f32
    %396 = vector.broadcast %cst_111 : f32 to vector<16x1xf32>
    %397 = arith.addf %395, %396 : vector<16x1xf32>
    %398 = math.rsqrt %397 : vector<16x1xf32>
    %399 = vector.broadcast %398 : vector<16x1xf32> to vector<16x128xf32>
    %400 = arith.mulf %390, %399 : vector<16x128xf32>
    %c5 = arith.constant 5 : index
    %c0_112 = arith.constant 0 : index
    %401 = vector.load %arg6[%c5, %c0_112] : memref<8x128xf32, #tpu.memory_space<vmem>>, vector<1x128xf32>
    %402 = vector.broadcast %401 : vector<1x128xf32> to vector<16x128xf32>
    %403 = arith.mulf %400, %402 : vector<16x128xf32>
    %404 = arith.truncf %403 : vector<16x128xf32> to vector<16x128xbf16>
    %c0_113 = arith.constant 0 : index
    %c512 = arith.constant 512 : index
    %405 = vector.load %arg9[%c0_113, %c512] : memref<128x1024xbf16, #tpu.memory_space<vmem>>, vector<128x512xbf16>
    %cst_114 = arith.constant dense<0.000000e+00> : vector<16x512xf32>
    %406 = tpu.matmul %404, %405, %cst_114 {dimension_numbers = #tpu.dot_dimension_numbers<[1], [0], [0], [1], [0, 0, 1, 1], [], []>} : vector<16x128xbf16>, vector<128x512xbf16>, vector<16x512xf32> -> vector<16x512xf32>
    %407 = vector.extract_strided_slice %406 {offsets = [0, 0], sizes = [16, 256], strides = [1, 1]} : vector<16x512xf32> to vector<16x256xf32>
    %408 = arith.mulf %407, %407 : vector<16x256xf32>
    %409 = arith.mulf %407, %408 : vector<16x256xf32>
    %cst_115 = arith.constant 4.471500e-02 : f32
    %410 = vector.broadcast %cst_115 : f32 to vector<16x256xf32>
    %411 = arith.mulf %410, %409 : vector<16x256xf32>
    %412 = arith.addf %407, %411 : vector<16x256xf32>
    %cst_116 = arith.constant 0.797884583 : f32
    %413 = vector.broadcast %cst_116 : f32 to vector<16x256xf32>
    %414 = arith.mulf %413, %412 : vector<16x256xf32>
    %415 = math.tanh %414 : vector<16x256xf32>
    %cst_117 = arith.constant 1.000000e+00 : f32
    %416 = vector.broadcast %cst_117 : f32 to vector<16x256xf32>
    %417 = arith.addf %416, %415 : vector<16x256xf32>
    %cst_118 = arith.constant 5.000000e-01 : f32
    %418 = vector.broadcast %cst_118 : f32 to vector<16x256xf32>
    %419 = arith.mulf %418, %417 : vector<16x256xf32>
    %420 = arith.mulf %407, %419 : vector<16x256xf32>
    %421 = vector.extract_strided_slice %406 {offsets = [0, 256], sizes = [16, 256], strides = [1, 1]} : vector<16x512xf32> to vector<16x256xf32>
    %422 = arith.mulf %420, %421 : vector<16x256xf32>
    %423 = arith.truncf %422 : vector<16x256xf32> to vector<16x256xbf16>
    %c0_119 = arith.constant 0 : index
    %c128_120 = arith.constant 128 : index
    %424 = vector.load %arg10[%c0_119, %c128_120] : memref<256x256xbf16, #tpu.memory_space<vmem>>, vector<256x128xbf16>
    %cst_121 = arith.constant dense<0.000000e+00> : vector<16x128xf32>
    %425 = tpu.matmul %423, %424, %cst_121 {dimension_numbers = #tpu.dot_dimension_numbers<[1], [0], [0], [1], [0, 0, 1, 1], [], []>} : vector<16x256xbf16>, vector<256x128xbf16>, vector<16x128xf32> -> vector<16x128xf32>
    %426 = arith.addf %390, %425 : vector<16x128xf32>
    %427 = arith.mulf %426, %426 : vector<16x128xf32>
    %cst_122 = arith.constant dense<0.000000e+00> : vector<16xf32>
    %428 = vector.multi_reduction <add>, %427, %cst_122 [1] : vector<16x128xf32> to vector<16xf32>
    %429 = vector.shape_cast %428 : vector<16xf32> to vector<16x1xf32>
    %cst_123 = arith.constant 1.280000e+02 : f32
    %430 = vector.broadcast %cst_123 : f32 to vector<16x1xf32>
    %431 = arith.divf %429, %430 : vector<16x1xf32>
    %cst_124 = arith.constant 9.99999997E-7 : f32
    %432 = vector.broadcast %cst_124 : f32 to vector<16x1xf32>
    %433 = arith.addf %431, %432 : vector<16x1xf32>
    %434 = math.rsqrt %433 : vector<16x1xf32>
    %435 = vector.broadcast %434 : vector<16x1xf32> to vector<16x128xf32>
    %436 = arith.mulf %426, %435 : vector<16x128xf32>
    %c6 = arith.constant 6 : index
    %c0_125 = arith.constant 0 : index
    %437 = vector.load %arg6[%c6, %c0_125] : memref<8x128xf32, #tpu.memory_space<vmem>>, vector<1x128xf32>
    %438 = vector.broadcast %437 : vector<1x128xf32> to vector<16x128xf32>
    %439 = arith.mulf %436, %438 : vector<16x128xf32>
    %440 = arith.truncf %439 : vector<16x128xf32> to vector<16x128xbf16>
    %c0_126 = arith.constant 0 : index
    %c384_127 = arith.constant 384 : index
    %441 = vector.load %arg8[%c0_126, %c384_127] : memref<128x512xbf16, #tpu.memory_space<vmem>>, vector<128x128xbf16>
    %cst_128 = arith.constant dense<0.000000e+00> : vector<16x128xf32>
    %442 = tpu.matmul %440, %441, %cst_128 {dimension_numbers = #tpu.dot_dimension_numbers<[1], [0], [0], [1], [0, 0, 1, 1], [], []>} : vector<16x128xbf16>, vector<128x128xbf16>, vector<16x128xf32> -> vector<16x128xf32>
    %c0_129 = arith.constant 0 : index
    %c0_130 = arith.constant 0 : index
    %443 = vector.load %arg3[%c0_129, %c0_130] : memref<16x1xi32, #tpu.memory_space<vmem>>, vector<16x1xi32>
    %cst_131 = arith.constant dense<0xFF800000> : vector<16xf32>
    %444 = vector.multi_reduction <maximumf>, %442, %cst_131 [1] : vector<16x128xf32> to vector<16xf32>
    %445 = vector.shape_cast %444 : vector<16xf32> to vector<16x1xf32>
    %446 = vector.broadcast %445 : vector<16x1xf32> to vector<16x128xf32>
    %447 = arith.subf %442, %446 : vector<16x128xf32>
    %448 = math.exp %447 : vector<16x128xf32>
    %cst_132 = arith.constant dense<0.000000e+00> : vector<16xf32>
    %449 = vector.multi_reduction <add>, %448, %cst_132 [1] : vector<16x128xf32> to vector<16xf32>
    %450 = vector.shape_cast %449 : vector<16xf32> to vector<16x1xf32>
    %451 = math.log %450 : vector<16x1xf32>
    %452 = arith.addf %451, %445 : vector<16x1xf32>
    %453 = tpu.iota {dimensions = array<i32: 1>} : vector<16x128xi32>
    %454 = vector.broadcast %443 : vector<16x1xi32> to vector<16x128xi32>
    %455 = arith.cmpi eq, %453, %454 : vector<16x128xi32>
    %cst_133 = arith.constant 0.000000e+00 : f32
    %456 = vector.broadcast %cst_133 : f32 to vector<16x128xf32>
    %457 = arith.select %455, %442, %456 : vector<16x128xi1>, vector<16x128xf32>
    %cst_134 = arith.constant dense<0.000000e+00> : vector<16xf32>
    %458 = vector.multi_reduction <add>, %457, %cst_134 [1] : vector<16x128xf32> to vector<16xf32>
    %459 = vector.shape_cast %458 : vector<16xf32> to vector<16x1xf32>
    %c-100_i32 = arith.constant -100 : i32
    %460 = vector.broadcast %c-100_i32 : i32 to vector<16x1xi32>
    %461 = arith.cmpi ne, %443, %460 : vector<16x1xi32>
    %462 = arith.extui %461 : vector<16x1xi1> to vector<16x1xi32>
    %463 = arith.sitofp %462 : vector<16x1xi32> to vector<16x1xf32>
    %464 = arith.subf %452, %459 : vector<16x1xf32>
    %465 = arith.mulf %464, %463 : vector<16x1xf32>
    %466 = vector.shape_cast %465 : vector<16x1xf32> to vector<1x16x1xf32>
    %cst_135 = arith.constant dense<0.000000e+00> : vector<1xf32>
    %467 = vector.multi_reduction <add>, %466, %cst_135 [1, 2] : vector<1x16x1xf32> to vector<1xf32>
    %468 = vector.shape_cast %467 : vector<1xf32> to vector<1x1x1xf32>
    %469 = vector.extract %468[0, 0, 0] : f32 from vector<1x1x1xf32>
    %470 = vector.broadcast %469 : f32 to vector<1x1xf32>
    %471 = vector.shape_cast %463 : vector<16x1xf32> to vector<1x16x1xf32>
    %cst_136 = arith.constant dense<0.000000e+00> : vector<1xf32>
    %472 = vector.multi_reduction <add>, %471, %cst_136 [1, 2] : vector<1x16x1xf32> to vector<1xf32>
    %473 = vector.shape_cast %472 : vector<1xf32> to vector<1x1x1xf32>
    %474 = vector.extract %473[0, 0, 0] : f32 from vector<1x1x1xf32>
    %475 = vector.broadcast %474 : f32 to vector<1x1xf32>
    %cst_137 = arith.constant 1.000000e+00 : f32
    %476 = vector.broadcast %cst_137 : f32 to vector<1x1xf32>
    %477 = arith.maximumf %475, %476 : vector<1x1xf32>
    %478 = tpu.reciprocal %477 {approx = true} : vector<1x1xf32> -> vector<1x1xf32>
    %479 = arith.mulf %470, %478 : vector<1x1xf32>
    %480 = vector.extract %479[0, 0] : f32 from vector<1x1xf32>
    %c0_138 = arith.constant 0 : index
    %481 = memref.load %arg11[%c0_138] : memref<1xf32, #tpu.memory_space<smem>>
    memref.store %480, %arg11[%c0_138] : memref<1xf32, #tpu.memory_space<smem>>
    return
  }
  func.func @transform_0(%arg0: i32) -> (i32, i32) {
    %c0_i32 = arith.constant 0 : i32
    %c0_i32_0 = arith.constant 0 : i32
    %c0_i32_1 = arith.constant 0 : i32
    return %c0_i32, %c0_i32_0 : i32, i32
  }
  func.func @transform_1(%arg0: i32) -> (i32, i32) {
    %c0_i32 = arith.constant 0 : i32
    %c0_i32_0 = arith.constant 0 : i32
    %c0_i32_1 = arith.constant 0 : i32
    return %c0_i32, %c0_i32_0 : i32, i32
  }
  func.func @transform_2(%arg0: i32) -> (i32, i32) {
    %c0_i32 = arith.constant 0 : i32
    %c0_i32_0 = arith.constant 0 : i32
    %c0_i32_1 = arith.constant 0 : i32
    return %c0_i32, %c0_i32_0 : i32, i32
  }
  func.func @transform_3(%arg0: i32) -> (i32, i32) {
    %c0_i32 = arith.constant 0 : i32
    %c0_i32_0 = arith.constant 0 : i32
    %c0_i32_1 = arith.constant 0 : i32
    return %c0_i32, %c0_i32_0 : i32, i32
  }
  func.func @transform_4(%arg0: i32) -> (i32, i32) {
    %c0_i32 = arith.constant 0 : i32
    %c0_i32_0 = arith.constant 0 : i32
    %c0_i32_1 = arith.constant 0 : i32
    return %c0_i32, %c0_i32_0 : i32, i32
  }
  func.func @transform_5(%arg0: i32) -> (i32, i32) {
    %c0_i32 = arith.constant 0 : i32
    %c0_i32_0 = arith.constant 0 : i32
    %c0_i32_1 = arith.constant 0 : i32
    return %c0_i32, %c0_i32_0 : i32, i32
  }
  func.func @transform_6(%arg0: i32) -> (i32, i32) {
    %c0_i32 = arith.constant 0 : i32
    %c0_i32_0 = arith.constant 0 : i32
    %c0_i32_1 = arith.constant 0 : i32
    return %c0_i32, %c0_i32_0 : i32, i32
  }
  func.func @transform_7(%arg0: i32) -> (i32, i32) {
    %c0_i32 = arith.constant 0 : i32
    %c0_i32_0 = arith.constant 0 : i32
    %c0_i32_1 = arith.constant 0 : i32
    return %c0_i32, %c0_i32_0 : i32, i32
  }
  func.func @transform_8(%arg0: i32) -> (i32, i32) {
    %c0_i32 = arith.constant 0 : i32
    %c0_i32_0 = arith.constant 0 : i32
    %c0_i32_1 = arith.constant 0 : i32
    return %c0_i32, %c0_i32_0 : i32, i32
  }
  func.func @transform_9(%arg0: i32) -> (i32, i32) {
    %c0_i32 = arith.constant 0 : i32
    %c0_i32_0 = arith.constant 0 : i32
    %c0_i32_1 = arith.constant 0 : i32
    return %c0_i32, %c0_i32_0 : i32, i32
  }
  func.func @transform_10(%arg0: i32) -> i32 {
    %c0_i32 = arith.constant 0 : i32
    %c0_i32_0 = arith.constant 0 : i32
    return %c0_i32 : i32
  }
}

</mosaic_0001>

<llo_original>
// kernel: tpu_custom_call.1
$region0: #{tpu_custom_call.1}
  #allocation0 [shape = 'u32[]', space=smem, size = 0x4, offset = 0x4, fixed_abs, tag = 'smem constant byte address 0x4 - core index']
  #allocation1 [shape = 'u32[72,128]{1,0:T(1,128)}', space=vmem, size = 0x9000, scoped, tag = 'internal scratch']
  %s0 = inlined_call_operand.vmem [shape: s32[16,1], index: 0, kind: input, shape index: {}]
  %s1 = inlined_call_operand.vmem [shape: s32[16,1], index: 1, kind: input, shape index: {}]
  %s2 = inlined_call_operand.vmem [shape: s32[16,1], index: 2, kind: input, shape index: {}]
  %s3 = inlined_call_operand.vmem [shape: f32[2,8], index: 3, kind: input, shape index: {}]
  %s4 = inlined_call_operand.hbm [shape: bf16[128,128], index: 4, kind: input, shape index: {}]
  %s5 = inlined_call_operand.vmem [shape: f32[8,128], index: 5, kind: input, shape index: {}]
  %s6 = inlined_call_operand.hbm [shape: bf16[128,1152], index: 6, kind: input, shape index: {}]
  %s7 = inlined_call_operand.hbm [shape: bf16[128,512], index: 7, kind: input, shape index: {}]
  %s8 = inlined_call_operand.hbm [shape: bf16[128,1024], index: 8, kind: input, shape index: {}]
  %s9 = inlined_call_operand.hbm [shape: bf16[256,256], index: 9, kind: input, shape index: {}]
  %s10 = inlined_call_operand.hbm [shape: f32[1], index: 10, kind: output, shape index: {}]
  %s11 = sld [smem:[#allocation0]]
  $region70: #{tpu_custom_call.1} parent=0
    _
  %s13 = ssub.s32 1, %s11
  %s14 = scalar_select 0, %s13, %s11
  $region1: #{tpu_custom_call.1} parent=0
    #allocation2 [shape = 'u8[32768]{0}', space=vmem, size = 0x8000, scoped, tag = 'input window, operand 4, single buffered']
    #allocation3 [shape = 's32[1]{0}', space=sflag, size = 0x4, scoped, tag = 'scoped memory for tpu_custom_call.1']
    #allocation4 [shape = 's32[1]{0}', space=sflag, size = 0x4, scoped, tag = 'scoped memory for tpu_custom_call.1']
    #allocation5 [shape = 'u8[294912]{0}', space=vmem, size = 0x48000, scoped, tag = 'input window, operand 6, single buffered']
    #allocation6 [shape = 's32[1]{0}', space=sflag, size = 0x4, scoped, tag = 'scoped memory for tpu_custom_call.1']
    #allocation7 [shape = 'u8[131072]{0}', space=vmem, size = 0x20000, scoped, tag = 'input window, operand 7, single buffered']
    #allocation8 [shape = 'u8[262144]{0}', space=vmem, size = 0x40000, scoped, tag = 'input window, operand 8, single buffered']
    #allocation9 [shape = 's32[1]{0}', space=sflag, size = 0x4, scoped, tag = 'scoped memory for tpu_custom_call.1']
    #allocation10 [shape = 'u8[131072]{0}', space=vmem, size = 0x20000, scoped, tag = 'input window, operand 9, single buffered']
    #allocation11 [shape = 'u8[512]{0}', space=smem, size = 0x200, scoped, tag = 'output window, operand 0, single buffered']
    %15 = vsyncpa [#allocation3], 0
    %16 = vsyncpa [#allocation6], 0
    %17 = vsyncpa [#allocation9], 0
    %18 = vsyncpa [#allocation4], 0
    // Predicated region
    $region2: #{tpu_custom_call.1} parent=1 // pred_check
      _
    $region3: #{tpu_custom_call.1} parent=1 // pred_check_branch
      %20 = sbr.rel (0) target = $region5
    $region4: #{tpu_custom_call.1} parent=1 // pred_region
      _
    $region5: #{tpu_custom_call.1} parent=1 // pred_fallthru
      _
    // Predicated region
    $region6: #{tpu_custom_call.1} parent=1 // pred_check
      _
    $region7: #{tpu_custom_call.1} parent=1 // pred_check_branch
      %22 = sbr.rel (0) target = $region9
    $region8: #{tpu_custom_call.1} parent=1 // pred_region
      _
    $region9: #{tpu_custom_call.1} parent=1 // pred_fallthru
      _
    // Predicated region
    $region10: #{tpu_custom_call.1} parent=1 // pred_check
      _
    $region11: #{tpu_custom_call.1} parent=1 // pred_check_branch
      %24 = sbr.rel (0) target = $region13
    $region12: #{tpu_custom_call.1} parent=1 // pred_region
      _
    $region13: #{tpu_custom_call.1} parent=1 // pred_fallthru
      _
    // Predicated region
    $region14: #{tpu_custom_call.1} parent=1 // pred_check
      _
    $region15: #{tpu_custom_call.1} parent=1 // pred_check_branch
      %26 = sbr.rel (0) target = $region17
    $region16: #{tpu_custom_call.1} parent=1 // pred_region
      _
    $region17: #{tpu_custom_call.1} parent=1 // pred_fallthru
      _
    // Predicated region
    $region18: #{tpu_custom_call.1} parent=1 // pred_check
      _
    $region19: #{tpu_custom_call.1} parent=1 // pred_check_branch
      %28 = sbr.rel (0) target = $region21
    $region20: #{tpu_custom_call.1} parent=1 // pred_region
      %30 = vsyncadd [#allocation3], 0
      %s31 = sshll.u32 %s4, 4
      %s32 = int_to_ptr.hbm [resolvable:$true] %s31
      %s33 = sshll.u32 [#allocation2], 4
      %s34 = int_to_ptr.vmem [resolvable:$true] %s33
      %39 = dma.hbm_to_vmem [thread:$0]  %s32, 1024, %s34, [#allocation3], 64, 64, 4
    $region21: #{tpu_custom_call.1} parent=1 // pred_fallthru
      _
    // Predicated region
    $region22: #{tpu_custom_call.1} parent=1 // pred_check
      _
    $region23: #{tpu_custom_call.1} parent=1 // pred_check_branch
      %41 = sbr.rel (0) target = $region25
    $region24: #{tpu_custom_call.1} parent=1 // pred_region
      _
    $region25: #{tpu_custom_call.1} parent=1 // pred_fallthru
      _
    // Predicated region
    $region26: #{tpu_custom_call.1} parent=1 // pred_check
      _
    $region27: #{tpu_custom_call.1} parent=1 // pred_check_branch
      %43 = sbr.rel (0) target = $region29
    $region28: #{tpu_custom_call.1} parent=1 // pred_region
      %45 = vsyncadd [#allocation6], 0
      %s46 = sshll.u32 %s6, 4
      %s47 = int_to_ptr.hbm [resolvable:$true] %s46
      %s48 = sshll.u32 [#allocation5], 4
      %s49 = int_to_ptr.vmem [resolvable:$true] %s48
      %54 = dma.hbm_to_vmem [thread:$0]  %s47, 9216, %s49, [#allocation6], 576, 576, 36
    $region29: #{tpu_custom_call.1} parent=1 // pred_fallthru
      _
    // Predicated region
    $region30: #{tpu_custom_call.1} parent=1 // pred_check
      _
    $region31: #{tpu_custom_call.1} parent=1 // pred_check_branch
      %56 = sbr.rel (0) target = $region33
    $region32: #{tpu_custom_call.1} parent=1 // pred_region
      %58 = vsyncadd [#allocation6], 0
      %s59 = sshll.u32 %s7, 4
      %s60 = int_to_ptr.hbm [resolvable:$true] %s59
      %s61 = sshll.u32 [#allocation7], 4
      %s62 = int_to_ptr.vmem [resolvable:$true] %s61
      %67 = dma.hbm_to_vmem [thread:$0]  %s60, 4096, %s62, [#allocation6], 256, 256, 16
    $region33: #{tpu_custom_call.1} parent=1 // pred_fallthru
      _
    // Predicated region
    $region34: #{tpu_custom_call.1} parent=1 // pred_check
      _
    $region35: #{tpu_custom_call.1} parent=1 // pred_check_branch
      %69 = sbr.rel (0) target = $region37
    $region36: #{tpu_custom_call.1} parent=1 // pred_region
      %71 = vsyncadd [#allocation9], 0
      %s72 = sshll.u32 %s8, 4
      %s73 = int_to_ptr.hbm [resolvable:$true] %s72
      %s74 = sshll.u32 [#allocation8], 4
      %s75 = int_to_ptr.vmem [resolvable:$true] %s74
      %80 = dma.hbm_to_vmem [thread:$0]  %s73, 8192, %s75, [#allocation9], 512, 512, 32
    $region37: #{tpu_custom_call.1} parent=1 // pred_fallthru
      _
    // Predicated region
    $region38: #{tpu_custom_call.1} parent=1 // pred_check
      _
    $region39: #{tpu_custom_call.1} parent=1 // pred_check_branch
      %82 = sbr.rel (0) target = $region41
    $region40: #{tpu_custom_call.1} parent=1 // pred_region
      %84 = vsyncadd [#allocation9], 0
      %s85 = sshll.u32 %s9, 4
      %s86 = int_to_ptr.hbm [resolvable:$true] %s85
      %s87 = sshll.u32 [#allocation10], 4
      %s88 = int_to_ptr.vmem [resolvable:$true] %s87
      %93 = dma.hbm_to_vmem [thread:$0]  %s86, 4096, %s88, [#allocation9], 128, 128, 8
    $region41: #{tpu_custom_call.1} parent=1 // pred_fallthru
      _
    // Predicated region
    $region42: #{tpu_custom_call.1} parent=1 // pred_check
      _
    $region43: #{tpu_custom_call.1} parent=1 // pred_check_branch
      %95 = sbr.rel (0) target = $region45
    $region44: #{tpu_custom_call.1} parent=1 // pred_region
      %97 = dma.done [#allocation3], 1024
    $region45: #{tpu_custom_call.1} parent=1 // pred_fallthru
      _
    // Predicated region
    $region46: #{tpu_custom_call.1} parent=1 // pred_check
      _
    $region47: #{tpu_custom_call.1} parent=1 // pred_check_branch
      %99 = sbr.rel (0) target = $region49
    $region48: #{tpu_custom_call.1} parent=1 // pred_region
      %101 = dma.done [#allocation6], 9216
    $region49: #{tpu_custom_call.1} parent=1 // pred_fallthru
      _
    // Predicated region
    $region50: #{tpu_custom_call.1} parent=1 // pred_check
      _
    $region51: #{tpu_custom_call.1} parent=1 // pred_check_branch
      %103 = sbr.rel (0) target = $region53
    $region52: #{tpu_custom_call.1} parent=1 // pred_region
      %105 = dma.done [#allocation6], 4096
    $region53: #{tpu_custom_call.1} parent=1 // pred_fallthru
      _
    // Predicated region
    $region54: #{tpu_custom_call.1} parent=1 // pred_check
      _
    $region55: #{tpu_custom_call.1} parent=1 // pred_check_branch
      %107 = sbr.rel (0) target = $region57
    $region56: #{tpu_custom_call.1} parent=1 // pred_region
      %109 = dma.done [#allocation9], 8192
    $region57: #{tpu_custom_call.1} parent=1 // pred_fallthru
      _
    // Predicated region
    $region58: #{tpu_custom_call.1} parent=1 // pred_check
      _
    $region59: #{tpu_custom_call.1} parent=1 // pred_check_branch
      %111 = sbr.rel (0) target = $region61
    $region60: #{tpu_custom_call.1} parent=1 // pred_region
      %113 = dma.done [#allocation9], 4096
    $region61: #{tpu_custom_call.1} parent=1 // pred_fallthru
      _
    %v115 = vld [vmem:[%s3] sm:$0x3]
    %v116 = vsub.f32 1.0, %v115
    %v117 = vmul.f32 %v116, -1e+09
    %v119 = vrot.slane %v117, 1
    %v120 = vlaneseq
    %v121 = vshrl.u32 %v120, 7
    %v122 = vlaneseq
    %v123 = vand.u32 %v122, 127
    %vm124 = vcmp.ge.s32.totalorder %v121, %v123
    %v125 = vsel %vm124, 0.0, -1e+09
    %v126 = vld [vmem:[%s0] sm:$0xff]
    %v127 = vld [vmem:[%s0 + $0x8] sm:$0xff]
    %128 = vset.pattern.permute.xlu0 0
    %129 = vperm.xlu0 %128, %v126
    %v130 = vpop.permute.xlu0 %129
    %131 = vset.pattern.permute.xlu0 0
    %132 = vperm.xlu0 %131, %v127
    %v133 = vpop.permute.xlu0 %132
    %vm134 = vcmp.eq.s32.totalorder %v123, %v130
    %vm135 = vcmp.eq.s32.totalorder %v123, %v133
    %v136 = vsel %vm134, 1, 0
    %v137 = vsel %vm135, 1, 0
    %v138 = vcvt.s32.f32 %v136
    %v139 = vcvt.s32.f32 %v137
    %v140 = vpack.c.bf16 %v139, %v138
    %v141 = vld [vmem:[#allocation2] sm:$0xf]
    %v142 = vld [vmem:[#allocation2 + $0x4] sm:$0xf]
    %v143 = vld [vmem:[#allocation2 + $0x8] sm:$0xf]
    %v144 = vld [vmem:[#allocation2 + $0xc] sm:$0xf]
    %v145 = vld [vmem:[#allocation2 + $0x10] sm:$0xf]
    %v146 = vld [vmem:[#allocation2 + $0x14] sm:$0xf]
    %v147 = vld [vmem:[#allocation2 + $0x18] sm:$0xf]
    %v148 = vld [vmem:[#allocation2 + $0x1c] sm:$0xf]
    %v149 = vld [vmem:[#allocation2 + $0x20] sm:$0xf]
    %v150 = vld [vmem:[#allocation2 + $0x24] sm:$0xf]
    %v151 = vld [vmem:[#allocation2 + $0x28] sm:$0xf]
    %v152 = vld [vmem:[#allocation2 + $0x2c] sm:$0xf]
    %v153 = vld [vmem:[#allocation2 + $0x30] sm:$0xf]
    %v154 = vld [vmem:[#allocation2 + $0x34] sm:$0xf]
    %v155 = vld [vmem:[#allocation2 + $0x38] sm:$0xf]
    %v156 = vld [vmem:[#allocation2 + $0x3c] sm:$0xf]
    %v173 = vunpack.c.l.b16 %v141
    %v174 = vunpack.c.l.b16 %v142
    %v175 = vunpack.c.l.b16 %v143
    %v176 = vunpack.c.l.b16 %v144
    %v177 = vunpack.c.l.b16 %v145
    %v178 = vunpack.c.l.b16 %v146
    %v179 = vunpack.c.l.b16 %v147
    %v180 = vunpack.c.l.b16 %v148
    %v181 = vunpack.c.l.b16 %v149
    %v182 = vunpack.c.l.b16 %v150
    %v183 = vunpack.c.l.b16 %v151
    %v184 = vunpack.c.l.b16 %v152
    %v185 = vunpack.c.l.b16 %v153
    %v186 = vunpack.c.l.b16 %v154
    %v187 = vunpack.c.l.b16 %v155
    %v188 = vunpack.c.l.b16 %v156
    %v189 = vpack.c.b16 %v174, %v173
    %v190 = vpack.c.b16 %v176, %v175
    %v191 = vpack.c.b16 %v178, %v177
    %v192 = vpack.c.b16 %v180, %v179
    %v193 = vpack.c.b16 %v182, %v181
    %v194 = vpack.c.b16 %v184, %v183
    %v195 = vpack.c.b16 %v186, %v185
    %v196 = vpack.c.b16 %v188, %v187
    %205 = vmatpush.bf16.msra.mxu0 %v196
    %206 = vmatpush.bf16.msra.mxu0 %v195
    %207 = vmatpush.bf16.msra.mxu0 %v194
    %208 = vmatpush.bf16.msra.mxu0 %v193
    %209 = vmatpush.bf16.msra.mxu0 %v192
    %210 = vmatpush.bf16.msra.mxu0 %v191
    %211 = vmatpush.bf16.msra.mxu0 %v190
    %212 = vmatpush.bf16.msra.mxu0 %v189
    %213 = vmatmul.bf16.gmra.mxu0 %v140
    %v214 = vpop.f32.mrf.mxu0
    %v215 = vadd.f32 0.0, %v214
    %v216 = vpop.f32.mrf.mxu0
    %v217 = vadd.f32 0.0, %v216
    %218 = vdwg.mxu0
    %v219 = vmul.f32 %v215, %v215
    %v220 = vmul.f32 %v217, %v217
    %221 = vadd.xlane.f32.xlu0 %v219
    %v222 = vpop.xlane.xlu0 %221
    %223 = vadd.xlane.f32.xlu0 %v220
    %v224 = vpop.xlane.xlu0 %223
    %v225 = vrcp.pop 128.0
    %v226 = vmul.f32 128.0, %v225
    %v227 = vsub.f32 1.0, %v226
    %v228 = vmul.f32 %v225, %v227
    %v229 = vadd.f32 %v225, %v228
    %vm230 = vweird.f32 %v225
    %v231 = vsel %vm230, %v225, %v229
    %v232 = vmul.f32 %v222, %v231
    %v233 = vmul.f32 %v224, %v231
    %v234 = vadd.f32 %v232, 1e-06
    %v235 = vadd.f32 %v233, 1e-06
    %v236 = vrsqrt.pop %v234
    %v237 = vmul.f32 %v236, %v234
    %v238 = vmul.f32 %v237, %v236
    %v239 = vmul.f32 0.5, %v238
    %v240 = vsub.f32 1.5, %v239
    %v241 = vmul.f32 %v236, %v240
    %vm242 = vweird.f32 %v234
    %vm243 = vweird.f32 %v236
    %vm244 = vmor %vm242, %vm243
    %v245 = vsel %vm244, %v236, %v241
    %v246 = vrsqrt.pop %v235
    %v247 = vmul.f32 %v246, %v235
    %v248 = vmul.f32 %v247, %v246
    %v249 = vmul.f32 0.5, %v248
    %v250 = vsub.f32 1.5, %v249
    %v251 = vmul.f32 %v246, %v250
    %vm252 = vweird.f32 %v235
    %vm253 = vweird.f32 %v246
    %vm254 = vmor %vm252, %vm253
    %v255 = vsel %vm254, %v246, %v251
    %v256 = vmul.f32 %v215, %v245
    %v257 = vmul.f32 %v217, %v255
    %v258 = vld [vmem:[%s5] sm:$0x1]
    %v259 = vperm.slane %v258, 0
    %v260 = vmul.f32 %v256, %v259
    %v261 = vmul.f32 %v257, %v259
    %v262 = vpack.c.bf16 %v261, %v260
    %v263 = vld [vmem:[#allocation5] sm:$0xff]
    %v264 = vld [vmem:[#allocation5 + $0x8] sm:$0xf]
    %v265 = vld [vmem:[#allocation5 + $0x24] sm:$0xff]
    %v266 = vld [vmem:[#allocation5 + $0x2c] sm:$0xf]
    %v267 = vld [vmem:[#allocation5 + $0x48] sm:$0xff]
    %v268 = vld [vmem:[#allocation5 + $0x50] sm:$0xf]
    %v269 = vld [vmem:[#allocation5 + $0x6c] sm:$0xff]
    %v270 = vld [vmem:[#allocation5 + $0x74] sm:$0xf]
    %v271 = vld [vmem:[#allocation5 + $0x90] sm:$0xff]
    %v272 = vld [vmem:[#allocation5 + $0x98] sm:$0xf]
    %v273 = vld [vmem:[#allocation5 + $0xb4] sm:$0xff]
    %v274 = vld [vmem:[#allocation5 + $0xbc] sm:$0xf]
    %v275 = vld [vmem:[#allocation5 + $0xd8] sm:$0xff]
    %v276 = vld [vmem:[#allocation5 + $0xe0] sm:$0xf]
    %v277 = vld [vmem:[#allocation5 + $0xfc] sm:$0xff]
    %v278 = vld [vmem:[#allocation5 + $0x104] sm:$0xf]
    %v279 = vld [vmem:[#allocation5 + $0x120] sm:$0xff]
    %v280 = vld [vmem:[#allocation5 + $0x128] sm:$0xf]
    %v281 = vld [vmem:[#allocation5 + $0x144] sm:$0xff]
    %v282 = vld [vmem:[#allocation5 + $0x14c] sm:$0xf]
    %v283 = vld [vmem:[#allocation5 + $0x168] sm:$0xff]
    %v284 = vld [vmem:[#allocation5 + $0x170] sm:$0xf]
    %v285 = vld [vmem:[#allocation5 + $0x18c] sm:$0xff]
    %v286 = vld [vmem:[#allocation5 + $0x194] sm:$0xf]
    %v287 = vld [vmem:[#allocation5 + $0x1b0] sm:$0xff]
    %v288 = vld [vmem:[#allocation5 + $0x1b8] sm:$0xf]
    %v289 = vld [vmem:[#allocation5 + $0x1d4] sm:$0xff]
    %v290 = vld [vmem:[#allocation5 + $0x1dc] sm:$0xf]
    %v291 = vld [vmem:[#allocation5 + $0x1f8] sm:$0xff]
    %v292 = vld [vmem:[#allocation5 + $0x200] sm:$0xf]
    %v293 = vld [vmem:[#allocation5 + $0x21c] sm:$0xff]
    %v294 = vld [vmem:[#allocation5 + $0x224] sm:$0xf]
    %v327 = vunpack.c.l.b16 %v263
    %v328 = vunpack.c.h.b16 %v263
    %v329 = vunpack.c.l.b16 %v264
    %v330 = vunpack.c.l.b16 %v265
    %v331 = vunpack.c.h.b16 %v265
    %v332 = vunpack.c.l.b16 %v266
    %v333 = vunpack.c.l.b16 %v267
    %v334 = vunpack.c.h.b16 %v267
    %v335 = vunpack.c.l.b16 %v268
    %v336 = vunpack.c.l.b16 %v269
    %v337 = vunpack.c.h.b16 %v269
    %v338 = vunpack.c.l.b16 %v270
    %v339 = vunpack.c.l.b16 %v271
    %v340 = vunpack.c.h.b16 %v271
    %v341 = vunpack.c.l.b16 %v272
    %v342 = vunpack.c.l.b16 %v273
    %v343 = vunpack.c.h.b16 %v273
    %v344 = vunpack.c.l.b16 %v274
    %v345 = vunpack.c.l.b16 %v275
    %v346 = vunpack.c.h.b16 %v275
    %v347 = vunpack.c.l.b16 %v276
    %v348 = vunpack.c.l.b16 %v277
    %v349 = vunpack.c.h.b16 %v277
    %v350 = vunpack.c.l.b16 %v278
    %v351 = vunpack.c.l.b16 %v279
    %v352 = vunpack.c.h.b16 %v279
    %v353 = vunpack.c.l.b16 %v280
    %v354 = vunpack.c.l.b16 %v281
    %v355 = vunpack.c.h.b16 %v281
    %v356 = vunpack.c.l.b16 %v282
    %v357 = vunpack.c.l.b16 %v283
    %v358 = vunpack.c.h.b16 %v283
    %v359 = vunpack.c.l.b16 %v284
    %v360 = vunpack.c.l.b16 %v285
    %v361 = vunpack.c.h.b16 %v285
    %v362 = vunpack.c.l.b16 %v286
    %v363 = vunpack.c.l.b16 %v287
    %v364 = vunpack.c.h.b16 %v287
    %v365 = vunpack.c.l.b16 %v288
    %v366 = vunpack.c.l.b16 %v289
    %v367 = vunpack.c.h.b16 %v289
    %v368 = vunpack.c.l.b16 %v290
    %v369 = vunpack.c.l.b16 %v291
    %v370 = vunpack.c.h.b16 %v291
    %v371 = vunpack.c.l.b16 %v292
    %v372 = vunpack.c.l.b16 %v293
    %v373 = vunpack.c.h.b16 %v293
    %v374 = vunpack.c.l.b16 %v294
    %v375 = vpack.c.b16 %v330, %v327
    %v376 = vpack.c.b16 %v331, %v328
    %v377 = vpack.c.b16 %v332, %v329
    %v378 = vpack.c.b16 %v336, %v333
    %v379 = vpack.c.b16 %v337, %v334
    %v380 = vpack.c.b16 %v338, %v335
    %v381 = vpack.c.b16 %v342, %v339
    %v382 = vpack.c.b16 %v343, %v340
    %v383 = vpack.c.b16 %v344, %v341
    %v384 = vpack.c.b16 %v348, %v345
    %v385 = vpack.c.b16 %v349, %v346
    %v386 = vpack.c.b16 %v350, %v347
    %v387 = vpack.c.b16 %v354, %v351
    %v388 = vpack.c.b16 %v355, %v352
    %v389 = vpack.c.b16 %v356, %v353
    %v390 = vpack.c.b16 %v360, %v357
    %v391 = vpack.c.b16 %v361, %v358
    %v392 = vpack.c.b16 %v362, %v359
    %v393 = vpack.c.b16 %v366, %v363
    %v394 = vpack.c.b16 %v367, %v364
    %v395 = vpack.c.b16 %v368, %v365
    %v396 = vpack.c.b16 %v372, %v369
    %v397 = vpack.c.b16 %v373, %v370
    %v398 = vpack.c.b16 %v374, %v371
    %423 = vmatpush.bf16.msra.mxu0 %v396
    %424 = vmatpush.bf16.msra.mxu0 %v393
    %425 = vmatpush.bf16.msra.mxu0 %v390
    %426 = vmatpush.bf16.msra.mxu0 %v387
    %427 = vmatpush.bf16.msra.mxu0 %v384
    %428 = vmatpush.bf16.msra.mxu0 %v381
    %429 = vmatpush.bf16.msra.mxu0 %v378
    %430 = vmatpush.bf16.msra.mxu0 %v375
    %431 = vmatmul.bf16.gmra.mxu0 %v262
    %v432 = vpop.f32.mrf.mxu0
    %v433 = vadd.f32 0.0, %v432
    %v434 = vpop.f32.mrf.mxu0
    %v435 = vadd.f32 0.0, %v434
    %436 = vdwg.mxu0
    %437 = vmatpush.bf16.msra.mxu0 %v397
    %438 = vmatpush.bf16.msra.mxu0 %v394
    %439 = vmatpush.bf16.msra.mxu0 %v391
    %440 = vmatpush.bf16.msra.mxu0 %v388
    %441 = vmatpush.bf16.msra.mxu0 %v385
    %442 = vmatpush.bf16.msra.mxu0 %v382
    %443 = vmatpush.bf16.msra.mxu0 %v379
    %444 = vmatpush.bf16.msra.mxu0 %v376
    %445 = vmatmul.bf16.gmra.mxu0 %v262
    %v446 = vpop.f32.mrf.mxu0
    %v447 = vadd.f32 0.0, %v446
    %v448 = vpop.f32.mrf.mxu0
    %v449 = vadd.f32 0.0, %v448
    %450 = vdwg.mxu0
    %451 = vmatpush.bf16.msra.mxu0 %v398
    %452 = vmatpush.bf16.msra.mxu0 %v395
    %453 = vmatpush.bf16.msra.mxu0 %v392
    %454 = vmatpush.bf16.msra.mxu0 %v389
    %455 = vmatpush.bf16.msra.mxu0 %v386
    %456 = vmatpush.bf16.msra.mxu0 %v383
    %457 = vmatpush.bf16.msra.mxu0 %v380
    %458 = vmatpush.bf16.msra.mxu0 %v377
    %459 = vmatmul.bf16.gmra.mxu0 %v262
    %v460 = vpop.f32.mrf.mxu0
    %v461 = vadd.f32 0.0, %v460
    %v462 = vpop.f32.mrf.mxu0
    %v463 = vadd.f32 0.0, %v462
    %464 = vdwg.mxu0
    %v465 = vpack.c.bf16 %v433, %v433
    %v466 = vpack.c.bf16 %v435, %v435
    %v467 = vpack.c.bf16 %v447, %v447
    %v468 = vpack.c.bf16 %v449, %v449
    %v469 = vpack.c.bf16 %v461, %v461
    %v470 = vpack.c.bf16 %v463, %v463
    %v471 = vperm.slane %v117, 0
    %v472 = vperm.slane %v119, 0
    %vm475 = vcmask 261120
    %v477 = vsel %vm475, %v465, 0
    %v480 = vsel %vm475, %v467, 0
    %482 = vmatpush.bf16.xpose.msra.mxu0 0
    %483 = vmatpush.bf16.xpose.msra.mxu0 0
    %484 = vmatpush.bf16.xpose.msra.mxu0 0
    %485 = vmatpush.bf16.xpose.msra.mxu0 0
    %486 = vmatpush.bf16.xpose.msra.mxu0 0
    %487 = vmatpush.bf16.xpose.msra.mxu0 0
    %488 = vmatpush.bf16.xpose.msra.mxu0 0
    %489 = vmatpush.bf16.xpose.msra.mxu0 %v480
    %490 = vmatmul.bf16.gmra.mxu0 %v477
    %v491 = vpop.f32.mrf.mxu0
    %v492 = vadd.f32 %v471, %v491
    %v493 = vpop.f32.mrf.mxu0
    %494 = vdwg.mxu0
    %v496 = vsel %vm475, %v466, 0
    %v499 = vsel %vm475, %v468, 0
    %501 = vmatpush.bf16.xpose.msra.mxu0 0
    %502 = vmatpush.bf16.xpose.msra.mxu0 0
    %503 = vmatpush.bf16.xpose.msra.mxu0 0
    %504 = vmatpush.bf16.xpose.msra.mxu0 0
    %505 = vmatpush.bf16.xpose.msra.mxu0 0
    %506 = vmatpush.bf16.xpose.msra.mxu0 0
    %507 = vmatpush.bf16.xpose.msra.mxu0 0
    %508 = vmatpush.bf16.xpose.msra.mxu0 %v499
    %509 = vmatmul.bf16.gmra.mxu0 %v496
    %v510 = vpop.f32.mrf.mxu0
    %v511 = vadd.f32 %v472, %v510
    %v512 = vpop.f32.mrf.mxu0
    %513 = vdwg.mxu0
    %vm514 = vcmask 64512
    %v515 = vsel %vm514, %v492, -inf
    %516 = vmax.xlane.f32.xlu0 %v515
    %v517 = vpop.xlane.xlu0 %516
    %v518 = vsel %vm514, %v511, -inf
    %519 = vmax.xlane.f32.xlu0 %v518
    %v520 = vpop.xlane.xlu0 %519
    %v521 = vsub.f32 %v492, %v517
    %v522 = vsub.f32 %v511, %v520
    %v523 = vmul.f32 %v521, 1.442695
    %v524 = vpow.pop %v523
    %v525 = vmul.f32 %v522, 1.442695
    %v526 = vpow.pop %v525
    %v527 = vsel %vm514, %v524, 0.0
    %528 = vadd.xlane.f32.xlu0 %v527
    %v529 = vpop.xlane.xlu0 %528
    %v530 = vsel %vm514, %v526, 0.0
    %531 = vadd.xlane.f32.xlu0 %v530
    %v532 = vpop.xlane.xlu0 %531
    %v533 = vrcp.pop %v529
    %v534 = vrcp.pop %v532
    %v535 = vpack.c.bf16 %v524, %v524
    %v536 = vpack.c.bf16 %v526, %v526
    %v538 = vsel %vm514, %v535, 0
    %vm540 = vcmask 1043456
    %v542 = vsel %vm540, %v469, 0
    %544 = vmatpush.bf16.msra.mxu0 0
    %545 = vmatpush.bf16.msra.mxu0 0
    %546 = vmatpush.bf16.msra.mxu0 0
    %547 = vmatpush.bf16.msra.mxu0 0
    %548 = vmatpush.bf16.msra.mxu0 0
    %549 = vmatpush.bf16.msra.mxu0 0
    %550 = vmatpush.bf16.msra.mxu0 0
    %551 = vmatpush.bf16.msra.mxu0 %v542
    %552 = vmatmul.bf16.gmra.mxu0 %v538
    %v553 = vpop.f32.mrf.mxu0
    %v554 = vadd.f32 0.0, %v553
    %v555 = vpop.f32.mrf.mxu0
    %556 = vdwg.mxu0
    %v558 = vsel %vm514, %v536, 0
    %v561 = vsel %vm540, %v470, 0
    %563 = vmatpush.bf16.msra.mxu0 0
    %564 = vmatpush.bf16.msra.mxu0 0
    %565 = vmatpush.bf16.msra.mxu0 0
    %566 = vmatpush.bf16.msra.mxu0 0
    %567 = vmatpush.bf16.msra.mxu0 0
    %568 = vmatpush.bf16.msra.mxu0 0
    %569 = vmatpush.bf16.msra.mxu0 0
    %570 = vmatpush.bf16.msra.mxu0 %v561
    %571 = vmatmul.bf16.gmra.mxu0 %v558
    %v572 = vpop.f32.mrf.mxu0
    %v573 = vadd.f32 0.0, %v572
    %v574 = vpop.f32.mrf.mxu0
    %575 = vdwg.mxu0
    %v576 = vmul.f32 %v554, %v533
    %v577 = vmul.f32 %v573, %v534
    %v579 = vunpack.c.l.b16 %v465
    %v580 = vpack.c.b16 %v579, %v579
    %581 = vrot.lane.b32.xlu0 %v580, 96
    %v582 = vpop.permute.xlu0 %581
    %v584 = vunpack.c.l.b16 %v467
    %v585 = vpack.c.b16 %v584, %v584
    %586 = vrot.lane.b32.xlu0 %v585, 96
    %v587 = vpop.permute.xlu0 %586
    %v589 = vsel %vm475, %v582, 0
    %v592 = vsel %vm475, %v587, 0
    %594 = vmatpush.bf16.xpose.msra.mxu0 0
    %595 = vmatpush.bf16.xpose.msra.mxu0 0
    %596 = vmatpush.bf16.xpose.msra.mxu0 0
    %597 = vmatpush.bf16.xpose.msra.mxu0 0
    %598 = vmatpush.bf16.xpose.msra.mxu0 0
    %599 = vmatpush.bf16.xpose.msra.mxu0 0
    %600 = vmatpush.bf16.xpose.msra.mxu0 0
    %601 = vmatpush.bf16.xpose.msra.mxu0 %v592
    %602 = vmatmul.bf16.gmra.mxu0 %v589
    %v603 = vpop.f32.mrf.mxu0
    %v604 = vadd.f32 %v471, %v603
    %v605 = vpop.f32.mrf.mxu0
    %606 = vdwg.mxu0
    %v608 = vunpack.c.l.b16 %v466
    %v609 = vpack.c.b16 %v608, %v608
    %610 = vrot.lane.b32.xlu0 %v609, 96
    %v611 = vpop.permute.xlu0 %610
    %v613 = vunpack.c.l.b16 %v468
    %v614 = vpack.c.b16 %v613, %v613
    %615 = vrot.lane.b32.xlu0 %v614, 96
    %v616 = vpop.permute.xlu0 %615
    %v618 = vsel %vm475, %v611, 0
    %v621 = vsel %vm475, %v616, 0
    %623 = vmatpush.bf16.xpose.msra.mxu0 0
    %624 = vmatpush.bf16.xpose.msra.mxu0 0
    %625 = vmatpush.bf16.xpose.msra.mxu0 0
    %626 = vmatpush.bf16.xpose.msra.mxu0 0
    %627 = vmatpush.bf16.xpose.msra.mxu0 0
    %628 = vmatpush.bf16.xpose.msra.mxu0 0
    %629 = vmatpush.bf16.xpose.msra.mxu0 0
    %630 = vmatpush.bf16.xpose.msra.mxu0 %v621
    %631 = vmatmul.bf16.gmra.mxu0 %v618
    %v632 = vpop.f32.mrf.mxu0
    %v633 = vadd.f32 %v472, %v632
    %v634 = vpop.f32.mrf.mxu0
    %635 = vdwg.mxu0
    %v636 = vsel %vm514, %v604, -inf
    %637 = vmax.xlane.f32.xlu0 %v636
    %v638 = vpop.xlane.xlu0 %637
    %v639 = vsel %vm514, %v633, -inf
    %640 = vmax.xlane.f32.xlu0 %v639
    %v641 = vpop.xlane.xlu0 %640
    %v642 = vsub.f32 %v604, %v638
    %v643 = vsub.f32 %v633, %v641
    %v644 = vmul.f32 %v642, 1.442695
    %v645 = vpow.pop %v644
    %v646 = vmul.f32 %v643, 1.442695
    %v647 = vpow.pop %v646
    %v648 = vsel %vm514, %v645, 0.0
    %649 = vadd.xlane.f32.xlu0 %v648
    %v650 = vpop.xlane.xlu0 %649
    %v651 = vsel %vm514, %v647, 0.0
    %652 = vadd.xlane.f32.xlu0 %v651
    %v653 = vpop.xlane.xlu0 %652
    %v654 = vrcp.pop %v650
    %v655 = vrcp.pop %v653
    %v656 = vpack.c.bf16 %v645, %v645
    %v657 = vpack.c.bf16 %v647, %v647
    %v659 = vunpack.c.l.b16 %v469
    %v660 = vpack.c.b16 %v659, %v659
    %661 = vrot.lane.b32.xlu0 %v660, 96
    %v662 = vpop.permute.xlu0 %661
    %v664 = vsel %vm514, %v656, 0
    %v667 = vsel %vm540, %v662, 0
    %669 = vmatpush.bf16.msra.mxu0 0
    %670 = vmatpush.bf16.msra.mxu0 0
    %671 = vmatpush.bf16.msra.mxu0 0
    %672 = vmatpush.bf16.msra.mxu0 0
    %673 = vmatpush.bf16.msra.mxu0 0
    %674 = vmatpush.bf16.msra.mxu0 0
    %675 = vmatpush.bf16.msra.mxu0 0
    %676 = vmatpush.bf16.msra.mxu0 %v667
    %677 = vmatmul.bf16.gmra.mxu0 %v664
    %v678 = vpop.f32.mrf.mxu0
    %v679 = vadd.f32 0.0, %v678
    %v680 = vpop.f32.mrf.mxu0
    %681 = vdwg.mxu0
    %v683 = vunpack.c.l.b16 %v470
    %v684 = vpack.c.b16 %v683, %v683
    %685 = vrot.lane.b32.xlu0 %v684, 96
    %v686 = vpop.permute.xlu0 %685
    %v688 = vsel %vm514, %v657, 0
    %v691 = vsel %vm540, %v686, 0
    %693 = vmatpush.bf16.msra.mxu0 0
    %694 = vmatpush.bf16.msra.mxu0 0
    %695 = vmatpush.bf16.msra.mxu0 0
    %696 = vmatpush.bf16.msra.mxu0 0
    %697 = vmatpush.bf16.msra.mxu0 0
    %698 = vmatpush.bf16.msra.mxu0 0
    %699 = vmatpush.bf16.msra.mxu0 0
    %700 = vmatpush.bf16.msra.mxu0 %v691
    %701 = vmatmul.bf16.gmra.mxu0 %v688
    %v702 = vpop.f32.mrf.mxu0
    %v703 = vadd.f32 0.0, %v702
    %v704 = vpop.f32.mrf.mxu0
    %705 = vdwg.mxu0
    %v706 = vmul.f32 %v679, %v654
    %v707 = vmul.f32 %v703, %v655
    %708 = vrot.lane.b32.xlu0 %v580, 64
    %v709 = vpop.permute.xlu0 %708
    %710 = vrot.lane.b32.xlu0 %v585, 64
    %v711 = vpop.permute.xlu0 %710
    %v713 = vsel %vm475, %v709, 0
    %v716 = vsel %vm475, %v711, 0
    %718 = vmatpush.bf16.xpose.msra.mxu0 0
    %719 = vmatpush.bf16.xpose.msra.mxu0 0
    %720 = vmatpush.bf16.xpose.msra.mxu0 0
    %721 = vmatpush.bf16.xpose.msra.mxu0 0
    %722 = vmatpush.bf16.xpose.msra.mxu0 0
    %723 = vmatpush.bf16.xpose.msra.mxu0 0
    %724 = vmatpush.bf16.xpose.msra.mxu0 0
    %725 = vmatpush.bf16.xpose.msra.mxu0 %v716
    %726 = vmatmul.bf16.gmra.mxu0 %v713
    %v727 = vpop.f32.mrf.mxu0
    %v728 = vadd.f32 %v471, %v727
    %v729 = vpop.f32.mrf.mxu0
    %730 = vdwg.mxu0
    %731 = vrot.lane.b32.xlu0 %v609, 64
    %v732 = vpop.permute.xlu0 %731
    %733 = vrot.lane.b32.xlu0 %v614, 64
    %v734 = vpop.permute.xlu0 %733
    %v736 = vsel %vm475, %v732, 0
    %v739 = vsel %vm475, %v734, 0
    %741 = vmatpush.bf16.xpose.msra.mxu0 0
    %742 = vmatpush.bf16.xpose.msra.mxu0 0
    %743 = vmatpush.bf16.xpose.msra.mxu0 0
    %744 = vmatpush.bf16.xpose.msra.mxu0 0
    %745 = vmatpush.bf16.xpose.msra.mxu0 0
    %746 = vmatpush.bf16.xpose.msra.mxu0 0
    %747 = vmatpush.bf16.xpose.msra.mxu0 0
    %748 = vmatpush.bf16.xpose.msra.mxu0 %v739
    %749 = vmatmul.bf16.gmra.mxu0 %v736
    %v750 = vpop.f32.mrf.mxu0
    %v751 = vadd.f32 %v472, %v750
    %v752 = vpop.f32.mrf.mxu0
    %753 = vdwg.mxu0
    %v754 = vsel %vm514, %v728, -inf
    %755 = vmax.xlane.f32.xlu0 %v754
    %v756 = vpop.xlane.xlu0 %755
    %v757 = vsel %vm514, %v751, -inf
    %758 = vmax.xlane.f32.xlu0 %v757
    %v759 = vpop.xlane.xlu0 %758
    %v760 = vsub.f32 %v728, %v756
    %v761 = vsub.f32 %v751, %v759
    %v762 = vmul.f32 %v760, 1.442695
    %v763 = vpow.pop %v762
    %v764 = vmul.f32 %v761, 1.442695
    %v765 = vpow.pop %v764
    %v766 = vsel %vm514, %v763, 0.0
    %767 = vadd.xlane.f32.xlu0 %v766
    %v768 = vpop.xlane.xlu0 %767
    %v769 = vsel %vm514, %v765, 0.0
    %770 = vadd.xlane.f32.xlu0 %v769
    %v771 = vpop.xlane.xlu0 %770
    %v772 = vrcp.pop %v768
    %v773 = vrcp.pop %v771
    %v774 = vpack.c.bf16 %v763, %v763
    %v775 = vpack.c.bf16 %v765, %v765
    %776 = vrot.lane.b32.xlu0 %v660, 64
    %v777 = vpop.permute.xlu0 %776
    %v779 = vsel %vm514, %v774, 0
    %v782 = vsel %vm540, %v777, 0
    %784 = vmatpush.bf16.msra.mxu0 0
    %785 = vmatpush.bf16.msra.mxu0 0
    %786 = vmatpush.bf16.msra.mxu0 0
    %787 = vmatpush.bf16.msra.mxu0 0
    %788 = vmatpush.bf16.msra.mxu0 0
    %789 = vmatpush.bf16.msra.mxu0 0
    %790 = vmatpush.bf16.msra.mxu0 0
    %791 = vmatpush.bf16.msra.mxu0 %v782
    %792 = vmatmul.bf16.gmra.mxu0 %v779
    %v793 = vpop.f32.mrf.mxu0
    %v794 = vadd.f32 0.0, %v793
    %v795 = vpop.f32.mrf.mxu0
    %796 = vdwg.mxu0
    %797 = vrot.lane.b32.xlu0 %v684, 64
    %v798 = vpop.permute.xlu0 %797
    %v800 = vsel %vm514, %v775, 0
    %v803 = vsel %vm540, %v798, 0
    %805 = vmatpush.bf16.msra.mxu0 0
    %806 = vmatpush.bf16.msra.mxu0 0
    %807 = vmatpush.bf16.msra.mxu0 0
    %808 = vmatpush.bf16.msra.mxu0 0
    %809 = vmatpush.bf16.msra.mxu0 0
    %810 = vmatpush.bf16.msra.mxu0 0
    %811 = vmatpush.bf16.msra.mxu0 0
    %812 = vmatpush.bf16.msra.mxu0 %v803
    %813 = vmatmul.bf16.gmra.mxu0 %v800
    %v814 = vpop.f32.mrf.mxu0
    %v815 = vadd.f32 0.0, %v814
    %v816 = vpop.f32.mrf.mxu0
    %817 = vdwg.mxu0
    %v818 = vmul.f32 %v794, %v772
    %v819 = vmul.f32 %v815, %v773
    %820 = vrot.lane.b32.xlu0 %v580, 32
    %v821 = vpop.permute.xlu0 %820
    %822 = vrot.lane.b32.xlu0 %v585, 32
    %v823 = vpop.permute.xlu0 %822
    %v825 = vsel %vm475, %v821, 0
    %v828 = vsel %vm475, %v823, 0
    %830 = vmatpush.bf16.xpose.msra.mxu0 0
    %831 = vmatpush.bf16.xpose.msra.mxu0 0
    %832 = vmatpush.bf16.xpose.msra.mxu0 0
    %833 = vmatpush.bf16.xpose.msra.mxu0 0
    %834 = vmatpush.bf16.xpose.msra.mxu0 0
    %835 = vmatpush.bf16.xpose.msra.mxu0 0
    %836 = vmatpush.bf16.xpose.msra.mxu0 0
    %837 = vmatpush.bf16.xpose.msra.mxu0 %v828
    %838 = vmatmul.bf16.gmra.mxu0 %v825
    %v839 = vpop.f32.mrf.mxu0
    %v840 = vadd.f32 %v471, %v839
    %v841 = vpop.f32.mrf.mxu0
    %842 = vdwg.mxu0
    %843 = vrot.lane.b32.xlu0 %v609, 32
    %v844 = vpop.permute.xlu0 %843
    %845 = vrot.lane.b32.xlu0 %v614, 32
    %v846 = vpop.permute.xlu0 %845
    %v848 = vsel %vm475, %v844, 0
    %v851 = vsel %vm475, %v846, 0
    %853 = vmatpush.bf16.xpose.msra.mxu0 0
    %854 = vmatpush.bf16.xpose.msra.mxu0 0
    %855 = vmatpush.bf16.xpose.msra.mxu0 0
    %856 = vmatpush.bf16.xpose.msra.mxu0 0
    %857 = vmatpush.bf16.xpose.msra.mxu0 0
    %858 = vmatpush.bf16.xpose.msra.mxu0 0
    %859 = vmatpush.bf16.xpose.msra.mxu0 0
    %860 = vmatpush.bf16.xpose.msra.mxu0 %v851
    %861 = vmatmul.bf16.gmra.mxu0 %v848
    %v862 = vpop.f32.mrf.mxu0
    %v863 = vadd.f32 %v472, %v862
    %v864 = vpop.f32.mrf.mxu0
    %865 = vdwg.mxu0
    %v866 = vsel %vm514, %v840, -inf
    %867 = vmax.xlane.f32.xlu0 %v866
    %v868 = vpop.xlane.xlu0 %867
    %v869 = vsel %vm514, %v863, -inf
    %870 = vmax.xlane.f32.xlu0 %v869
    %v871 = vpop.xlane.xlu0 %870
    %v872 = vsub.f32 %v840, %v868
    %v873 = vsub.f32 %v863, %v871
    %v874 = vmul.f32 %v872, 1.442695
    %v875 = vpow.pop %v874
    %v876 = vmul.f32 %v873, 1.442695
    %v877 = vpow.pop %v876
    %v878 = vsel %vm514, %v875, 0.0
    %879 = vadd.xlane.f32.xlu0 %v878
    %v880 = vpop.xlane.xlu0 %879
    %v881 = vsel %vm514, %v877, 0.0
    %882 = vadd.xlane.f32.xlu0 %v881
    %v883 = vpop.xlane.xlu0 %882
    %v884 = vrcp.pop %v880
    %v885 = vrcp.pop %v883
    %v886 = vpack.c.bf16 %v875, %v875
    %v887 = vpack.c.bf16 %v877, %v877
    %888 = vrot.lane.b32.xlu0 %v660, 32
    %v889 = vpop.permute.xlu0 %888
    %v891 = vsel %vm514, %v886, 0
    %v894 = vsel %vm540, %v889, 0
    %896 = vmatpush.bf16.msra.mxu0 0
    %897 = vmatpush.bf16.msra.mxu0 0
    %898 = vmatpush.bf16.msra.mxu0 0
    %899 = vmatpush.bf16.msra.mxu0 0
    %900 = vmatpush.bf16.msra.mxu0 0
    %901 = vmatpush.bf16.msra.mxu0 0
    %902 = vmatpush.bf16.msra.mxu0 0
    %903 = vmatpush.bf16.msra.mxu0 %v894
    %904 = vmatmul.bf16.gmra.mxu0 %v891
    %v905 = vpop.f32.mrf.mxu0
    %v906 = vadd.f32 0.0, %v905
    %v907 = vpop.f32.mrf.mxu0
    %908 = vdwg.mxu0
    %909 = vrot.lane.b32.xlu0 %v684, 32
    %v910 = vpop.permute.xlu0 %909
    %v912 = vsel %vm514, %v887, 0
    %v915 = vsel %vm540, %v910, 0
    %917 = vmatpush.bf16.msra.mxu0 0
    %918 = vmatpush.bf16.msra.mxu0 0
    %919 = vmatpush.bf16.msra.mxu0 0
    %920 = vmatpush.bf16.msra.mxu0 0
    %921 = vmatpush.bf16.msra.mxu0 0
    %922 = vmatpush.bf16.msra.mxu0 0
    %923 = vmatpush.bf16.msra.mxu0 0
    %924 = vmatpush.bf16.msra.mxu0 %v915
    %925 = vmatmul.bf16.gmra.mxu0 %v912
    %v926 = vpop.f32.mrf.mxu0
    %v927 = vadd.f32 0.0, %v926
    %v928 = vpop.f32.mrf.mxu0
    %929 = vdwg.mxu0
    %v930 = vmul.f32 %v906, %v884
    %v931 = vmul.f32 %v927, %v885
    %934 = vrot.lane.b32.xlu0 %v706, 32
    %v935 = vpop.permute.xlu0 %934
    %936 = vrot.lane.b32.xlu0 %v707, 32
    %v937 = vpop.permute.xlu0 %936
    %942 = vrot.lane.b32.xlu0 %v818, 64
    %v943 = vpop.permute.xlu0 %942
    %944 = vrot.lane.b32.xlu0 %v819, 64
    %v945 = vpop.permute.xlu0 %944
    %950 = vrot.lane.b32.xlu0 %v930, 96
    %v951 = vpop.permute.xlu0 %950
    %952 = vrot.lane.b32.xlu0 %v931, 96
    %v953 = vpop.permute.xlu0 %952
    %v956 = vsel %vm475, %v576, %v935
    %v957 = vsel %vm475, %v577, %v937
    %vm958 = vcmask 523264
    %v959 = vsel %vm958, %v956, %v943
    %v960 = vsel %vm958, %v957, %v945
    %vm961 = vcmask 785408
    %v962 = vsel %vm961, %v959, %v951
    %v963 = vsel %vm961, %v960, %v953
    %v964 = vpack.c.bf16 %v963, %v962
    %v965 = vld [vmem:[#allocation7] sm:$0xf]
    %v966 = vld [vmem:[#allocation7 + $0x10] sm:$0xf]
    %v967 = vld [vmem:[#allocation7 + $0x20] sm:$0xf]
    %v968 = vld [vmem:[#allocation7 + $0x30] sm:$0xf]
    %v969 = vld [vmem:[#allocation7 + $0x40] sm:$0xf]
    %v970 = vld [vmem:[#allocation7 + $0x50] sm:$0xf]
    %v971 = vld [vmem:[#allocation7 + $0x60] sm:$0xf]
    %v972 = vld [vmem:[#allocation7 + $0x70] sm:$0xf]
    %v973 = vld [vmem:[#allocation7 + $0x80] sm:$0xf]
    %v974 = vld [vmem:[#allocation7 + $0x90] sm:$0xf]
    %v975 = vld [vmem:[#allocation7 + $0xa0] sm:$0xf]
    %v976 = vld [vmem:[#allocation7 + $0xb0] sm:$0xf]
    %v977 = vld [vmem:[#allocation7 + $0xc0] sm:$0xf]
    %v978 = vld [vmem:[#allocation7 + $0xd0] sm:$0xf]
    %v979 = vld [vmem:[#allocation7 + $0xe0] sm:$0xf]
    %v980 = vld [vmem:[#allocation7 + $0xf0] sm:$0xf]
    %v997 = vunpack.c.l.b16 %v965
    %v998 = vunpack.c.l.b16 %v966
    %v999 = vunpack.c.l.b16 %v967
    %v1000 = vunpack.c.l.b16 %v968
    %v1001 = vunpack.c.l.b16 %v969
    %v1002 = vunpack.c.l.b16 %v970
    %v1003 = vunpack.c.l.b16 %v971
    %v1004 = vunpack.c.l.b16 %v972
    %v1005 = vunpack.c.l.b16 %v973
    %v1006 = vunpack.c.l.b16 %v974
    %v1007 = vunpack.c.l.b16 %v975
    %v1008 = vunpack.c.l.b16 %v976
    %v1009 = vunpack.c.l.b16 %v977
    %v1010 = vunpack.c.l.b16 %v978
    %v1011 = vunpack.c.l.b16 %v979
    %v1012 = vunpack.c.l.b16 %v980
    %v1013 = vpack.c.b16 %v998, %v997
    %v1014 = vpack.c.b16 %v1000, %v999
    %v1015 = vpack.c.b16 %v1002, %v1001
    %v1016 = vpack.c.b16 %v1004, %v1003
    %v1017 = vpack.c.b16 %v1006, %v1005
    %v1018 = vpack.c.b16 %v1008, %v1007
    %v1019 = vpack.c.b16 %v1010, %v1009
    %v1020 = vpack.c.b16 %v1012, %v1011
    %1029 = vmatpush.bf16.msra.mxu0 %v1020
    %1030 = vmatpush.bf16.msra.mxu0 %v1019
    %1031 = vmatpush.bf16.msra.mxu0 %v1018
    %1032 = vmatpush.bf16.msra.mxu0 %v1017
    %1033 = vmatpush.bf16.msra.mxu0 %v1016
    %1034 = vmatpush.bf16.msra.mxu0 %v1015
    %1035 = vmatpush.bf16.msra.mxu0 %v1014
    %1036 = vmatpush.bf16.msra.mxu0 %v1013
    %1037 = vmatmul.bf16.gmra.mxu0 %v964
    %v1038 = vpop.f32.mrf.mxu0
    %v1039 = vadd.f32 0.0, %v1038
    %v1040 = vpop.f32.mrf.mxu0
    %v1041 = vadd.f32 0.0, %v1040
    %1042 = vdwg.mxu0
    %v1043 = vadd.f32 %v215, %v1039
    %v1044 = vadd.f32 %v217, %v1041
    %v1045 = vmul.f32 %v1043, %v1043
    %v1046 = vmul.f32 %v1044, %v1044
    %1047 = vadd.xlane.f32.xlu0 %v1045
    %v1048 = vpop.xlane.xlu0 %1047
    %1049 = vadd.xlane.f32.xlu0 %v1046
    %v1050 = vpop.xlane.xlu0 %1049
    %v1051 = vmul.f32 %v1048, %v231
    %v1052 = vmul.f32 %v1050, %v231
    %v1053 = vadd.f32 %v1051, 1e-06
    %v1054 = vadd.f32 %v1052, 1e-06
    %v1055 = vrsqrt.pop %v1053
    %v1056 = vmul.f32 %v1055, %v1053
    %v1057 = vmul.f32 %v1056, %v1055
    %v1058 = vmul.f32 0.5, %v1057
    %v1059 = vsub.f32 1.5, %v1058
    %v1060 = vmul.f32 %v1055, %v1059
    %vm1061 = vweird.f32 %v1053
    %vm1062 = vweird.f32 %v1055
    %vm1063 = vmor %vm1061, %vm1062
    %v1064 = vsel %vm1063, %v1055, %v1060
    %v1065 = vrsqrt.pop %v1054
    %v1066 = vmul.f32 %v1065, %v1054
    %v1067 = vmul.f32 %v1066, %v1065
    %v1068 = vmul.f32 0.5, %v1067
    %v1069 = vsub.f32 1.5, %v1068
    %v1070 = vmul.f32 %v1065, %v1069
    %vm1071 = vweird.f32 %v1054
    %vm1072 = vweird.f32 %v1065
    %vm1073 = vmor %vm1071, %vm1072
    %v1074 = vsel %vm1073, %v1065, %v1070
    %v1075 = vmul.f32 %v1043, %v1064
    %v1076 = vmul.f32 %v1044, %v1074
    %v1077 = vld [vmem:[%s5 + $0x1] sm:$0x1]
    %v1078 = vperm.slane %v1077, 0
    %v1079 = vmul.f32 %v1075, %v1078
    %v1080 = vmul.f32 %v1076, %v1078
    %v1081 = vpack.c.bf16 %v1080, %v1079
    %v1082 = vld [vmem:[#allocation8] sm:$0xff]
    %v1083 = vld [vmem:[#allocation8 + $0x8] sm:$0xff]
    %v1084 = vld [vmem:[#allocation8 + $0x20] sm:$0xff]
    %v1085 = vld [vmem:[#allocation8 + $0x28] sm:$0xff]
    %v1086 = vld [vmem:[#allocation8 + $0x40] sm:$0xff]
    %v1087 = vld [vmem:[#allocation8 + $0x48] sm:$0xff]
    %v1088 = vld [vmem:[#allocation8 + $0x60] sm:$0xff]
    %v1089 = vld [vmem:[#allocation8 + $0x68] sm:$0xff]
    %v1090 = vld [vmem:[#allocation8 + $0x80] sm:$0xff]
    %v1091 = vld [vmem:[#allocation8 + $0x88] sm:$0xff]
    %v1092 = vld [vmem:[#allocation8 + $0xa0] sm:$0xff]
    %v1093 = vld [vmem:[#allocation8 + $0xa8] sm:$0xff]
    %v1094 = vld [vmem:[#allocation8 + $0xc0] sm:$0xff]
    %v1095 = vld [vmem:[#allocation8 + $0xc8] sm:$0xff]
    %v1096 = vld [vmem:[#allocation8 + $0xe0] sm:$0xff]
    %v1097 = vld [vmem:[#allocation8 + $0xe8] sm:$0xff]
    %v1098 = vld [vmem:[#allocation8 + $0x100] sm:$0xff]
    %v1099 = vld [vmem:[#allocation8 + $0x108] sm:$0xff]
    %v1100 = vld [vmem:[#allocation8 + $0x120] sm:$0xff]
    %v1101 = vld [vmem:[#allocation8 + $0x128] sm:$0xff]
    %v1102 = vld [vmem:[#allocation8 + $0x140] sm:$0xff]
    %v1103 = vld [vmem:[#allocation8 + $0x148] sm:$0xff]
    %v1104 = vld [vmem:[#allocation8 + $0x160] sm:$0xff]
    %v1105 = vld [vmem:[#allocation8 + $0x168] sm:$0xff]
    %v1106 = vld [vmem:[#allocation8 + $0x180] sm:$0xff]
    %v1107 = vld [vmem:[#allocation8 + $0x188] sm:$0xff]
    %v1108 = vld [vmem:[#allocation8 + $0x1a0] sm:$0xff]
    %v1109 = vld [vmem:[#allocation8 + $0x1a8] sm:$0xff]
    %v1110 = vld [vmem:[#allocation8 + $0x1c0] sm:$0xff]
    %v1111 = vld [vmem:[#allocation8 + $0x1c8] sm:$0xff]
    %v1112 = vld [vmem:[#allocation8 + $0x1e0] sm:$0xff]
    %v1113 = vld [vmem:[#allocation8 + $0x1e8] sm:$0xff]
    %v1146 = vunpack.c.l.b16 %v1082
    %v1147 = vunpack.c.h.b16 %v1082
    %v1148 = vunpack.c.l.b16 %v1083
    %v1149 = vunpack.c.h.b16 %v1083
    %v1150 = vunpack.c.l.b16 %v1084
    %v1151 = vunpack.c.h.b16 %v1084
    %v1152 = vunpack.c.l.b16 %v1085
    %v1153 = vunpack.c.h.b16 %v1085
    %v1154 = vunpack.c.l.b16 %v1086
    %v1155 = vunpack.c.h.b16 %v1086
    %v1156 = vunpack.c.l.b16 %v1087
    %v1157 = vunpack.c.h.b16 %v1087
    %v1158 = vunpack.c.l.b16 %v1088
    %v1159 = vunpack.c.h.b16 %v1088
    %v1160 = vunpack.c.l.b16 %v1089
    %v1161 = vunpack.c.h.b16 %v1089
    %v1162 = vunpack.c.l.b16 %v1090
    %v1163 = vunpack.c.h.b16 %v1090
    %v1164 = vunpack.c.l.b16 %v1091
    %v1165 = vunpack.c.h.b16 %v1091
    %v1166 = vunpack.c.l.b16 %v1092
    %v1167 = vunpack.c.h.b16 %v1092
    %v1168 = vunpack.c.l.b16 %v1093
    %v1169 = vunpack.c.h.b16 %v1093
    %v1170 = vunpack.c.l.b16 %v1094
    %v1171 = vunpack.c.h.b16 %v1094
    %v1172 = vunpack.c.l.b16 %v1095
    %v1173 = vunpack.c.h.b16 %v1095
    %v1174 = vunpack.c.l.b16 %v1096
    %v1175 = vunpack.c.h.b16 %v1096
    %v1176 = vunpack.c.l.b16 %v1097
    %v1177 = vunpack.c.h.b16 %v1097
    %v1178 = vunpack.c.l.b16 %v1098
    %v1179 = vunpack.c.h.b16 %v1098
    %v1180 = vunpack.c.l.b16 %v1099
    %v1181 = vunpack.c.h.b16 %v1099
    %v1182 = vunpack.c.l.b16 %v1100
    %v1183 = vunpack.c.h.b16 %v1100
    %v1184 = vunpack.c.l.b16 %v1101
    %v1185 = vunpack.c.h.b16 %v1101
    %v1186 = vunpack.c.l.b16 %v1102
    %v1187 = vunpack.c.h.b16 %v1102
    %v1188 = vunpack.c.l.b16 %v1103
    %v1189 = vunpack.c.h.b16 %v1103
    %v1190 = vunpack.c.l.b16 %v1104
    %v1191 = vunpack.c.h.b16 %v1104
    %v1192 = vunpack.c.l.b16 %v1105
    %v1193 = vunpack.c.h.b16 %v1105
    %v1194 = vunpack.c.l.b16 %v1106
    %v1195 = vunpack.c.h.b16 %v1106
    %v1196 = vunpack.c.l.b16 %v1107
    %v1197 = vunpack.c.h.b16 %v1107
    %v1198 = vunpack.c.l.b16 %v1108
    %v1199 = vunpack.c.h.b16 %v1108
    %v1200 = vunpack.c.l.b16 %v1109
    %v1201 = vunpack.c.h.b16 %v1109
    %v1202 = vunpack.c.l.b16 %v1110
    %v1203 = vunpack.c.h.b16 %v1110
    %v1204 = vunpack.c.l.b16 %v1111
    %v1205 = vunpack.c.h.b16 %v1111
    %v1206 = vunpack.c.l.b16 %v1112
    %v1207 = vunpack.c.h.b16 %v1112
    %v1208 = vunpack.c.l.b16 %v1113
    %v1209 = vunpack.c.h.b16 %v1113
    %v1210 = vpack.c.b16 %v1150, %v1146
    %v1211 = vpack.c.b16 %v1151, %v1147
    %v1212 = vpack.c.b16 %v1152, %v1148
    %v1213 = vpack.c.b16 %v1153, %v1149
    %v1214 = vpack.c.b16 %v1158, %v1154
    %v1215 = vpack.c.b16 %v1159, %v1155
    %v1216 = vpack.c.b16 %v1160, %v1156
    %v1217 = vpack.c.b16 %v1161, %v1157
    %v1218 = vpack.c.b16 %v1166, %v1162
    %v1219 = vpack.c.b16 %v1167, %v1163
    %v1220 = vpack.c.b16 %v1168, %v1164
    %v1221 = vpack.c.b16 %v1169, %v1165
    %v1222 = vpack.c.b16 %v1174, %v1170
    %v1223 = vpack.c.b16 %v1175, %v1171
    %v1224 = vpack.c.b16 %v1176, %v1172
    %v1225 = vpack.c.b16 %v1177, %v1173
    %v1226 = vpack.c.b16 %v1182, %v1178
    %v1227 = vpack.c.b16 %v1183, %v1179
    %v1228 = vpack.c.b16 %v1184, %v1180
    %v1229 = vpack.c.b16 %v1185, %v1181
    %v1230 = vpack.c.b16 %v1190, %v1186
    %v1231 = vpack.c.b16 %v1191, %v1187
    %v1232 = vpack.c.b16 %v1192, %v1188
    %v1233 = vpack.c.b16 %v1193, %v1189
    %v1234 = vpack.c.b16 %v1198, %v1194
    %v1235 = vpack.c.b16 %v1199, %v1195
    %v1236 = vpack.c.b16 %v1200, %v1196
    %v1237 = vpack.c.b16 %v1201, %v1197
    %v1238 = vpack.c.b16 %v1206, %v1202
    %v1239 = vpack.c.b16 %v1207, %v1203
    %v1240 = vpack.c.b16 %v1208, %v1204
    %v1241 = vpack.c.b16 %v1209, %v1205
    %1274 = vmatpush.bf16.msra.mxu0 %v1238
    %1275 = vmatpush.bf16.msra.mxu0 %v1234
    %1276 = vmatpush.bf16.msra.mxu0 %v1230
    %1277 = vmatpush.bf16.msra.mxu0 %v1226
    %1278 = vmatpush.bf16.msra.mxu0 %v1222
    %1279 = vmatpush.bf16.msra.mxu0 %v1218
    %1280 = vmatpush.bf16.msra.mxu0 %v1214
    %1281 = vmatpush.bf16.msra.mxu0 %v1210
    %1282 = vmatmul.bf16.gmra.mxu0 %v1081
    %v1283 = vpop.f32.mrf.mxu0
    %v1284 = vadd.f32 0.0, %v1283
    %v1285 = vpop.f32.mrf.mxu0
    %v1286 = vadd.f32 0.0, %v1285
    %1287 = vdwg.mxu0
    %1288 = vmatpush.bf16.msra.mxu0 %v1239
    %1289 = vmatpush.bf16.msra.mxu0 %v1235
    %1290 = vmatpush.bf16.msra.mxu0 %v1231
    %1291 = vmatpush.bf16.msra.mxu0 %v1227
    %1292 = vmatpush.bf16.msra.mxu0 %v1223
    %1293 = vmatpush.bf16.msra.mxu0 %v1219
    %1294 = vmatpush.bf16.msra.mxu0 %v1215
    %1295 = vmatpush.bf16.msra.mxu0 %v1211
    %1296 = vmatmul.bf16.gmra.mxu0 %v1081
    %v1297 = vpop.f32.mrf.mxu0
    %v1298 = vadd.f32 0.0, %v1297
    %v1299 = vpop.f32.mrf.mxu0
    %v1300 = vadd.f32 0.0, %v1299
    %1301 = vdwg.mxu0
    %1302 = vmatpush.bf16.msra.mxu0 %v1240
    %1303 = vmatpush.bf16.msra.mxu0 %v1236
    %1304 = vmatpush.bf16.msra.mxu0 %v1232
    %1305 = vmatpush.bf16.msra.mxu0 %v1228
    %1306 = vmatpush.bf16.msra.mxu0 %v1224
    %1307 = vmatpush.bf16.msra.mxu0 %v1220
    %1308 = vmatpush.bf16.msra.mxu0 %v1216
    %1309 = vmatpush.bf16.msra.mxu0 %v1212
    %1310 = vmatmul.bf16.gmra.mxu0 %v1081
    %v1311 = vpop.f32.mrf.mxu0
    %v1312 = vadd.f32 0.0, %v1311
    %v1313 = vpop.f32.mrf.mxu0
    %v1314 = vadd.f32 0.0, %v1313
    %1315 = vdwg.mxu0
    %1316 = vmatpush.bf16.msra.mxu0 %v1241
    %1317 = vmatpush.bf16.msra.mxu0 %v1237
    %1318 = vmatpush.bf16.msra.mxu0 %v1233
    %1319 = vmatpush.bf16.msra.mxu0 %v1229
    %1320 = vmatpush.bf16.msra.mxu0 %v1225
    %1321 = vmatpush.bf16.msra.mxu0 %v1221
    %1322 = vmatpush.bf16.msra.mxu0 %v1217
    %1323 = vmatpush.bf16.msra.mxu0 %v1213
    %1324 = vmatmul.bf16.gmra.mxu0 %v1081
    %v1325 = vpop.f32.mrf.mxu0
    %v1326 = vadd.f32 0.0, %v1325
    %v1327 = vpop.f32.mrf.mxu0
    %v1328 = vadd.f32 0.0, %v1327
    %1329 = vdwg.mxu0
    %v1330 = vmul.f32 %v1284, %v1284
    %v1331 = vmul.f32 %v1298, %v1298
    %v1332 = vmul.f32 %v1286, %v1286
    %v1333 = vmul.f32 %v1300, %v1300
    %v1334 = vmul.f32 %v1284, %v1330
    %v1335 = vmul.f32 %v1298, %v1331
    %v1336 = vmul.f32 %v1286, %v1332
    %v1337 = vmul.f32 %v1300, %v1333
    %v1338 = vmul.f32 %v1334, 0.044715
    %v1339 = vmul.f32 %v1335, 0.044715
    %v1340 = vmul.f32 %v1336, 0.044715
    %v1341 = vmul.f32 %v1337, 0.044715
    %v1342 = vadd.f32 %v1284, %v1338
    %v1343 = vadd.f32 %v1298, %v1339
    %v1344 = vadd.f32 %v1286, %v1340
    %v1345 = vadd.f32 %v1300, %v1341
    %v1346 = vmul.f32 %v1342, 0.7978846
    %v1347 = vmul.f32 %v1343, 0.7978846
    %v1348 = vmul.f32 %v1344, 0.7978846
    %v1349 = vmul.f32 %v1345, 0.7978846
    %v1350 = vtanh.pop %v1346
    %v1351 = vtanh.pop %v1347
    %v1352 = vtanh.pop %v1348
    %v1353 = vtanh.pop %v1349
    %v1354 = vadd.f32 %v1350, 1.0
    %v1355 = vadd.f32 %v1351, 1.0
    %v1356 = vadd.f32 %v1352, 1.0
    %v1357 = vadd.f32 %v1353, 1.0
    %v1358 = vmul.f32 %v1354, 0.5
    %v1359 = vmul.f32 %v1355, 0.5
    %v1360 = vmul.f32 %v1356, 0.5
    %v1361 = vmul.f32 %v1357, 0.5
    %v1362 = vmul.f32 %v1284, %v1358
    %v1363 = vmul.f32 %v1298, %v1359
    %v1364 = vmul.f32 %v1286, %v1360
    %v1365 = vmul.f32 %v1300, %v1361
    %v1366 = vmul.f32 %v1362, %v1312
    %v1367 = vmul.f32 %v1363, %v1326
    %v1368 = vmul.f32 %v1364, %v1314
    %v1369 = vmul.f32 %v1365, %v1328
    %v1370 = vpack.c.bf16 %v1368, %v1366
    %v1371 = vpack.c.bf16 %v1369, %v1367
    %v1372 = vld [vmem:[#allocation10] sm:$0xf]
    %v1373 = vld [vmem:[#allocation10 + $0x8] sm:$0xf]
    %v1374 = vld [vmem:[#allocation10 + $0x10] sm:$0xf]
    %v1375 = vld [vmem:[#allocation10 + $0x18] sm:$0xf]
    %v1376 = vld [vmem:[#allocation10 + $0x20] sm:$0xf]
    %v1377 = vld [vmem:[#allocation10 + $0x28] sm:$0xf]
    %v1378 = vld [vmem:[#allocation10 + $0x30] sm:$0xf]
    %v1379 = vld [vmem:[#allocation10 + $0x38] sm:$0xf]
    %v1380 = vld [vmem:[#allocation10 + $0x40] sm:$0xf]
    %v1381 = vld [vmem:[#allocation10 + $0x48] sm:$0xf]
    %v1382 = vld [vmem:[#allocation10 + $0x50] sm:$0xf]
    %v1383 = vld [vmem:[#allocation10 + $0x58] sm:$0xf]
    %v1384 = vld [vmem:[#allocation10 + $0x60] sm:$0xf]
    %v1385 = vld [vmem:[#allocation10 + $0x68] sm:$0xf]
    %v1386 = vld [vmem:[#allocation10 + $0x70] sm:$0xf]
    %v1387 = vld [vmem:[#allocation10 + $0x78] sm:$0xf]
    %v1388 = vld [vmem:[#allocation10 + $0x80] sm:$0xf]
    %v1389 = vld [vmem:[#allocation10 + $0x88] sm:$0xf]
    %v1390 = vld [vmem:[#allocation10 + $0x90] sm:$0xf]
    %v1391 = vld [vmem:[#allocation10 + $0x98] sm:$0xf]
    %v1392 = vld [vmem:[#allocation10 + $0xa0] sm:$0xf]
    %v1393 = vld [vmem:[#allocation10 + $0xa8] sm:$0xf]
    %v1394 = vld [vmem:[#allocation10 + $0xb0] sm:$0xf]
    %v1395 = vld [vmem:[#allocation10 + $0xb8] sm:$0xf]
    %v1396 = vld [vmem:[#allocation10 + $0xc0] sm:$0xf]
    %v1397 = vld [vmem:[#allocation10 + $0xc8] sm:$0xf]
    %v1398 = vld [vmem:[#allocation10 + $0xd0] sm:$0xf]
    %v1399 = vld [vmem:[#allocation10 + $0xd8] sm:$0xf]
    %v1400 = vld [vmem:[#allocation10 + $0xe0] sm:$0xf]
    %v1401 = vld [vmem:[#allocation10 + $0xe8] sm:$0xf]
    %v1402 = vld [vmem:[#allocation10 + $0xf0] sm:$0xf]
    %v1403 = vld [vmem:[#allocation10 + $0xf8] sm:$0xf]
    %v1436 = vunpack.c.l.b16 %v1372
    %v1437 = vunpack.c.l.b16 %v1373
    %v1438 = vunpack.c.l.b16 %v1374
    %v1439 = vunpack.c.l.b16 %v1375
    %v1440 = vunpack.c.l.b16 %v1376
    %v1441 = vunpack.c.l.b16 %v1377
    %v1442 = vunpack.c.l.b16 %v1378
    %v1443 = vunpack.c.l.b16 %v1379
    %v1444 = vunpack.c.l.b16 %v1380
    %v1445 = vunpack.c.l.b16 %v1381
    %v1446 = vunpack.c.l.b16 %v1382
    %v1447 = vunpack.c.l.b16 %v1383
    %v1448 = vunpack.c.l.b16 %v1384
    %v1449 = vunpack.c.l.b16 %v1385
    %v1450 = vunpack.c.l.b16 %v1386
    %v1451 = vunpack.c.l.b16 %v1387
    %v1452 = vunpack.c.l.b16 %v1388
    %v1453 = vunpack.c.l.b16 %v1389
    %v1454 = vunpack.c.l.b16 %v1390
    %v1455 = vunpack.c.l.b16 %v1391
    %v1456 = vunpack.c.l.b16 %v1392
    %v1457 = vunpack.c.l.b16 %v1393
    %v1458 = vunpack.c.l.b16 %v1394
    %v1459 = vunpack.c.l.b16 %v1395
    %v1460 = vunpack.c.l.b16 %v1396
    %v1461 = vunpack.c.l.b16 %v1397
    %v1462 = vunpack.c.l.b16 %v1398
    %v1463 = vunpack.c.l.b16 %v1399
    %v1464 = vunpack.c.l.b16 %v1400
    %v1465 = vunpack.c.l.b16 %v1401
    %v1466 = vunpack.c.l.b16 %v1402
    %v1467 = vunpack.c.l.b16 %v1403
    %v1468 = vpack.c.b16 %v1437, %v1436
    %v1469 = vpack.c.b16 %v1439, %v1438
    %v1470 = vpack.c.b16 %v1441, %v1440
    %v1471 = vpack.c.b16 %v1443, %v1442
    %v1472 = vpack.c.b16 %v1445, %v1444
    %v1473 = vpack.c.b16 %v1447, %v1446
    %v1474 = vpack.c.b16 %v1449, %v1448
    %v1475 = vpack.c.b16 %v1451, %v1450
    %v1476 = vpack.c.b16 %v1453, %v1452
    %v1477 = vpack.c.b16 %v1455, %v1454
    %v1478 = vpack.c.b16 %v1457, %v1456
    %v1479 = vpack.c.b16 %v1459, %v1458
    %v1480 = vpack.c.b16 %v1461, %v1460
    %v1481 = vpack.c.b16 %v1463, %v1462
    %v1482 = vpack.c.b16 %v1465, %v1464
    %v1483 = vpack.c.b16 %v1467, %v1466
    %1500 = vmatpush.bf16.msra.mxu0 %v1475
    %1501 = vmatpush.bf16.msra.mxu0 %v1474
    %1502 = vmatpush.bf16.msra.mxu0 %v1473
    %1503 = vmatpush.bf16.msra.mxu0 %v1472
    %1504 = vmatpush.bf16.msra.mxu0 %v1471
    %1505 = vmatpush.bf16.msra.mxu0 %v1470
    %1506 = vmatpush.bf16.msra.mxu0 %v1469
    %1507 = vmatpush.bf16.msra.mxu0 %v1468
    %1508 = vmatmul.bf16.gmra.mxu0 %v1370
    %v1509 = vpop.f32.mrf.mxu0
    %v1510 = vadd.f32 0.0, %v1509
    %v1511 = vpop.f32.mrf.mxu0
    %v1512 = vadd.f32 0.0, %v1511
    %1513 = vdwg.mxu0
    %1514 = vmatpush.bf16.msra.mxu0 %v1483
    %1515 = vmatpush.bf16.msra.mxu0 %v1482
    %1516 = vmatpush.bf16.msra.mxu0 %v1481
    %1517 = vmatpush.bf16.msra.mxu0 %v1480
    %1518 = vmatpush.bf16.msra.mxu0 %v1479
    %1519 = vmatpush.bf16.msra.mxu0 %v1478
    %1520 = vmatpush.bf16.msra.mxu0 %v1477
    %1521 = vmatpush.bf16.msra.mxu0 %v1476
    %1522 = vmatmul.bf16.gmra.mxu0 %v1371
    %v1523 = vpop.f32.mrf.mxu0
    %v1524 = vadd.f32 %v1510, %v1523
    %v1525 = vpop.f32.mrf.mxu0
    %v1526 = vadd.f32 %v1512, %v1525
    %1527 = vdwg.mxu0
    %v1528 = vadd.f32 %v1043, %v1524
    %v1529 = vadd.f32 %v1044, %v1526
    %v1530 = vmul.f32 %v1528, %v1528
    %v1531 = vmul.f32 %v1529, %v1529
    %1532 = vadd.xlane.f32.xlu0 %v1530
    %v1533 = vpop.xlane.xlu0 %1532
    %1534 = vadd.xlane.f32.xlu0 %v1531
    %v1535 = vpop.xlane.xlu0 %1534
    %v1536 = vmul.f32 %v1533, %v231
    %v1537 = vmul.f32 %v1535, %v231
    %v1538 = vadd.f32 %v1536, 1e-06
    %v1539 = vadd.f32 %v1537, 1e-06
    %v1540 = vrsqrt.pop %v1538
    %v1541 = vmul.f32 %v1540, %v1538
    %v1542 = vmul.f32 %v1541, %v1540
    %v1543 = vmul.f32 0.5, %v1542
    %v1544 = vsub.f32 1.5, %v1543
    %v1545 = vmul.f32 %v1540, %v1544
    %vm1546 = vweird.f32 %v1538
    %vm1547 = vweird.f32 %v1540
    %vm1548 = vmor %vm1546, %vm1547
    %v1549 = vsel %vm1548, %v1540, %v1545
    %v1550 = vrsqrt.pop %v1539
    %v1551 = vmul.f32 %v1550, %v1539
    %v1552 = vmul.f32 %v1551, %v1550
    %v1553 = vmul.f32 0.5, %v1552
    %v1554 = vsub.f32 1.5, %v1553
    %v1555 = vmul.f32 %v1550, %v1554
    %vm1556 = vweird.f32 %v1539
    %vm1557 = vweird.f32 %v1550
    %vm1558 = vmor %vm1556, %vm1557
    %v1559 = vsel %vm1558, %v1550, %v1555
    %v1560 = vmul.f32 %v1528, %v1549
    %v1561 = vmul.f32 %v1529, %v1559
    %v1562 = vld [vmem:[%s5 + $0x2] sm:$0x1]
    %v1563 = vperm.slane %v1562, 0
    %v1564 = vmul.f32 %v1560, %v1563
    %v1565 = vmul.f32 %v1561, %v1563
    %v1566 = vld [vmem:[%s1] sm:$0xff]
    %v1567 = vld [vmem:[%s1 + $0x8] sm:$0xff]
    %1568 = vset.pattern.permute.xlu0 0
    %1569 = vperm.xlu0 %1568, %v1566
    %v1570 = vpop.permute.xlu0 %1569
    %1571 = vset.pattern.permute.xlu0 0
    %1572 = vperm.xlu0 %1571, %v1567
    %v1573 = vpop.permute.xlu0 %1572
    %vm1574 = vcmp.eq.s32.totalorder %v123, %v1570
    %vm1575 = vcmp.eq.s32.totalorder %v123, %v1573
    %v1576 = vsel %vm1574, 1, 0
    %v1577 = vsel %vm1575, 1, 0
    %v1578 = vcvt.s32.f32 %v1576
    %v1579 = vcvt.s32.f32 %v1577
    %v1580 = vpack.c.bf16 %v1579, %v1578
    %v1581 = vld [vmem:[#allocation2] sm:$0xf]
    %v1582 = vld [vmem:[#allocation2 + $0x4] sm:$0xf]
    %v1583 = vld [vmem:[#allocation2 + $0x8] sm:$0xf]
    %v1584 = vld [vmem:[#allocation2 + $0xc] sm:$0xf]
    %v1585 = vld [vmem:[#allocation2 + $0x10] sm:$0xf]
    %v1586 = vld [vmem:[#allocation2 + $0x14] sm:$0xf]
    %v1587 = vld [vmem:[#allocation2 + $0x18] sm:$0xf]
    %v1588 = vld [vmem:[#allocation2 + $0x1c] sm:$0xf]
    %v1589 = vld [vmem:[#allocation2 + $0x20] sm:$0xf]
    %v1590 = vld [vmem:[#allocation2 + $0x24] sm:$0xf]
    %v1591 = vld [vmem:[#allocation2 + $0x28] sm:$0xf]
    %v1592 = vld [vmem:[#allocation2 + $0x2c] sm:$0xf]
    %v1593 = vld [vmem:[#allocation2 + $0x30] sm:$0xf]
    %v1594 = vld [vmem:[#allocation2 + $0x34] sm:$0xf]
    %v1595 = vld [vmem:[#allocation2 + $0x38] sm:$0xf]
    %v1596 = vld [vmem:[#allocation2 + $0x3c] sm:$0xf]
    %v1613 = vunpack.c.l.b16 %v1581
    %v1614 = vunpack.c.l.b16 %v1582
    %v1615 = vunpack.c.l.b16 %v1583
    %v1616 = vunpack.c.l.b16 %v1584
    %v1617 = vunpack.c.l.b16 %v1585
    %v1618 = vunpack.c.l.b16 %v1586
    %v1619 = vunpack.c.l.b16 %v1587
    %v1620 = vunpack.c.l.b16 %v1588
    %v1621 = vunpack.c.l.b16 %v1589
    %v1622 = vunpack.c.l.b16 %v1590
    %v1623 = vunpack.c.l.b16 %v1591
    %v1624 = vunpack.c.l.b16 %v1592
    %v1625 = vunpack.c.l.b16 %v1593
    %v1626 = vunpack.c.l.b16 %v1594
    %v1627 = vunpack.c.l.b16 %v1595
    %v1628 = vunpack.c.l.b16 %v1596
    %v1629 = vpack.c.b16 %v1614, %v1613
    %v1630 = vpack.c.b16 %v1616, %v1615
    %v1631 = vpack.c.b16 %v1618, %v1617
    %v1632 = vpack.c.b16 %v1620, %v1619
    %v1633 = vpack.c.b16 %v1622, %v1621
    %v1634 = vpack.c.b16 %v1624, %v1623
    %v1635 = vpack.c.b16 %v1626, %v1625
    %v1636 = vpack.c.b16 %v1628, %v1627
    %1645 = vmatpush.bf16.msra.mxu0 %v1636
    %1646 = vmatpush.bf16.msra.mxu0 %v1635
    %1647 = vmatpush.bf16.msra.mxu0 %v1634
    %1648 = vmatpush.bf16.msra.mxu0 %v1633
    %1649 = vmatpush.bf16.msra.mxu0 %v1632
    %1650 = vmatpush.bf16.msra.mxu0 %v1631
    %1651 = vmatpush.bf16.msra.mxu0 %v1630
    %1652 = vmatpush.bf16.msra.mxu0 %v1629
    %1653 = vmatmul.bf16.gmra.mxu0 %v1580
    %v1654 = vpop.f32.mrf.mxu0
    %v1655 = vadd.f32 0.0, %v1654
    %v1656 = vpop.f32.mrf.mxu0
    %v1657 = vadd.f32 0.0, %v1656
    %1658 = vdwg.mxu0
    %v1659 = vmul.f32 %v1655, %v1655
    %v1660 = vmul.f32 %v1657, %v1657
    %1661 = vadd.xlane.f32.xlu0 %v1659
    %v1662 = vpop.xlane.xlu0 %1661
    %1663 = vadd.xlane.f32.xlu0 %v1660
    %v1664 = vpop.xlane.xlu0 %1663
    %v1665 = vmul.f32 %v1662, %v231
    %v1666 = vmul.f32 %v1664, %v231
    %v1667 = vadd.f32 %v1665, 1e-06
    %v1668 = vadd.f32 %v1666, 1e-06
    %v1669 = vrsqrt.pop %v1667
    %v1670 = vmul.f32 %v1669, %v1667
    %v1671 = vmul.f32 %v1670, %v1669
    %v1672 = vmul.f32 0.5, %v1671
    %v1673 = vsub.f32 1.5, %v1672
    %v1674 = vmul.f32 %v1669, %v1673
    %vm1675 = vweird.f32 %v1667
    %vm1676 = vweird.f32 %v1669
    %vm1677 = vmor %vm1675, %vm1676
    %v1678 = vsel %vm1677, %v1669, %v1674
    %v1679 = vrsqrt.pop %v1668
    %v1680 = vmul.f32 %v1679, %v1668
    %v1681 = vmul.f32 %v1680, %v1679
    %v1682 = vmul.f32 0.5, %v1681
    %v1683 = vsub.f32 1.5, %v1682
    %v1684 = vmul.f32 %v1679, %v1683
    %vm1685 = vweird.f32 %v1668
    %vm1686 = vweird.f32 %v1679
    %vm1687 = vmor %vm1685, %vm1686
    %v1688 = vsel %vm1687, %v1679, %v1684
    %v1689 = vmul.f32 %v1655, %v1678
    %v1690 = vmul.f32 %v1657, %v1688
    %v1691 = vld [vmem:[%s5 + $0x3] sm:$0x1]
    %v1692 = vperm.slane %v1691, 0
    %v1693 = vmul.f32 %v1689, %v1692
    %v1694 = vmul.f32 %v1690, %v1692
    %v1695 = vpack.c.bf16 %v1694, %v1693
    %v1696 = vld [vmem:[#allocation5 + $0xc] sm:$0xff]
    %v1697 = vld [vmem:[#allocation5 + $0x14] sm:$0xf]
    %v1698 = vld [vmem:[#allocation5 + $0x30] sm:$0xff]
    %v1699 = vld [vmem:[#allocation5 + $0x38] sm:$0xf]
    %v1700 = vld [vmem:[#allocation5 + $0x54] sm:$0xff]
    %v1701 = vld [vmem:[#allocation5 + $0x5c] sm:$0xf]
    %v1702 = vld [vmem:[#allocation5 + $0x78] sm:$0xff]
    %v1703 = vld [vmem:[#allocation5 + $0x80] sm:$0xf]
    %v1704 = vld [vmem:[#allocation5 + $0x9c] sm:$0xff]
    %v1705 = vld [vmem:[#allocation5 + $0xa4] sm:$0xf]
    %v1706 = vld [vmem:[#allocation5 + $0xc0] sm:$0xff]
    %v1707 = vld [vmem:[#allocation5 + $0xc8] sm:$0xf]
    %v1708 = vld [vmem:[#allocation5 + $0xe4] sm:$0xff]
    %v1709 = vld [vmem:[#allocation5 + $0xec] sm:$0xf]
    %v1710 = vld [vmem:[#allocation5 + $0x108] sm:$0xff]
    %v1711 = vld [vmem:[#allocation5 + $0x110] sm:$0xf]
    %v1712 = vld [vmem:[#allocation5 + $0x12c] sm:$0xff]
    %v1713 = vld [vmem:[#allocation5 + $0x134] sm:$0xf]
    %v1714 = vld [vmem:[#allocation5 + $0x150] sm:$0xff]
    %v1715 = vld [vmem:[#allocation5 + $0x158] sm:$0xf]
    %v1716 = vld [vmem:[#allocation5 + $0x174] sm:$0xff]
    %v1717 = vld [vmem:[#allocation5 + $0x17c] sm:$0xf]
    %v1718 = vld [vmem:[#allocation5 + $0x198] sm:$0xff]
    %v1719 = vld [vmem:[#allocation5 + $0x1a0] sm:$0xf]
    %v1720 = vld [vmem:[#allocation5 + $0x1bc] sm:$0xff]
    %v1721 = vld [vmem:[#allocation5 + $0x1c4] sm:$0xf]
    %v1722 = vld [vmem:[#allocation5 + $0x1e0] sm:$0xff]
    %v1723 = vld [vmem:[#allocation5 + $0x1e8] sm:$0xf]
    %v1724 = vld [vmem:[#allocation5 + $0x204] sm:$0xff]
    %v1725 = vld [vmem:[#allocation5 + $0x20c] sm:$0xf]
    %v1726 = vld [vmem:[#allocation5 + $0x228] sm:$0xff]
    %v1727 = vld [vmem:[#allocation5 + $0x230] sm:$0xf]
    %v1760 = vunpack.c.l.b16 %v1696
    %v1761 = vunpack.c.h.b16 %v1696
    %v1762 = vunpack.c.l.b16 %v1697
    %v1763 = vunpack.c.l.b16 %v1698
    %v1764 = vunpack.c.h.b16 %v1698
    %v1765 = vunpack.c.l.b16 %v1699
    %v1766 = vunpack.c.l.b16 %v1700
    %v1767 = vunpack.c.h.b16 %v1700
    %v1768 = vunpack.c.l.b16 %v1701
    %v1769 = vunpack.c.l.b16 %v1702
    %v1770 = vunpack.c.h.b16 %v1702
    %v1771 = vunpack.c.l.b16 %v1703
    %v1772 = vunpack.c.l.b16 %v1704
    %v1773 = vunpack.c.h.b16 %v1704
    %v1774 = vunpack.c.l.b16 %v1705
    %v1775 = vunpack.c.l.b16 %v1706
    %v1776 = vunpack.c.h.b16 %v1706
    %v1777 = vunpack.c.l.b16 %v1707
    %v1778 = vunpack.c.l.b16 %v1708
    %v1779 = vunpack.c.h.b16 %v1708
    %v1780 = vunpack.c.l.b16 %v1709
    %v1781 = vunpack.c.l.b16 %v1710
    %v1782 = vunpack.c.h.b16 %v1710
    %v1783 = vunpack.c.l.b16 %v1711
    %v1784 = vunpack.c.l.b16 %v1712
    %v1785 = vunpack.c.h.b16 %v1712
    %v1786 = vunpack.c.l.b16 %v1713
    %v1787 = vunpack.c.l.b16 %v1714
    %v1788 = vunpack.c.h.b16 %v1714
    %v1789 = vunpack.c.l.b16 %v1715
    %v1790 = vunpack.c.l.b16 %v1716
    %v1791 = vunpack.c.h.b16 %v1716
    %v1792 = vunpack.c.l.b16 %v1717
    %v1793 = vunpack.c.l.b16 %v1718
    %v1794 = vunpack.c.h.b16 %v1718
    %v1795 = vunpack.c.l.b16 %v1719
    %v1796 = vunpack.c.l.b16 %v1720
    %v1797 = vunpack.c.h.b16 %v1720
    %v1798 = vunpack.c.l.b16 %v1721
    %v1799 = vunpack.c.l.b16 %v1722
    %v1800 = vunpack.c.h.b16 %v1722
    %v1801 = vunpack.c.l.b16 %v1723
    %v1802 = vunpack.c.l.b16 %v1724
    %v1803 = vunpack.c.h.b16 %v1724
    %v1804 = vunpack.c.l.b16 %v1725
    %v1805 = vunpack.c.l.b16 %v1726
    %v1806 = vunpack.c.h.b16 %v1726
    %v1807 = vunpack.c.l.b16 %v1727
    %v1808 = vpack.c.b16 %v1763, %v1760
    %v1809 = vpack.c.b16 %v1764, %v1761
    %v1810 = vpack.c.b16 %v1765, %v1762
    %v1811 = vpack.c.b16 %v1769, %v1766
    %v1812 = vpack.c.b16 %v1770, %v1767
    %v1813 = vpack.c.b16 %v1771, %v1768
    %v1814 = vpack.c.b16 %v1775, %v1772
    %v1815 = vpack.c.b16 %v1776, %v1773
    %v1816 = vpack.c.b16 %v1777, %v1774
    %v1817 = vpack.c.b16 %v1781, %v1778
    %v1818 = vpack.c.b16 %v1782, %v1779
    %v1819 = vpack.c.b16 %v1783, %v1780
    %v1820 = vpack.c.b16 %v1787, %v1784
    %v1821 = vpack.c.b16 %v1788, %v1785
    %v1822 = vpack.c.b16 %v1789, %v1786
    %v1823 = vpack.c.b16 %v1793, %v1790
    %v1824 = vpack.c.b16 %v1794, %v1791
    %v1825 = vpack.c.b16 %v1795, %v1792
    %v1826 = vpack.c.b16 %v1799, %v1796
    %v1827 = vpack.c.b16 %v1800, %v1797
    %v1828 = vpack.c.b16 %v1801, %v1798
    %v1829 = vpack.c.b16 %v1805, %v1802
    %v1830 = vpack.c.b16 %v1806, %v1803
    %v1831 = vpack.c.b16 %v1807, %v1804
    %1856 = vmatpush.bf16.msra.mxu0 %v1829
    %1857 = vmatpush.bf16.msra.mxu0 %v1826
    %1858 = vmatpush.bf16.msra.mxu0 %v1823
    %1859 = vmatpush.bf16.msra.mxu0 %v1820
    %1860 = vmatpush.bf16.msra.mxu0 %v1817
    %1861 = vmatpush.bf16.msra.mxu0 %v1814
    %1862 = vmatpush.bf16.msra.mxu0 %v1811
    %1863 = vmatpush.bf16.msra.mxu0 %v1808
    %1864 = vmatmul.bf16.gmra.mxu0 %v1695
    %v1865 = vpop.f32.mrf.mxu0
    %v1866 = vadd.f32 0.0, %v1865
    %v1867 = vpop.f32.mrf.mxu0
    %v1868 = vadd.f32 0.0, %v1867
    %1869 = vdwg.mxu0
    %1870 = vmatpush.bf16.msra.mxu0 %v1830
    %1871 = vmatpush.bf16.msra.mxu0 %v1827
    %1872 = vmatpush.bf16.msra.mxu0 %v1824
    %1873 = vmatpush.bf16.msra.mxu0 %v1821
    %1874 = vmatpush.bf16.msra.mxu0 %v1818
    %1875 = vmatpush.bf16.msra.mxu0 %v1815
    %1876 = vmatpush.bf16.msra.mxu0 %v1812
    %1877 = vmatpush.bf16.msra.mxu0 %v1809
    %1878 = vmatmul.bf16.gmra.mxu0 %v1695
    %v1879 = vpop.f32.mrf.mxu0
    %v1880 = vadd.f32 0.0, %v1879
    %v1881 = vpop.f32.mrf.mxu0
    %v1882 = vadd.f32 0.0, %v1881
    %1883 = vdwg.mxu0
    %1884 = vmatpush.bf16.msra.mxu0 %v1831
    %1885 = vmatpush.bf16.msra.mxu0 %v1828
    %1886 = vmatpush.bf16.msra.mxu0 %v1825
    %1887 = vmatpush.bf16.msra.mxu0 %v1822
    %1888 = vmatpush.bf16.msra.mxu0 %v1819
    %1889 = vmatpush.bf16.msra.mxu0 %v1816
    %1890 = vmatpush.bf16.msra.mxu0 %v1813
    %1891 = vmatpush.bf16.msra.mxu0 %v1810
    %1892 = vmatmul.bf16.gmra.mxu0 %v1695
    %v1893 = vpop.f32.mrf.mxu0
    %v1894 = vadd.f32 0.0, %v1893
    %v1895 = vpop.f32.mrf.mxu0
    %v1896 = vadd.f32 0.0, %v1895
    %1897 = vdwg.mxu0
    %v1898 = vpack.c.bf16 %v1866, %v1866
    %v1899 = vpack.c.bf16 %v1868, %v1868
    %v1900 = vpack.c.bf16 %v1880, %v1880
    %v1901 = vpack.c.bf16 %v1882, %v1882
    %v1902 = vpack.c.bf16 %v1894, %v1894
    %v1903 = vpack.c.bf16 %v1896, %v1896
    %v1905 = vsel %vm475, %v1898, 0
    %v1908 = vsel %vm475, %v1900, 0
    %1910 = vmatpush.bf16.xpose.msra.mxu0 0
    %1911 = vmatpush.bf16.xpose.msra.mxu0 0
    %1912 = vmatpush.bf16.xpose.msra.mxu0 0
    %1913 = vmatpush.bf16.xpose.msra.mxu0 0
    %1914 = vmatpush.bf16.xpose.msra.mxu0 0
    %1915 = vmatpush.bf16.xpose.msra.mxu0 0
    %1916 = vmatpush.bf16.xpose.msra.mxu0 0
    %1917 = vmatpush.bf16.xpose.msra.mxu0 %v1908
    %1918 = vmatmul.bf16.gmra.mxu0 %v1905
    %v1919 = vpop.f32.mrf.mxu0
    %v1920 = vadd.f32 %v125, %v1919
    %v1921 = vpop.f32.mrf.mxu0
    %1922 = vdwg.mxu0
    %v1924 = vsel %vm475, %v1899, 0
    %v1927 = vsel %vm475, %v1901, 0
    %1929 = vmatpush.bf16.xpose.msra.mxu0 0
    %1930 = vmatpush.bf16.xpose.msra.mxu0 0
    %1931 = vmatpush.bf16.xpose.msra.mxu0 0
    %1932 = vmatpush.bf16.xpose.msra.mxu0 0
    %1933 = vmatpush.bf16.xpose.msra.mxu0 0
    %1934 = vmatpush.bf16.xpose.msra.mxu0 0
    %1935 = vmatpush.bf16.xpose.msra.mxu0 0
    %1936 = vmatpush.bf16.xpose.msra.mxu0 %v1927
    %1937 = vmatmul.bf16.gmra.mxu0 %v1924
    %v1938 = vpop.f32.mrf.mxu0
    %v1939 = vadd.f32 %v125, %v1938
    %v1940 = vpop.f32.mrf.mxu0
    %1941 = vdwg.mxu0
    %v1942 = vsel %vm514, %v1920, -inf
    %1943 = vmax.xlane.f32.xlu0 %v1942
    %v1944 = vpop.xlane.xlu0 %1943
    %v1945 = vsel %vm514, %v1939, -inf
    %1946 = vmax.xlane.f32.xlu0 %v1945
    %v1947 = vpop.xlane.xlu0 %1946
    %v1948 = vsub.f32 %v1920, %v1944
    %v1949 = vsub.f32 %v1939, %v1947
    %v1950 = vmul.f32 %v1948, 1.442695
    %v1951 = vpow.pop %v1950
    %v1952 = vmul.f32 %v1949, 1.442695
    %v1953 = vpow.pop %v1952
    %v1954 = vsel %vm514, %v1951, 0.0
    %1955 = vadd.xlane.f32.xlu0 %v1954
    %v1956 = vpop.xlane.xlu0 %1955
    %v1957 = vsel %vm514, %v1953, 0.0
    %1958 = vadd.xlane.f32.xlu0 %v1957
    %v1959 = vpop.xlane.xlu0 %1958
    %v1960 = vrcp.pop %v1956
    %v1961 = vrcp.pop %v1959
    %v1962 = vpack.c.bf16 %v1951, %v1951
    %v1963 = vpack.c.bf16 %v1953, %v1953
    %v1965 = vsel %vm514, %v1962, 0
    %v1968 = vsel %vm540, %v1902, 0
    %1970 = vmatpush.bf16.msra.mxu0 0
    %1971 = vmatpush.bf16.msra.mxu0 0
    %1972 = vmatpush.bf16.msra.mxu0 0
    %1973 = vmatpush.bf16.msra.mxu0 0
    %1974 = vmatpush.bf16.msra.mxu0 0
    %1975 = vmatpush.bf16.msra.mxu0 0
    %1976 = vmatpush.bf16.msra.mxu0 0
    %1977 = vmatpush.bf16.msra.mxu0 %v1968
    %1978 = vmatmul.bf16.gmra.mxu0 %v1965
    %v1979 = vpop.f32.mrf.mxu0
    %v1980 = vadd.f32 0.0, %v1979
    %v1981 = vpop.f32.mrf.mxu0
    %1982 = vdwg.mxu0
    %v1984 = vsel %vm514, %v1963, 0
    %v1987 = vsel %vm540, %v1903, 0
    %1989 = vmatpush.bf16.msra.mxu0 0
    %1990 = vmatpush.bf16.msra.mxu0 0
    %1991 = vmatpush.bf16.msra.mxu0 0
    %1992 = vmatpush.bf16.msra.mxu0 0
    %1993 = vmatpush.bf16.msra.mxu0 0
    %1994 = vmatpush.bf16.msra.mxu0 0
    %1995 = vmatpush.bf16.msra.mxu0 0
    %1996 = vmatpush.bf16.msra.mxu0 %v1987
    %1997 = vmatmul.bf16.gmra.mxu0 %v1984
    %v1998 = vpop.f32.mrf.mxu0
    %v1999 = vadd.f32 0.0, %v1998
    %v2000 = vpop.f32.mrf.mxu0
    %2001 = vdwg.mxu0
    %v2002 = vmul.f32 %v1980, %v1960
    %v2003 = vmul.f32 %v1999, %v1961
    %v2005 = vunpack.c.l.b16 %v1898
    %v2006 = vpack.c.b16 %v2005, %v2005
    %2007 = vrot.lane.b32.xlu0 %v2006, 96
    %v2008 = vpop.permute.xlu0 %2007
    %v2010 = vunpack.c.l.b16 %v1900
    %v2011 = vpack.c.b16 %v2010, %v2010
    %2012 = vrot.lane.b32.xlu0 %v2011, 96
    %v2013 = vpop.permute.xlu0 %2012
    %v2015 = vsel %vm475, %v2008, 0
    %v2018 = vsel %vm475, %v2013, 0
    %2020 = vmatpush.bf16.xpose.msra.mxu0 0
    %2021 = vmatpush.bf16.xpose.msra.mxu0 0
    %2022 = vmatpush.bf16.xpose.msra.mxu0 0
    %2023 = vmatpush.bf16.xpose.msra.mxu0 0
    %2024 = vmatpush.bf16.xpose.msra.mxu0 0
    %2025 = vmatpush.bf16.xpose.msra.mxu0 0
    %2026 = vmatpush.bf16.xpose.msra.mxu0 0
    %2027 = vmatpush.bf16.xpose.msra.mxu0 %v2018
    %2028 = vmatmul.bf16.gmra.mxu0 %v2015
    %v2029 = vpop.f32.mrf.mxu0
    %v2030 = vadd.f32 %v125, %v2029
    %v2031 = vpop.f32.mrf.mxu0
    %2032 = vdwg.mxu0
    %v2034 = vunpack.c.l.b16 %v1899
    %v2035 = vpack.c.b16 %v2034, %v2034
    %2036 = vrot.lane.b32.xlu0 %v2035, 96
    %v2037 = vpop.permute.xlu0 %2036
    %v2039 = vunpack.c.l.b16 %v1901
    %v2040 = vpack.c.b16 %v2039, %v2039
    %2041 = vrot.lane.b32.xlu0 %v2040, 96
    %v2042 = vpop.permute.xlu0 %2041
    %v2044 = vsel %vm475, %v2037, 0
    %v2047 = vsel %vm475, %v2042, 0
    %2049 = vmatpush.bf16.xpose.msra.mxu0 0
    %2050 = vmatpush.bf16.xpose.msra.mxu0 0
    %2051 = vmatpush.bf16.xpose.msra.mxu0 0
    %2052 = vmatpush.bf16.xpose.msra.mxu0 0
    %2053 = vmatpush.bf16.xpose.msra.mxu0 0
    %2054 = vmatpush.bf16.xpose.msra.mxu0 0
    %2055 = vmatpush.bf16.xpose.msra.mxu0 0
    %2056 = vmatpush.bf16.xpose.msra.mxu0 %v2047
    %2057 = vmatmul.bf16.gmra.mxu0 %v2044
    %v2058 = vpop.f32.mrf.mxu0
    %v2059 = vadd.f32 %v125, %v2058
    %v2060 = vpop.f32.mrf.mxu0
    %2061 = vdwg.mxu0
    %v2062 = vsel %vm514, %v2030, -inf
    %2063 = vmax.xlane.f32.xlu0 %v2062
    %v2064 = vpop.xlane.xlu0 %2063
    %v2065 = vsel %vm514, %v2059, -inf
    %2066 = vmax.xlane.f32.xlu0 %v2065
    %v2067 = vpop.xlane.xlu0 %2066
    %v2068 = vsub.f32 %v2030, %v2064
    %v2069 = vsub.f32 %v2059, %v2067
    %v2070 = vmul.f32 %v2068, 1.442695
    %v2071 = vpow.pop %v2070
    %v2072 = vmul.f32 %v2069, 1.442695
    %v2073 = vpow.pop %v2072
    %v2074 = vsel %vm514, %v2071, 0.0
    %2075 = vadd.xlane.f32.xlu0 %v2074
    %v2076 = vpop.xlane.xlu0 %2075
    %v2077 = vsel %vm514, %v2073, 0.0
    %2078 = vadd.xlane.f32.xlu0 %v2077
    %v2079 = vpop.xlane.xlu0 %2078
    %v2080 = vrcp.pop %v2076
    %v2081 = vrcp.pop %v2079
    %v2082 = vpack.c.bf16 %v2071, %v2071
    %v2083 = vpack.c.bf16 %v2073, %v2073
    %v2085 = vunpack.c.l.b16 %v1902
    %v2086 = vpack.c.b16 %v2085, %v2085
    %2087 = vrot.lane.b32.xlu0 %v2086, 96
    %v2088 = vpop.permute.xlu0 %2087
    %v2090 = vsel %vm514, %v2082, 0
    %v2093 = vsel %vm540, %v2088, 0
    %2095 = vmatpush.bf16.msra.mxu0 0
    %2096 = vmatpush.bf16.msra.mxu0 0
    %2097 = vmatpush.bf16.msra.mxu0 0
    %2098 = vmatpush.bf16.msra.mxu0 0
    %2099 = vmatpush.bf16.msra.mxu0 0
    %2100 = vmatpush.bf16.msra.mxu0 0
    %2101 = vmatpush.bf16.msra.mxu0 0
    %2102 = vmatpush.bf16.msra.mxu0 %v2093
    %2103 = vmatmul.bf16.gmra.mxu0 %v2090
    %v2104 = vpop.f32.mrf.mxu0
    %v2105 = vadd.f32 0.0, %v2104
    %v2106 = vpop.f32.mrf.mxu0
    %2107 = vdwg.mxu0
    %v2109 = vunpack.c.l.b16 %v1903
    %v2110 = vpack.c.b16 %v2109, %v2109
    %2111 = vrot.lane.b32.xlu0 %v2110, 96
    %v2112 = vpop.permute.xlu0 %2111
    %v2114 = vsel %vm514, %v2083, 0
    %v2117 = vsel %vm540, %v2112, 0
    %2119 = vmatpush.bf16.msra.mxu0 0
    %2120 = vmatpush.bf16.msra.mxu0 0
    %2121 = vmatpush.bf16.msra.mxu0 0
    %2122 = vmatpush.bf16.msra.mxu0 0
    %2123 = vmatpush.bf16.msra.mxu0 0
    %2124 = vmatpush.bf16.msra.mxu0 0
    %2125 = vmatpush.bf16.msra.mxu0 0
    %2126 = vmatpush.bf16.msra.mxu0 %v2117
    %2127 = vmatmul.bf16.gmra.mxu0 %v2114
    %v2128 = vpop.f32.mrf.mxu0
    %v2129 = vadd.f32 0.0, %v2128
    %v2130 = vpop.f32.mrf.mxu0
    %2131 = vdwg.mxu0
    %v2132 = vmul.f32 %v2105, %v2080
    %v2133 = vmul.f32 %v2129, %v2081
    %2134 = vrot.lane.b32.xlu0 %v2006, 64
    %v2135 = vpop.permute.xlu0 %2134
    %2136 = vrot.lane.b32.xlu0 %v2011, 64
    %v2137 = vpop.permute.xlu0 %2136
    %v2139 = vsel %vm475, %v2135, 0
    %v2142 = vsel %vm475, %v2137, 0
    %2144 = vmatpush.bf16.xpose.msra.mxu0 0
    %2145 = vmatpush.bf16.xpose.msra.mxu0 0
    %2146 = vmatpush.bf16.xpose.msra.mxu0 0
    %2147 = vmatpush.bf16.xpose.msra.mxu0 0
    %2148 = vmatpush.bf16.xpose.msra.mxu0 0
    %2149 = vmatpush.bf16.xpose.msra.mxu0 0
    %2150 = vmatpush.bf16.xpose.msra.mxu0 0
    %2151 = vmatpush.bf16.xpose.msra.mxu0 %v2142
    %2152 = vmatmul.bf16.gmra.mxu0 %v2139
    %v2153 = vpop.f32.mrf.mxu0
    %v2154 = vadd.f32 %v125, %v2153
    %v2155 = vpop.f32.mrf.mxu0
    %2156 = vdwg.mxu0
    %2157 = vrot.lane.b32.xlu0 %v2035, 64
    %v2158 = vpop.permute.xlu0 %2157
    %2159 = vrot.lane.b32.xlu0 %v2040, 64
    %v2160 = vpop.permute.xlu0 %2159
    %v2162 = vsel %vm475, %v2158, 0
    %v2165 = vsel %vm475, %v2160, 0
    %2167 = vmatpush.bf16.xpose.msra.mxu0 0
    %2168 = vmatpush.bf16.xpose.msra.mxu0 0
    %2169 = vmatpush.bf16.xpose.msra.mxu0 0
    %2170 = vmatpush.bf16.xpose.msra.mxu0 0
    %2171 = vmatpush.bf16.xpose.msra.mxu0 0
    %2172 = vmatpush.bf16.xpose.msra.mxu0 0
    %2173 = vmatpush.bf16.xpose.msra.mxu0 0
    %2174 = vmatpush.bf16.xpose.msra.mxu0 %v2165
    %2175 = vmatmul.bf16.gmra.mxu0 %v2162
    %v2176 = vpop.f32.mrf.mxu0
    %v2177 = vadd.f32 %v125, %v2176
    %v2178 = vpop.f32.mrf.mxu0
    %2179 = vdwg.mxu0
    %v2180 = vsel %vm514, %v2154, -inf
    %2181 = vmax.xlane.f32.xlu0 %v2180
    %v2182 = vpop.xlane.xlu0 %2181
    %v2183 = vsel %vm514, %v2177, -inf
    %2184 = vmax.xlane.f32.xlu0 %v2183
    %v2185 = vpop.xlane.xlu0 %2184
    %v2186 = vsub.f32 %v2154, %v2182
    %v2187 = vsub.f32 %v2177, %v2185
    %v2188 = vmul.f32 %v2186, 1.442695
    %v2189 = vpow.pop %v2188
    %v2190 = vmul.f32 %v2187, 1.442695
    %v2191 = vpow.pop %v2190
    %v2192 = vsel %vm514, %v2189, 0.0
    %2193 = vadd.xlane.f32.xlu0 %v2192
    %v2194 = vpop.xlane.xlu0 %2193
    %v2195 = vsel %vm514, %v2191, 0.0
    %2196 = vadd.xlane.f32.xlu0 %v2195
    %v2197 = vpop.xlane.xlu0 %2196
    %v2198 = vrcp.pop %v2194
    %v2199 = vrcp.pop %v2197
    %v2200 = vpack.c.bf16 %v2189, %v2189
    %v2201 = vpack.c.bf16 %v2191, %v2191
    %2202 = vrot.lane.b32.xlu0 %v2086, 64
    %v2203 = vpop.permute.xlu0 %2202
    %v2205 = vsel %vm514, %v2200, 0
    %v2208 = vsel %vm540, %v2203, 0
    %2210 = vmatpush.bf16.msra.mxu0 0
    %2211 = vmatpush.bf16.msra.mxu0 0
    %2212 = vmatpush.bf16.msra.mxu0 0
    %2213 = vmatpush.bf16.msra.mxu0 0
    %2214 = vmatpush.bf16.msra.mxu0 0
    %2215 = vmatpush.bf16.msra.mxu0 0
    %2216 = vmatpush.bf16.msra.mxu0 0
    %2217 = vmatpush.bf16.msra.mxu0 %v2208
    %2218 = vmatmul.bf16.gmra.mxu0 %v2205
    %v2219 = vpop.f32.mrf.mxu0
    %v2220 = vadd.f32 0.0, %v2219
    %v2221 = vpop.f32.mrf.mxu0
    %2222 = vdwg.mxu0
    %2223 = vrot.lane.b32.xlu0 %v2110, 64
    %v2224 = vpop.permute.xlu0 %2223
    %v2226 = vsel %vm514, %v2201, 0
    %v2229 = vsel %vm540, %v2224, 0
    %2231 = vmatpush.bf16.msra.mxu0 0
    %2232 = vmatpush.bf16.msra.mxu0 0
    %2233 = vmatpush.bf16.msra.mxu0 0
    %2234 = vmatpush.bf16.msra.mxu0 0
    %2235 = vmatpush.bf16.msra.mxu0 0
    %2236 = vmatpush.bf16.msra.mxu0 0
    %2237 = vmatpush.bf16.msra.mxu0 0
    %2238 = vmatpush.bf16.msra.mxu0 %v2229
    %2239 = vmatmul.bf16.gmra.mxu0 %v2226
    %v2240 = vpop.f32.mrf.mxu0
    %v2241 = vadd.f32 0.0, %v2240
    %v2242 = vpop.f32.mrf.mxu0
    %2243 = vdwg.mxu0
    %v2244 = vmul.f32 %v2220, %v2198
    %v2245 = vmul.f32 %v2241, %v2199
    %2246 = vrot.lane.b32.xlu0 %v2006, 32
    %v2247 = vpop.permute.xlu0 %2246
    %2248 = vrot.lane.b32.xlu0 %v2011, 32
    %v2249 = vpop.permute.xlu0 %2248
    %v2251 = vsel %vm475, %v2247, 0
    %v2254 = vsel %vm475, %v2249, 0
    %2256 = vmatpush.bf16.xpose.msra.mxu0 0
    %2257 = vmatpush.bf16.xpose.msra.mxu0 0
    %2258 = vmatpush.bf16.xpose.msra.mxu0 0
    %2259 = vmatpush.bf16.xpose.msra.mxu0 0
    %2260 = vmatpush.bf16.xpose.msra.mxu0 0
    %2261 = vmatpush.bf16.xpose.msra.mxu0 0
    %2262 = vmatpush.bf16.xpose.msra.mxu0 0
    %2263 = vmatpush.bf16.xpose.msra.mxu0 %v2254
    %2264 = vmatmul.bf16.gmra.mxu0 %v2251
    %v2265 = vpop.f32.mrf.mxu0
    %v2266 = vadd.f32 %v125, %v2265
    %v2267 = vpop.f32.mrf.mxu0
    %2268 = vdwg.mxu0
    %2269 = vrot.lane.b32.xlu0 %v2035, 32
    %v2270 = vpop.permute.xlu0 %2269
    %2271 = vrot.lane.b32.xlu0 %v2040, 32
    %v2272 = vpop.permute.xlu0 %2271
    %v2274 = vsel %vm475, %v2270, 0
    %v2277 = vsel %vm475, %v2272, 0
    %2279 = vmatpush.bf16.xpose.msra.mxu0 0
    %2280 = vmatpush.bf16.xpose.msra.mxu0 0
    %2281 = vmatpush.bf16.xpose.msra.mxu0 0
    %2282 = vmatpush.bf16.xpose.msra.mxu0 0
    %2283 = vmatpush.bf16.xpose.msra.mxu0 0
    %2284 = vmatpush.bf16.xpose.msra.mxu0 0
    %2285 = vmatpush.bf16.xpose.msra.mxu0 0
    %2286 = vmatpush.bf16.xpose.msra.mxu0 %v2277
    %2287 = vmatmul.bf16.gmra.mxu0 %v2274
    %v2288 = vpop.f32.mrf.mxu0
    %v2289 = vadd.f32 %v125, %v2288
    %v2290 = vpop.f32.mrf.mxu0
    %2291 = vdwg.mxu0
    %v2292 = vsel %vm514, %v2266, -inf
    %2293 = vmax.xlane.f32.xlu0 %v2292
    %v2294 = vpop.xlane.xlu0 %2293
    %v2295 = vsel %vm514, %v2289, -inf
    %2296 = vmax.xlane.f32.xlu0 %v2295
    %v2297 = vpop.xlane.xlu0 %2296
    %v2298 = vsub.f32 %v2266, %v2294
    %v2299 = vsub.f32 %v2289, %v2297
    %v2300 = vmul.f32 %v2298, 1.442695
    %v2301 = vpow.pop %v2300
    %v2302 = vmul.f32 %v2299, 1.442695
    %v2303 = vpow.pop %v2302
    %v2304 = vsel %vm514, %v2301, 0.0
    %2305 = vadd.xlane.f32.xlu0 %v2304
    %v2306 = vpop.xlane.xlu0 %2305
    %v2307 = vsel %vm514, %v2303, 0.0
    %2308 = vadd.xlane.f32.xlu0 %v2307
    %v2309 = vpop.xlane.xlu0 %2308
    %v2310 = vrcp.pop %v2306
    %v2311 = vrcp.pop %v2309
    %v2312 = vpack.c.bf16 %v2301, %v2301
    %v2313 = vpack.c.bf16 %v2303, %v2303
    %2314 = vrot.lane.b32.xlu0 %v2086, 32
    %v2315 = vpop.permute.xlu0 %2314
    %v2317 = vsel %vm514, %v2312, 0
    %v2320 = vsel %vm540, %v2315, 0
    %2322 = vmatpush.bf16.msra.mxu0 0
    %2323 = vmatpush.bf16.msra.mxu0 0
    %2324 = vmatpush.bf16.msra.mxu0 0
    %2325 = vmatpush.bf16.msra.mxu0 0
    %2326 = vmatpush.bf16.msra.mxu0 0
    %2327 = vmatpush.bf16.msra.mxu0 0
    %2328 = vmatpush.bf16.msra.mxu0 0
    %2329 = vmatpush.bf16.msra.mxu0 %v2320
    %2330 = vmatmul.bf16.gmra.mxu0 %v2317
    %v2331 = vpop.f32.mrf.mxu0
    %v2332 = vadd.f32 0.0, %v2331
    %v2333 = vpop.f32.mrf.mxu0
    %2334 = vdwg.mxu0
    %2335 = vrot.lane.b32.xlu0 %v2110, 32
    %v2336 = vpop.permute.xlu0 %2335
    %v2338 = vsel %vm514, %v2313, 0
    %v2341 = vsel %vm540, %v2336, 0
    %2343 = vmatpush.bf16.msra.mxu0 0
    %2344 = vmatpush.bf16.msra.mxu0 0
    %2345 = vmatpush.bf16.msra.mxu0 0
    %2346 = vmatpush.bf16.msra.mxu0 0
    %2347 = vmatpush.bf16.msra.mxu0 0
    %2348 = vmatpush.bf16.msra.mxu0 0
    %2349 = vmatpush.bf16.msra.mxu0 0
    %2350 = vmatpush.bf16.msra.mxu0 %v2341
    %2351 = vmatmul.bf16.gmra.mxu0 %v2338
    %v2352 = vpop.f32.mrf.mxu0
    %v2353 = vadd.f32 0.0, %v2352
    %v2354 = vpop.f32.mrf.mxu0
    %2355 = vdwg.mxu0
    %v2356 = vmul.f32 %v2332, %v2310
    %v2357 = vmul.f32 %v2353, %v2311
    %2360 = vrot.lane.b32.xlu0 %v2132, 32
    %v2361 = vpop.permute.xlu0 %2360
    %2362 = vrot.lane.b32.xlu0 %v2133, 32
    %v2363 = vpop.permute.xlu0 %2362
    %2368 = vrot.lane.b32.xlu0 %v2244, 64
    %v2369 = vpop.permute.xlu0 %2368
    %2370 = vrot.lane.b32.xlu0 %v2245, 64
    %v2371 = vpop.permute.xlu0 %2370
    %2376 = vrot.lane.b32.xlu0 %v2356, 96
    %v2377 = vpop.permute.xlu0 %2376
    %2378 = vrot.lane.b32.xlu0 %v2357, 96
    %v2379 = vpop.permute.xlu0 %2378
    %v2382 = vsel %vm475, %v2002, %v2361
    %v2383 = vsel %vm475, %v2003, %v2363
    %v2384 = vsel %vm958, %v2382, %v2369
    %v2385 = vsel %vm958, %v2383, %v2371
    %v2386 = vsel %vm961, %v2384, %v2377
    %v2387 = vsel %vm961, %v2385, %v2379
    %v2388 = vpack.c.bf16 %v2387, %v2386
    %v2389 = vld [vmem:[#allocation7 + $0x4] sm:$0xf]
    %v2390 = vld [vmem:[#allocation7 + $0x14] sm:$0xf]
    %v2391 = vld [vmem:[#allocation7 + $0x24] sm:$0xf]
    %v2392 = vld [vmem:[#allocation7 + $0x34] sm:$0xf]
    %v2393 = vld [vmem:[#allocation7 + $0x44] sm:$0xf]
    %v2394 = vld [vmem:[#allocation7 + $0x54] sm:$0xf]
    %v2395 = vld [vmem:[#allocation7 + $0x64] sm:$0xf]
    %v2396 = vld [vmem:[#allocation7 + $0x74] sm:$0xf]
    %v2397 = vld [vmem:[#allocation7 + $0x84] sm:$0xf]
    %v2398 = vld [vmem:[#allocation7 + $0x94] sm:$0xf]
    %v2399 = vld [vmem:[#allocation7 + $0xa4] sm:$0xf]
    %v2400 = vld [vmem:[#allocation7 + $0xb4] sm:$0xf]
    %v2401 = vld [vmem:[#allocation7 + $0xc4] sm:$0xf]
    %v2402 = vld [vmem:[#allocation7 + $0xd4] sm:$0xf]
    %v2403 = vld [vmem:[#allocation7 + $0xe4] sm:$0xf]
    %v2404 = vld [vmem:[#allocation7 + $0xf4] sm:$0xf]
    %v2421 = vunpack.c.l.b16 %v2389
    %v2422 = vunpack.c.l.b16 %v2390
    %v2423 = vunpack.c.l.b16 %v2391
    %v2424 = vunpack.c.l.b16 %v2392
    %v2425 = vunpack.c.l.b16 %v2393
    %v2426 = vunpack.c.l.b16 %v2394
    %v2427 = vunpack.c.l.b16 %v2395
    %v2428 = vunpack.c.l.b16 %v2396
    %v2429 = vunpack.c.l.b16 %v2397
    %v2430 = vunpack.c.l.b16 %v2398
    %v2431 = vunpack.c.l.b16 %v2399
    %v2432 = vunpack.c.l.b16 %v2400
    %v2433 = vunpack.c.l.b16 %v2401
    %v2434 = vunpack.c.l.b16 %v2402
    %v2435 = vunpack.c.l.b16 %v2403
    %v2436 = vunpack.c.l.b16 %v2404
    %v2437 = vpack.c.b16 %v2422, %v2421
    %v2438 = vpack.c.b16 %v2424, %v2423
    %v2439 = vpack.c.b16 %v2426, %v2425
    %v2440 = vpack.c.b16 %v2428, %v2427
    %v2441 = vpack.c.b16 %v2430, %v2429
    %v2442 = vpack.c.b16 %v2432, %v2431
    %v2443 = vpack.c.b16 %v2434, %v2433
    %v2444 = vpack.c.b16 %v2436, %v2435
    %2453 = vmatpush.bf16.msra.mxu0 %v2444
    %2454 = vmatpush.bf16.msra.mxu0 %v2443
    %2455 = vmatpush.bf16.msra.mxu0 %v2442
    %2456 = vmatpush.bf16.msra.mxu0 %v2441
    %2457 = vmatpush.bf16.msra.mxu0 %v2440
    %2458 = vmatpush.bf16.msra.mxu0 %v2439
    %2459 = vmatpush.bf16.msra.mxu0 %v2438
    %2460 = vmatpush.bf16.msra.mxu0 %v2437
    %2461 = vmatmul.bf16.gmra.mxu0 %v2388
    %v2462 = vpop.f32.mrf.mxu0
    %v2463 = vadd.f32 0.0, %v2462
    %v2464 = vpop.f32.mrf.mxu0
    %v2465 = vadd.f32 0.0, %v2464
    %2466 = vdwg.mxu0
    %v2467 = vadd.f32 %v1655, %v2463
    %v2468 = vadd.f32 %v1657, %v2465
    %v2469 = vmul.f32 %v2467, %v2467
    %v2470 = vmul.f32 %v2468, %v2468
    %2471 = vadd.xlane.f32.xlu0 %v2469
    %v2472 = vpop.xlane.xlu0 %2471
    %2473 = vadd.xlane.f32.xlu0 %v2470
    %v2474 = vpop.xlane.xlu0 %2473
    %v2475 = vmul.f32 %v2472, %v231
    %v2476 = vmul.f32 %v2474, %v231
    %v2477 = vadd.f32 %v2475, 1e-06
    %v2478 = vadd.f32 %v2476, 1e-06
    %v2479 = vrsqrt.pop %v2477
    %v2480 = vmul.f32 %v2479, %v2477
    %v2481 = vmul.f32 %v2480, %v2479
    %v2482 = vmul.f32 0.5, %v2481
    %v2483 = vsub.f32 1.5, %v2482
    %v2484 = vmul.f32 %v2479, %v2483
    %vm2485 = vweird.f32 %v2477
    %vm2486 = vweird.f32 %v2479
    %vm2487 = vmor %vm2485, %vm2486
    %v2488 = vsel %vm2487, %v2479, %v2484
    %v2489 = vrsqrt.pop %v2478
    %v2490 = vmul.f32 %v2489, %v2478
    %v2491 = vmul.f32 %v2490, %v2489
    %v2492 = vmul.f32 0.5, %v2491
    %v2493 = vsub.f32 1.5, %v2492
    %v2494 = vmul.f32 %v2489, %v2493
    %vm2495 = vweird.f32 %v2478
    %vm2496 = vweird.f32 %v2489
    %vm2497 = vmor %vm2495, %vm2496
    %v2498 = vsel %vm2497, %v2489, %v2494
    %v2499 = vmul.f32 %v2467, %v2488
    %v2500 = vmul.f32 %v2468, %v2498
    %v2501 = vld [vmem:[%s5 + $0x4] sm:$0x1]
    %v2502 = vperm.slane %v2501, 0
    %v2503 = vmul.f32 %v2499, %v2502
    %v2504 = vmul.f32 %v2500, %v2502
    %v2505 = vpack.c.bf16 %v2504, %v2503
    %v2506 = vld [vmem:[#allocation5 + $0x18] sm:$0xf]
    %v2507 = vld [vmem:[#allocation5 + $0x3c] sm:$0xf]
    %v2508 = vld [vmem:[#allocation5 + $0x60] sm:$0xf]
    %v2509 = vld [vmem:[#allocation5 + $0x84] sm:$0xf]
    %v2510 = vld [vmem:[#allocation5 + $0xa8] sm:$0xf]
    %v2511 = vld [vmem:[#allocation5 + $0xcc] sm:$0xf]
    %v2512 = vld [vmem:[#allocation5 + $0xf0] sm:$0xf]
    %v2513 = vld [vmem:[#allocation5 + $0x114] sm:$0xf]
    %v2514 = vld [vmem:[#allocation5 + $0x138] sm:$0xf]
    %v2515 = vld [vmem:[#allocation5 + $0x15c] sm:$0xf]
    %v2516 = vld [vmem:[#allocation5 + $0x180] sm:$0xf]
    %v2517 = vld [vmem:[#allocation5 + $0x1a4] sm:$0xf]
    %v2518 = vld [vmem:[#allocation5 + $0x1c8] sm:$0xf]
    %v2519 = vld [vmem:[#allocation5 + $0x1ec] sm:$0xf]
    %v2520 = vld [vmem:[#allocation5 + $0x210] sm:$0xf]
    %v2521 = vld [vmem:[#allocation5 + $0x234] sm:$0xf]
    %v2538 = vunpack.c.l.b16 %v2506
    %v2539 = vunpack.c.l.b16 %v2507
    %v2540 = vunpack.c.l.b16 %v2508
    %v2541 = vunpack.c.l.b16 %v2509
    %v2542 = vunpack.c.l.b16 %v2510
    %v2543 = vunpack.c.l.b16 %v2511
    %v2544 = vunpack.c.l.b16 %v2512
    %v2545 = vunpack.c.l.b16 %v2513
    %v2546 = vunpack.c.l.b16 %v2514
    %v2547 = vunpack.c.l.b16 %v2515
    %v2548 = vunpack.c.l.b16 %v2516
    %v2549 = vunpack.c.l.b16 %v2517
    %v2550 = vunpack.c.l.b16 %v2518
    %v2551 = vunpack.c.l.b16 %v2519
    %v2552 = vunpack.c.l.b16 %v2520
    %v2553 = vunpack.c.l.b16 %v2521
    %v2554 = vpack.c.b16 %v2539, %v2538
    %v2555 = vpack.c.b16 %v2541, %v2540
    %v2556 = vpack.c.b16 %v2543, %v2542
    %v2557 = vpack.c.b16 %v2545, %v2544
    %v2558 = vpack.c.b16 %v2547, %v2546
    %v2559 = vpack.c.b16 %v2549, %v2548
    %v2560 = vpack.c.b16 %v2551, %v2550
    %v2561 = vpack.c.b16 %v2553, %v2552
    %2570 = vmatpush.bf16.msra.mxu0 %v2561
    %2571 = vmatpush.bf16.msra.mxu0 %v2560
    %2572 = vmatpush.bf16.msra.mxu0 %v2559
    %2573 = vmatpush.bf16.msra.mxu0 %v2558
    %2574 = vmatpush.bf16.msra.mxu0 %v2557
    %2575 = vmatpush.bf16.msra.mxu0 %v2556
    %2576 = vmatpush.bf16.msra.mxu0 %v2555
    %2577 = vmatpush.bf16.msra.mxu0 %v2554
    %2578 = vmatmul.bf16.gmra.mxu0 %v2505
    %v2579 = vpop.f32.mrf.mxu0
    %v2580 = vadd.f32 0.0, %v2579
    %v2581 = vpop.f32.mrf.mxu0
    %v2582 = vadd.f32 0.0, %v2581
    %2583 = vdwg.mxu0
    %v2584 = vpack.c.bf16 %v1565, %v1564
    %v2585 = vld [vmem:[#allocation5 + $0x1c] sm:$0xff]
    %v2586 = vld [vmem:[#allocation5 + $0x40] sm:$0xff]
    %v2587 = vld [vmem:[#allocation5 + $0x64] sm:$0xff]
    %v2588 = vld [vmem:[#allocation5 + $0x88] sm:$0xff]
    %v2589 = vld [vmem:[#allocation5 + $0xac] sm:$0xff]
    %v2590 = vld [vmem:[#allocation5 + $0xd0] sm:$0xff]
    %v2591 = vld [vmem:[#allocation5 + $0xf4] sm:$0xff]
    %v2592 = vld [vmem:[#allocation5 + $0x118] sm:$0xff]
    %v2593 = vld [vmem:[#allocation5 + $0x13c] sm:$0xff]
    %v2594 = vld [vmem:[#allocation5 + $0x160] sm:$0xff]
    %v2595 = vld [vmem:[#allocation5 + $0x184] sm:$0xff]
    %v2596 = vld [vmem:[#allocation5 + $0x1a8] sm:$0xff]
    %v2597 = vld [vmem:[#allocation5 + $0x1cc] sm:$0xff]
    %v2598 = vld [vmem:[#allocation5 + $0x1f0] sm:$0xff]
    %v2599 = vld [vmem:[#allocation5 + $0x214] sm:$0xff]
    %v2600 = vld [vmem:[#allocation5 + $0x238] sm:$0xff]
    %v2617 = vunpack.c.l.b16 %v2585
    %v2618 = vunpack.c.h.b16 %v2585
    %v2619 = vunpack.c.l.b16 %v2586
    %v2620 = vunpack.c.h.b16 %v2586
    %v2621 = vunpack.c.l.b16 %v2587
    %v2622 = vunpack.c.h.b16 %v2587
    %v2623 = vunpack.c.l.b16 %v2588
    %v2624 = vunpack.c.h.b16 %v2588
    %v2625 = vunpack.c.l.b16 %v2589
    %v2626 = vunpack.c.h.b16 %v2589
    %v2627 = vunpack.c.l.b16 %v2590
    %v2628 = vunpack.c.h.b16 %v2590
    %v2629 = vunpack.c.l.b16 %v2591
    %v2630 = vunpack.c.h.b16 %v2591
    %v2631 = vunpack.c.l.b16 %v2592
    %v2632 = vunpack.c.h.b16 %v2592
    %v2633 = vunpack.c.l.b16 %v2593
    %v2634 = vunpack.c.h.b16 %v2593
    %v2635 = vunpack.c.l.b16 %v2594
    %v2636 = vunpack.c.h.b16 %v2594
    %v2637 = vunpack.c.l.b16 %v2595
    %v2638 = vunpack.c.h.b16 %v2595
    %v2639 = vunpack.c.l.b16 %v2596
    %v2640 = vunpack.c.h.b16 %v2596
    %v2641 = vunpack.c.l.b16 %v2597
    %v2642 = vunpack.c.h.b16 %v2597
    %v2643 = vunpack.c.l.b16 %v2598
    %v2644 = vunpack.c.h.b16 %v2598
    %v2645 = vunpack.c.l.b16 %v2599
    %v2646 = vunpack.c.h.b16 %v2599
    %v2647 = vunpack.c.l.b16 %v2600
    %v2648 = vunpack.c.h.b16 %v2600
    %v2649 = vpack.c.b16 %v2619, %v2617
    %v2650 = vpack.c.b16 %v2620, %v2618
    %v2651 = vpack.c.b16 %v2623, %v2621
    %v2652 = vpack.c.b16 %v2624, %v2622
    %v2653 = vpack.c.b16 %v2627, %v2625
    %v2654 = vpack.c.b16 %v2628, %v2626
    %v2655 = vpack.c.b16 %v2631, %v2629
    %v2656 = vpack.c.b16 %v2632, %v2630
    %v2657 = vpack.c.b16 %v2635, %v2633
    %v2658 = vpack.c.b16 %v2636, %v2634
    %v2659 = vpack.c.b16 %v2639, %v2637
    %v2660 = vpack.c.b16 %v2640, %v2638
    %v2661 = vpack.c.b16 %v2643, %v2641
    %v2662 = vpack.c.b16 %v2644, %v2642
    %v2663 = vpack.c.b16 %v2647, %v2645
    %v2664 = vpack.c.b16 %v2648, %v2646
    %2681 = vmatpush.bf16.msra.mxu0 %v2663
    %2682 = vmatpush.bf16.msra.mxu0 %v2661
    %2683 = vmatpush.bf16.msra.mxu0 %v2659
    %2684 = vmatpush.bf16.msra.mxu0 %v2657
    %2685 = vmatpush.bf16.msra.mxu0 %v2655
    %2686 = vmatpush.bf16.msra.mxu0 %v2653
    %2687 = vmatpush.bf16.msra.mxu0 %v2651
    %2688 = vmatpush.bf16.msra.mxu0 %v2649
    %2689 = vmatmul.bf16.gmra.mxu0 %v2584
    %v2690 = vpop.f32.mrf.mxu0
    %v2691 = vadd.f32 0.0, %v2690
    %v2692 = vpop.f32.mrf.mxu0
    %v2693 = vadd.f32 0.0, %v2692
    %2694 = vdwg.mxu0
    %2695 = vmatpush.bf16.msra.mxu0 %v2664
    %2696 = vmatpush.bf16.msra.mxu0 %v2662
    %2697 = vmatpush.bf16.msra.mxu0 %v2660
    %2698 = vmatpush.bf16.msra.mxu0 %v2658
    %2699 = vmatpush.bf16.msra.mxu0 %v2656
    %2700 = vmatpush.bf16.msra.mxu0 %v2654
    %2701 = vmatpush.bf16.msra.mxu0 %v2652
    %2702 = vmatpush.bf16.msra.mxu0 %v2650
    %2703 = vmatmul.bf16.gmra.mxu0 %v2584
    %v2704 = vpop.f32.mrf.mxu0
    %v2705 = vadd.f32 0.0, %v2704
    %v2706 = vpop.f32.mrf.mxu0
    %v2707 = vadd.f32 0.0, %v2706
    %2708 = vdwg.mxu0
    %v2709 = vpack.c.bf16 %v2580, %v2580
    %v2710 = vpack.c.bf16 %v2582, %v2582
    %v2711 = vpack.c.bf16 %v2691, %v2691
    %v2712 = vpack.c.bf16 %v2693, %v2693
    %v2713 = vpack.c.bf16 %v2705, %v2705
    %v2714 = vpack.c.bf16 %v2707, %v2707
    %v2716 = vsel %vm475, %v2709, 0
    %v2719 = vsel %vm475, %v2711, 0
    %2721 = vmatpush.bf16.xpose.msra.mxu0 0
    %2722 = vmatpush.bf16.xpose.msra.mxu0 0
    %2723 = vmatpush.bf16.xpose.msra.mxu0 0
    %2724 = vmatpush.bf16.xpose.msra.mxu0 0
    %2725 = vmatpush.bf16.xpose.msra.mxu0 0
    %2726 = vmatpush.bf16.xpose.msra.mxu0 0
    %2727 = vmatpush.bf16.xpose.msra.mxu0 0
    %2728 = vmatpush.bf16.xpose.msra.mxu0 %v2719
    %2729 = vmatmul.bf16.gmra.mxu0 %v2716
    %v2730 = vpop.f32.mrf.mxu0
    %v2731 = vadd.f32 %v471, %v2730
    %v2732 = vpop.f32.mrf.mxu0
    %2733 = vdwg.mxu0
    %v2735 = vsel %vm475, %v2710, 0
    %v2738 = vsel %vm475, %v2712, 0
    %2740 = vmatpush.bf16.xpose.msra.mxu0 0
    %2741 = vmatpush.bf16.xpose.msra.mxu0 0
    %2742 = vmatpush.bf16.xpose.msra.mxu0 0
    %2743 = vmatpush.bf16.xpose.msra.mxu0 0
    %2744 = vmatpush.bf16.xpose.msra.mxu0 0
    %2745 = vmatpush.bf16.xpose.msra.mxu0 0
    %2746 = vmatpush.bf16.xpose.msra.mxu0 0
    %2747 = vmatpush.bf16.xpose.msra.mxu0 %v2738
    %2748 = vmatmul.bf16.gmra.mxu0 %v2735
    %v2749 = vpop.f32.mrf.mxu0
    %v2750 = vadd.f32 %v472, %v2749
    %v2751 = vpop.f32.mrf.mxu0
    %2752 = vdwg.mxu0
    %v2753 = vsel %vm514, %v2731, -inf
    %2754 = vmax.xlane.f32.xlu0 %v2753
    %v2755 = vpop.xlane.xlu0 %2754
    %v2756 = vsel %vm514, %v2750, -inf
    %2757 = vmax.xlane.f32.xlu0 %v2756
    %v2758 = vpop.xlane.xlu0 %2757
    %v2759 = vsub.f32 %v2731, %v2755
    %v2760 = vsub.f32 %v2750, %v2758
    %v2761 = vmul.f32 %v2759, 1.442695
    %v2762 = vpow.pop %v2761
    %v2763 = vmul.f32 %v2760, 1.442695
    %v2764 = vpow.pop %v2763
    %v2765 = vsel %vm514, %v2762, 0.0
    %2766 = vadd.xlane.f32.xlu0 %v2765
    %v2767 = vpop.xlane.xlu0 %2766
    %v2768 = vsel %vm514, %v2764, 0.0
    %2769 = vadd.xlane.f32.xlu0 %v2768
    %v2770 = vpop.xlane.xlu0 %2769
    %v2771 = vrcp.pop %v2767
    %v2772 = vrcp.pop %v2770
    %v2773 = vpack.c.bf16 %v2762, %v2762
    %v2774 = vpack.c.bf16 %v2764, %v2764
    %v2776 = vsel %vm514, %v2773, 0
    %v2779 = vsel %vm540, %v2713, 0
    %2781 = vmatpush.bf16.msra.mxu0 0
    %2782 = vmatpush.bf16.msra.mxu0 0
    %2783 = vmatpush.bf16.msra.mxu0 0
    %2784 = vmatpush.bf16.msra.mxu0 0
    %2785 = vmatpush.bf16.msra.mxu0 0
    %2786 = vmatpush.bf16.msra.mxu0 0
    %2787 = vmatpush.bf16.msra.mxu0 0
    %2788 = vmatpush.bf16.msra.mxu0 %v2779
    %2789 = vmatmul.bf16.gmra.mxu0 %v2776
    %v2790 = vpop.f32.mrf.mxu0
    %v2791 = vadd.f32 0.0, %v2790
    %v2792 = vpop.f32.mrf.mxu0
    %2793 = vdwg.mxu0
    %v2795 = vsel %vm514, %v2774, 0
    %v2798 = vsel %vm540, %v2714, 0
    %2800 = vmatpush.bf16.msra.mxu0 0
    %2801 = vmatpush.bf16.msra.mxu0 0
    %2802 = vmatpush.bf16.msra.mxu0 0
    %2803 = vmatpush.bf16.msra.mxu0 0
    %2804 = vmatpush.bf16.msra.mxu0 0
    %2805 = vmatpush.bf16.msra.mxu0 0
    %2806 = vmatpush.bf16.msra.mxu0 0
    %2807 = vmatpush.bf16.msra.mxu0 %v2798
    %2808 = vmatmul.bf16.gmra.mxu0 %v2795
    %v2809 = vpop.f32.mrf.mxu0
    %v2810 = vadd.f32 0.0, %v2809
    %v2811 = vpop.f32.mrf.mxu0
    %2812 = vdwg.mxu0
    %v2813 = vmul.f32 %v2791, %v2771
    %v2814 = vmul.f32 %v2810, %v2772
    %v2816 = vunpack.c.l.b16 %v2709
    %v2817 = vpack.c.b16 %v2816, %v2816
    %2818 = vrot.lane.b32.xlu0 %v2817, 96
    %v2819 = vpop.permute.xlu0 %2818
    %v2821 = vunpack.c.l.b16 %v2711
    %v2822 = vpack.c.b16 %v2821, %v2821
    %2823 = vrot.lane.b32.xlu0 %v2822, 96
    %v2824 = vpop.permute.xlu0 %2823
    %v2826 = vsel %vm475, %v2819, 0
    %v2829 = vsel %vm475, %v2824, 0
    %2831 = vmatpush.bf16.xpose.msra.mxu0 0
    %2832 = vmatpush.bf16.xpose.msra.mxu0 0
    %2833 = vmatpush.bf16.xpose.msra.mxu0 0
    %2834 = vmatpush.bf16.xpose.msra.mxu0 0
    %2835 = vmatpush.bf16.xpose.msra.mxu0 0
    %2836 = vmatpush.bf16.xpose.msra.mxu0 0
    %2837 = vmatpush.bf16.xpose.msra.mxu0 0
    %2838 = vmatpush.bf16.xpose.msra.mxu0 %v2829
    %2839 = vmatmul.bf16.gmra.mxu0 %v2826
    %v2840 = vpop.f32.mrf.mxu0
    %v2841 = vadd.f32 %v471, %v2840
    %v2842 = vpop.f32.mrf.mxu0
    %2843 = vdwg.mxu0
    %v2845 = vunpack.c.l.b16 %v2710
    %v2846 = vpack.c.b16 %v2845, %v2845
    %2847 = vrot.lane.b32.xlu0 %v2846, 96
    %v2848 = vpop.permute.xlu0 %2847
    %v2850 = vunpack.c.l.b16 %v2712
    %v2851 = vpack.c.b16 %v2850, %v2850
    %2852 = vrot.lane.b32.xlu0 %v2851, 96
    %v2853 = vpop.permute.xlu0 %2852
    %v2855 = vsel %vm475, %v2848, 0
    %v2858 = vsel %vm475, %v2853, 0
    %2860 = vmatpush.bf16.xpose.msra.mxu0 0
    %2861 = vmatpush.bf16.xpose.msra.mxu0 0
    %2862 = vmatpush.bf16.xpose.msra.mxu0 0
    %2863 = vmatpush.bf16.xpose.msra.mxu0 0
    %2864 = vmatpush.bf16.xpose.msra.mxu0 0
    %2865 = vmatpush.bf16.xpose.msra.mxu0 0
    %2866 = vmatpush.bf16.xpose.msra.mxu0 0
    %2867 = vmatpush.bf16.xpose.msra.mxu0 %v2858
    %2868 = vmatmul.bf16.gmra.mxu0 %v2855
    %v2869 = vpop.f32.mrf.mxu0
    %v2870 = vadd.f32 %v472, %v2869
    %v2871 = vpop.f32.mrf.mxu0
    %2872 = vdwg.mxu0
    %v2873 = vsel %vm514, %v2841, -inf
    %2874 = vmax.xlane.f32.xlu0 %v2873
    %v2875 = vpop.xlane.xlu0 %2874
    %v2876 = vsel %vm514, %v2870, -inf
    %2877 = vmax.xlane.f32.xlu0 %v2876
    %v2878 = vpop.xlane.xlu0 %2877
    %v2879 = vsub.f32 %v2841, %v2875
    %v2880 = vsub.f32 %v2870, %v2878
    %v2881 = vmul.f32 %v2879, 1.442695
    %v2882 = vpow.pop %v2881
    %v2883 = vmul.f32 %v2880, 1.442695
    %v2884 = vpow.pop %v2883
    %v2885 = vsel %vm514, %v2882, 0.0
    %2886 = vadd.xlane.f32.xlu0 %v2885
    %v2887 = vpop.xlane.xlu0 %2886
    %v2888 = vsel %vm514, %v2884, 0.0
    %2889 = vadd.xlane.f32.xlu0 %v2888
    %v2890 = vpop.xlane.xlu0 %2889
    %v2891 = vrcp.pop %v2887
    %v2892 = vrcp.pop %v2890
    %v2893 = vpack.c.bf16 %v2882, %v2882
    %v2894 = vpack.c.bf16 %v2884, %v2884
    %v2896 = vunpack.c.l.b16 %v2713
    %v2897 = vpack.c.b16 %v2896, %v2896
    %2898 = vrot.lane.b32.xlu0 %v2897, 96
    %v2899 = vpop.permute.xlu0 %2898
    %v2901 = vsel %vm514, %v2893, 0
    %v2904 = vsel %vm540, %v2899, 0
    %2906 = vmatpush.bf16.msra.mxu0 0
    %2907 = vmatpush.bf16.msra.mxu0 0
    %2908 = vmatpush.bf16.msra.mxu0 0
    %2909 = vmatpush.bf16.msra.mxu0 0
    %2910 = vmatpush.bf16.msra.mxu0 0
    %2911 = vmatpush.bf16.msra.mxu0 0
    %2912 = vmatpush.bf16.msra.mxu0 0
    %2913 = vmatpush.bf16.msra.mxu0 %v2904
    %2914 = vmatmul.bf16.gmra.mxu0 %v2901
    %v2915 = vpop.f32.mrf.mxu0
    %v2916 = vadd.f32 0.0, %v2915
    %v2917 = vpop.f32.mrf.mxu0
    %2918 = vdwg.mxu0
    %v2920 = vunpack.c.l.b16 %v2714
    %v2921 = vpack.c.b16 %v2920, %v2920
    %2922 = vrot.lane.b32.xlu0 %v2921, 96
    %v2923 = vpop.permute.xlu0 %2922
    %v2925 = vsel %vm514, %v2894, 0
    %v2928 = vsel %vm540, %v2923, 0
    %2930 = vmatpush.bf16.msra.mxu0 0
    %2931 = vmatpush.bf16.msra.mxu0 0
    %2932 = vmatpush.bf16.msra.mxu0 0
    %2933 = vmatpush.bf16.msra.mxu0 0
    %2934 = vmatpush.bf16.msra.mxu0 0
    %2935 = vmatpush.bf16.msra.mxu0 0
    %2936 = vmatpush.bf16.msra.mxu0 0
    %2937 = vmatpush.bf16.msra.mxu0 %v2928
    %2938 = vmatmul.bf16.gmra.mxu0 %v2925
    %v2939 = vpop.f32.mrf.mxu0
    %v2940 = vadd.f32 0.0, %v2939
    %v2941 = vpop.f32.mrf.mxu0
    %2942 = vdwg.mxu0
    %v2943 = vmul.f32 %v2916, %v2891
    %v2944 = vmul.f32 %v2940, %v2892
    %2945 = vrot.lane.b32.xlu0 %v2817, 64
    %v2946 = vpop.permute.xlu0 %2945
    %2947 = vrot.lane.b32.xlu0 %v2822, 64
    %v2948 = vpop.permute.xlu0 %2947
    %v2950 = vsel %vm475, %v2946, 0
    %v2953 = vsel %vm475, %v2948, 0
    %2955 = vmatpush.bf16.xpose.msra.mxu0 0
    %2956 = vmatpush.bf16.xpose.msra.mxu0 0
    %2957 = vmatpush.bf16.xpose.msra.mxu0 0
    %2958 = vmatpush.bf16.xpose.msra.mxu0 0
    %2959 = vmatpush.bf16.xpose.msra.mxu0 0
    %2960 = vmatpush.bf16.xpose.msra.mxu0 0
    %2961 = vmatpush.bf16.xpose.msra.mxu0 0
    %2962 = vmatpush.bf16.xpose.msra.mxu0 %v2953
    %2963 = vmatmul.bf16.gmra.mxu0 %v2950
    %v2964 = vpop.f32.mrf.mxu0
    %v2965 = vadd.f32 %v471, %v2964
    %v2966 = vpop.f32.mrf.mxu0
    %2967 = vdwg.mxu0
    %2968 = vrot.lane.b32.xlu0 %v2846, 64
    %v2969 = vpop.permute.xlu0 %2968
    %2970 = vrot.lane.b32.xlu0 %v2851, 64
    %v2971 = vpop.permute.xlu0 %2970
    %v2973 = vsel %vm475, %v2969, 0
    %v2976 = vsel %vm475, %v2971, 0
    %2978 = vmatpush.bf16.xpose.msra.mxu0 0
    %2979 = vmatpush.bf16.xpose.msra.mxu0 0
    %2980 = vmatpush.bf16.xpose.msra.mxu0 0
    %2981 = vmatpush.bf16.xpose.msra.mxu0 0
    %2982 = vmatpush.bf16.xpose.msra.mxu0 0
    %2983 = vmatpush.bf16.xpose.msra.mxu0 0
    %2984 = vmatpush.bf16.xpose.msra.mxu0 0
    %2985 = vmatpush.bf16.xpose.msra.mxu0 %v2976
    %2986 = vmatmul.bf16.gmra.mxu0 %v2973
    %v2987 = vpop.f32.mrf.mxu0
    %v2988 = vadd.f32 %v472, %v2987
    %v2989 = vpop.f32.mrf.mxu0
    %2990 = vdwg.mxu0
    %v2991 = vsel %vm514, %v2965, -inf
    %2992 = vmax.xlane.f32.xlu0 %v2991
    %v2993 = vpop.xlane.xlu0 %2992
    %v2994 = vsel %vm514, %v2988, -inf
    %2995 = vmax.xlane.f32.xlu0 %v2994
    %v2996 = vpop.xlane.xlu0 %2995
    %v2997 = vsub.f32 %v2965, %v2993
    %v2998 = vsub.f32 %v2988, %v2996
    %v2999 = vmul.f32 %v2997, 1.442695
    %v3000 = vpow.pop %v2999
    %v3001 = vmul.f32 %v2998, 1.442695
    %v3002 = vpow.pop %v3001
    %v3003 = vsel %vm514, %v3000, 0.0
    %3004 = vadd.xlane.f32.xlu0 %v3003
    %v3005 = vpop.xlane.xlu0 %3004
    %v3006 = vsel %vm514, %v3002, 0.0
    %3007 = vadd.xlane.f32.xlu0 %v3006
    %v3008 = vpop.xlane.xlu0 %3007
    %v3009 = vrcp.pop %v3005
    %v3010 = vrcp.pop %v3008
    %v3011 = vpack.c.bf16 %v3000, %v3000
    %v3012 = vpack.c.bf16 %v3002, %v3002
    %3013 = vrot.lane.b32.xlu0 %v2897, 64
    %v3014 = vpop.permute.xlu0 %3013
    %v3016 = vsel %vm514, %v3011, 0
    %v3019 = vsel %vm540, %v3014, 0
    %3021 = vmatpush.bf16.msra.mxu0 0
    %3022 = vmatpush.bf16.msra.mxu0 0
    %3023 = vmatpush.bf16.msra.mxu0 0
    %3024 = vmatpush.bf16.msra.mxu0 0
    %3025 = vmatpush.bf16.msra.mxu0 0
    %3026 = vmatpush.bf16.msra.mxu0 0
    %3027 = vmatpush.bf16.msra.mxu0 0
    %3028 = vmatpush.bf16.msra.mxu0 %v3019
    %3029 = vmatmul.bf16.gmra.mxu0 %v3016
    %v3030 = vpop.f32.mrf.mxu0
    %v3031 = vadd.f32 0.0, %v3030
    %v3032 = vpop.f32.mrf.mxu0
    %3033 = vdwg.mxu0
    %3034 = vrot.lane.b32.xlu0 %v2921, 64
    %v3035 = vpop.permute.xlu0 %3034
    %v3037 = vsel %vm514, %v3012, 0
    %v3040 = vsel %vm540, %v3035, 0
    %3042 = vmatpush.bf16.msra.mxu0 0
    %3043 = vmatpush.bf16.msra.mxu0 0
    %3044 = vmatpush.bf16.msra.mxu0 0
    %3045 = vmatpush.bf16.msra.mxu0 0
    %3046 = vmatpush.bf16.msra.mxu0 0
    %3047 = vmatpush.bf16.msra.mxu0 0
    %3048 = vmatpush.bf16.msra.mxu0 0
    %3049 = vmatpush.bf16.msra.mxu0 %v3040
    %3050 = vmatmul.bf16.gmra.mxu0 %v3037
    %v3051 = vpop.f32.mrf.mxu0
    %v3052 = vadd.f32 0.0, %v3051
    %v3053 = vpop.f32.mrf.mxu0
    %3054 = vdwg.mxu0
    %v3055 = vmul.f32 %v3031, %v3009
    %v3056 = vmul.f32 %v3052, %v3010
    %3057 = vrot.lane.b32.xlu0 %v2817, 32
    %v3058 = vpop.permute.xlu0 %3057
    %3059 = vrot.lane.b32.xlu0 %v2822, 32
    %v3060 = vpop.permute.xlu0 %3059
    %v3062 = vsel %vm475, %v3058, 0
    %v3065 = vsel %vm475, %v3060, 0
    %3067 = vmatpush.bf16.xpose.msra.mxu0 0
    %3068 = vmatpush.bf16.xpose.msra.mxu0 0
    %3069 = vmatpush.bf16.xpose.msra.mxu0 0
    %3070 = vmatpush.bf16.xpose.msra.mxu0 0
    %3071 = vmatpush.bf16.xpose.msra.mxu0 0
    %3072 = vmatpush.bf16.xpose.msra.mxu0 0
    %3073 = vmatpush.bf16.xpose.msra.mxu0 0
    %3074 = vmatpush.bf16.xpose.msra.mxu0 %v3065
    %3075 = vmatmul.bf16.gmra.mxu0 %v3062
    %v3076 = vpop.f32.mrf.mxu0
    %v3077 = vadd.f32 %v471, %v3076
    %v3078 = vpop.f32.mrf.mxu0
    %3079 = vdwg.mxu0
    %3080 = vrot.lane.b32.xlu0 %v2846, 32
    %v3081 = vpop.permute.xlu0 %3080
    %3082 = vrot.lane.b32.xlu0 %v2851, 32
    %v3083 = vpop.permute.xlu0 %3082
    %v3085 = vsel %vm475, %v3081, 0
    %v3088 = vsel %vm475, %v3083, 0
    %3090 = vmatpush.bf16.xpose.msra.mxu0 0
    %3091 = vmatpush.bf16.xpose.msra.mxu0 0
    %3092 = vmatpush.bf16.xpose.msra.mxu0 0
    %3093 = vmatpush.bf16.xpose.msra.mxu0 0
    %3094 = vmatpush.bf16.xpose.msra.mxu0 0
    %3095 = vmatpush.bf16.xpose.msra.mxu0 0
    %3096 = vmatpush.bf16.xpose.msra.mxu0 0
    %3097 = vmatpush.bf16.xpose.msra.mxu0 %v3088
    %3098 = vmatmul.bf16.gmra.mxu0 %v3085
    %v3099 = vpop.f32.mrf.mxu0
    %v3100 = vadd.f32 %v472, %v3099
    %v3101 = vpop.f32.mrf.mxu0
    %3102 = vdwg.mxu0
    %v3103 = vsel %vm514, %v3077, -inf
    %3104 = vmax.xlane.f32.xlu0 %v3103
    %v3105 = vpop.xlane.xlu0 %3104
    %v3106 = vsel %vm514, %v3100, -inf
    %3107 = vmax.xlane.f32.xlu0 %v3106
    %v3108 = vpop.xlane.xlu0 %3107
    %v3109 = vsub.f32 %v3077, %v3105
    %v3110 = vsub.f32 %v3100, %v3108
    %v3111 = vmul.f32 %v3109, 1.442695
    %v3112 = vpow.pop %v3111
    %v3113 = vmul.f32 %v3110, 1.442695
    %v3114 = vpow.pop %v3113
    %v3115 = vsel %vm514, %v3112, 0.0
    %3116 = vadd.xlane.f32.xlu0 %v3115
    %v3117 = vpop.xlane.xlu0 %3116
    %v3118 = vsel %vm514, %v3114, 0.0
    %3119 = vadd.xlane.f32.xlu0 %v3118
    %v3120 = vpop.xlane.xlu0 %3119
    %v3121 = vrcp.pop %v3117
    %v3122 = vrcp.pop %v3120
    %v3123 = vpack.c.bf16 %v3112, %v3112
    %v3124 = vpack.c.bf16 %v3114, %v3114
    %3125 = vrot.lane.b32.xlu0 %v2897, 32
    %v3126 = vpop.permute.xlu0 %3125
    %v3128 = vsel %vm514, %v3123, 0
    %v3131 = vsel %vm540, %v3126, 0
    %3133 = vmatpush.bf16.msra.mxu0 0
    %3134 = vmatpush.bf16.msra.mxu0 0
    %3135 = vmatpush.bf16.msra.mxu0 0
    %3136 = vmatpush.bf16.msra.mxu0 0
    %3137 = vmatpush.bf16.msra.mxu0 0
    %3138 = vmatpush.bf16.msra.mxu0 0
    %3139 = vmatpush.bf16.msra.mxu0 0
    %3140 = vmatpush.bf16.msra.mxu0 %v3131
    %3141 = vmatmul.bf16.gmra.mxu0 %v3128
    %v3142 = vpop.f32.mrf.mxu0
    %v3143 = vadd.f32 0.0, %v3142
    %v3144 = vpop.f32.mrf.mxu0
    %3145 = vdwg.mxu0
    %3146 = vrot.lane.b32.xlu0 %v2921, 32
    %v3147 = vpop.permute.xlu0 %3146
    %v3149 = vsel %vm514, %v3124, 0
    %v3152 = vsel %vm540, %v3147, 0
    %3154 = vmatpush.bf16.msra.mxu0 0
    %3155 = vmatpush.bf16.msra.mxu0 0
    %3156 = vmatpush.bf16.msra.mxu0 0
    %3157 = vmatpush.bf16.msra.mxu0 0
    %3158 = vmatpush.bf16.msra.mxu0 0
    %3159 = vmatpush.bf16.msra.mxu0 0
    %3160 = vmatpush.bf16.msra.mxu0 0
    %3161 = vmatpush.bf16.msra.mxu0 %v3152
    %3162 = vmatmul.bf16.gmra.mxu0 %v3149
    %v3163 = vpop.f32.mrf.mxu0
    %v3164 = vadd.f32 0.0, %v3163
    %v3165 = vpop.f32.mrf.mxu0
    %3166 = vdwg.mxu0
    %v3167 = vmul.f32 %v3143, %v3121
    %v3168 = vmul.f32 %v3164, %v3122
    %3171 = vrot.lane.b32.xlu0 %v2943, 32
    %v3172 = vpop.permute.xlu0 %3171
    %3173 = vrot.lane.b32.xlu0 %v2944, 32
    %v3174 = vpop.permute.xlu0 %3173
    %3179 = vrot.lane.b32.xlu0 %v3055, 64
    %v3180 = vpop.permute.xlu0 %3179
    %3181 = vrot.lane.b32.xlu0 %v3056, 64
    %v3182 = vpop.permute.xlu0 %3181
    %3187 = vrot.lane.b32.xlu0 %v3167, 96
    %v3188 = vpop.permute.xlu0 %3187
    %3189 = vrot.lane.b32.xlu0 %v3168, 96
    %v3190 = vpop.permute.xlu0 %3189
    %v3193 = vsel %vm475, %v2813, %v3172
    %v3194 = vsel %vm475, %v2814, %v3174
    %v3195 = vsel %vm958, %v3193, %v3180
    %v3196 = vsel %vm958, %v3194, %v3182
    %v3197 = vsel %vm961, %v3195, %v3188
    %v3198 = vsel %vm961, %v3196, %v3190
    %v3199 = vpack.c.bf16 %v3198, %v3197
    %v3200 = vld [vmem:[#allocation7 + $0x8] sm:$0xf]
    %v3201 = vld [vmem:[#allocation7 + $0x18] sm:$0xf]
    %v3202 = vld [vmem:[#allocation7 + $0x28] sm:$0xf]
    %v3203 = vld [vmem:[#allocation7 + $0x38] sm:$0xf]
    %v3204 = vld [vmem:[#allocation7 + $0x48] sm:$0xf]
    %v3205 = vld [vmem:[#allocation7 + $0x58] sm:$0xf]
    %v3206 = vld [vmem:[#allocation7 + $0x68] sm:$0xf]
    %v3207 = vld [vmem:[#allocation7 + $0x78] sm:$0xf]
    %v3208 = vld [vmem:[#allocation7 + $0x88] sm:$0xf]
    %v3209 = vld [vmem:[#allocation7 + $0x98] sm:$0xf]
    %v3210 = vld [vmem:[#allocation7 + $0xa8] sm:$0xf]
    %v3211 = vld [vmem:[#allocation7 + $0xb8] sm:$0xf]
    %v3212 = vld [vmem:[#allocation7 + $0xc8] sm:$0xf]
    %v3213 = vld [vmem:[#allocation7 + $0xd8] sm:$0xf]
    %v3214 = vld [vmem:[#allocation7 + $0xe8] sm:$0xf]
    %v3215 = vld [vmem:[#allocation7 + $0xf8] sm:$0xf]
    %v3232 = vunpack.c.l.b16 %v3200
    %v3233 = vunpack.c.l.b16 %v3201
    %v3234 = vunpack.c.l.b16 %v3202
    %v3235 = vunpack.c.l.b16 %v3203
    %v3236 = vunpack.c.l.b16 %v3204
    %v3237 = vunpack.c.l.b16 %v3205
    %v3238 = vunpack.c.l.b16 %v3206
    %v3239 = vunpack.c.l.b16 %v3207
    %v3240 = vunpack.c.l.b16 %v3208
    %v3241 = vunpack.c.l.b16 %v3209
    %v3242 = vunpack.c.l.b16 %v3210
    %v3243 = vunpack.c.l.b16 %v3211
    %v3244 = vunpack.c.l.b16 %v3212
    %v3245 = vunpack.c.l.b16 %v3213
    %v3246 = vunpack.c.l.b16 %v3214
    %v3247 = vunpack.c.l.b16 %v3215
    %v3248 = vpack.c.b16 %v3233, %v3232
    %v3249 = vpack.c.b16 %v3235, %v3234
    %v3250 = vpack.c.b16 %v3237, %v3236
    %v3251 = vpack.c.b16 %v3239, %v3238
    %v3252 = vpack.c.b16 %v3241, %v3240
    %v3253 = vpack.c.b16 %v3243, %v3242
    %v3254 = vpack.c.b16 %v3245, %v3244
    %v3255 = vpack.c.b16 %v3247, %v3246
    %3264 = vmatpush.bf16.msra.mxu0 %v3255
    %3265 = vmatpush.bf16.msra.mxu0 %v3254
    %3266 = vmatpush.bf16.msra.mxu0 %v3253
    %3267 = vmatpush.bf16.msra.mxu0 %v3252
    %3268 = vmatpush.bf16.msra.mxu0 %v3251
    %3269 = vmatpush.bf16.msra.mxu0 %v3250
    %3270 = vmatpush.bf16.msra.mxu0 %v3249
    %3271 = vmatpush.bf16.msra.mxu0 %v3248
    %3272 = vmatmul.bf16.gmra.mxu0 %v3199
    %v3273 = vpop.f32.mrf.mxu0
    %v3274 = vadd.f32 0.0, %v3273
    %v3275 = vpop.f32.mrf.mxu0
    %v3276 = vadd.f32 0.0, %v3275
    %3277 = vdwg.mxu0
    %v3278 = vadd.f32 %v2467, %v3274
    %v3279 = vadd.f32 %v2468, %v3276
    %v3280 = vmul.f32 %v3278, %v3278
    %v3281 = vmul.f32 %v3279, %v3279
    %3282 = vadd.xlane.f32.xlu0 %v3280
    %v3283 = vpop.xlane.xlu0 %3282
    %3284 = vadd.xlane.f32.xlu0 %v3281
    %v3285 = vpop.xlane.xlu0 %3284
    %v3286 = vmul.f32 %v3283, %v231
    %v3287 = vmul.f32 %v3285, %v231
    %v3288 = vadd.f32 %v3286, 1e-06
    %v3289 = vadd.f32 %v3287, 1e-06
    %v3290 = vrsqrt.pop %v3288
    %v3291 = vmul.f32 %v3290, %v3288
    %v3292 = vmul.f32 %v3291, %v3290
    %v3293 = vmul.f32 0.5, %v3292
    %v3294 = vsub.f32 1.5, %v3293
    %v3295 = vmul.f32 %v3290, %v3294
    %vm3296 = vweird.f32 %v3288
    %vm3297 = vweird.f32 %v3290
    %vm3298 = vmor %vm3296, %vm3297
    %v3299 = vsel %vm3298, %v3290, %v3295
    %v3300 = vrsqrt.pop %v3289
    %v3301 = vmul.f32 %v3300, %v3289
    %v3302 = vmul.f32 %v3301, %v3300
    %v3303 = vmul.f32 0.5, %v3302
    %v3304 = vsub.f32 1.5, %v3303
    %v3305 = vmul.f32 %v3300, %v3304
    %vm3306 = vweird.f32 %v3289
    %vm3307 = vweird.f32 %v3300
    %vm3308 = vmor %vm3306, %vm3307
    %v3309 = vsel %vm3308, %v3300, %v3305
    %v3310 = vmul.f32 %v3278, %v3299
    %v3311 = vmul.f32 %v3279, %v3309
    %v3312 = vld [vmem:[%s5 + $0x5] sm:$0x1]
    %v3313 = vperm.slane %v3312, 0
    %v3314 = vmul.f32 %v3310, %v3313
    %v3315 = vmul.f32 %v3311, %v3313
    %v3316 = vpack.c.bf16 %v3315, %v3314
    %v3317 = vld [vmem:[#allocation8 + $0x10] sm:$0xff]
    %v3318 = vld [vmem:[#allocation8 + $0x18] sm:$0xff]
    %v3319 = vld [vmem:[#allocation8 + $0x30] sm:$0xff]
    %v3320 = vld [vmem:[#allocation8 + $0x38] sm:$0xff]
    %v3321 = vld [vmem:[#allocation8 + $0x50] sm:$0xff]
    %v3322 = vld [vmem:[#allocation8 + $0x58] sm:$0xff]
    %v3323 = vld [vmem:[#allocation8 + $0x70] sm:$0xff]
    %v3324 = vld [vmem:[#allocation8 + $0x78] sm:$0xff]
    %v3325 = vld [vmem:[#allocation8 + $0x90] sm:$0xff]
    %v3326 = vld [vmem:[#allocation8 + $0x98] sm:$0xff]
    %v3327 = vld [vmem:[#allocation8 + $0xb0] sm:$0xff]
    %v3328 = vld [vmem:[#allocation8 + $0xb8] sm:$0xff]
    %v3329 = vld [vmem:[#allocation8 + $0xd0] sm:$0xff]
    %v3330 = vld [vmem:[#allocation8 + $0xd8] sm:$0xff]
    %v3331 = vld [vmem:[#allocation8 + $0xf0] sm:$0xff]
    %v3332 = vld [vmem:[#allocation8 + $0xf8] sm:$0xff]
    %v3333 = vld [vmem:[#allocation8 + $0x110] sm:$0xff]
    %v3334 = vld [vmem:[#allocation8 + $0x118] sm:$0xff]
    %v3335 = vld [vmem:[#allocation8 + $0x130] sm:$0xff]
    %v3336 = vld [vmem:[#allocation8 + $0x138] sm:$0xff]
    %v3337 = vld [vmem:[#allocation8 + $0x150] sm:$0xff]
    %v3338 = vld [vmem:[#allocation8 + $0x158] sm:$0xff]
    %v3339 = vld [vmem:[#allocation8 + $0x170] sm:$0xff]
    %v3340 = vld [vmem:[#allocation8 + $0x178] sm:$0xff]
    %v3341 = vld [vmem:[#allocation8 + $0x190] sm:$0xff]
    %v3342 = vld [vmem:[#allocation8 + $0x198] sm:$0xff]
    %v3343 = vld [vmem:[#allocation8 + $0x1b0] sm:$0xff]
    %v3344 = vld [vmem:[#allocation8 + $0x1b8] sm:$0xff]
    %v3345 = vld [vmem:[#allocation8 + $0x1d0] sm:$0xff]
    %v3346 = vld [vmem:[#allocation8 + $0x1d8] sm:$0xff]
    %v3347 = vld [vmem:[#allocation8 + $0x1f0] sm:$0xff]
    %v3348 = vld [vmem:[#allocation8 + $0x1f8] sm:$0xff]
    %v3381 = vunpack.c.l.b16 %v3317
    %v3382 = vunpack.c.h.b16 %v3317
    %v3383 = vunpack.c.l.b16 %v3318
    %v3384 = vunpack.c.h.b16 %v3318
    %v3385 = vunpack.c.l.b16 %v3319
    %v3386 = vunpack.c.h.b16 %v3319
    %v3387 = vunpack.c.l.b16 %v3320
    %v3388 = vunpack.c.h.b16 %v3320
    %v3389 = vunpack.c.l.b16 %v3321
    %v3390 = vunpack.c.h.b16 %v3321
    %v3391 = vunpack.c.l.b16 %v3322
    %v3392 = vunpack.c.h.b16 %v3322
    %v3393 = vunpack.c.l.b16 %v3323
    %v3394 = vunpack.c.h.b16 %v3323
    %v3395 = vunpack.c.l.b16 %v3324
    %v3396 = vunpack.c.h.b16 %v3324
    %v3397 = vunpack.c.l.b16 %v3325
    %v3398 = vunpack.c.h.b16 %v3325
    %v3399 = vunpack.c.l.b16 %v3326
    %v3400 = vunpack.c.h.b16 %v3326
    %v3401 = vunpack.c.l.b16 %v3327
    %v3402 = vunpack.c.h.b16 %v3327
    %v3403 = vunpack.c.l.b16 %v3328
    %v3404 = vunpack.c.h.b16 %v3328
    %v3405 = vunpack.c.l.b16 %v3329
    %v3406 = vunpack.c.h.b16 %v3329
    %v3407 = vunpack.c.l.b16 %v3330
    %v3408 = vunpack.c.h.b16 %v3330
    %v3409 = vunpack.c.l.b16 %v3331
    %v3410 = vunpack.c.h.b16 %v3331
    %v3411 = vunpack.c.l.b16 %v3332
    %v3412 = vunpack.c.h.b16 %v3332
    %v3413 = vunpack.c.l.b16 %v3333
    %v3414 = vunpack.c.h.b16 %v3333
    %v3415 = vunpack.c.l.b16 %v3334
    %v3416 = vunpack.c.h.b16 %v3334
    %v3417 = vunpack.c.l.b16 %v3335
    %v3418 = vunpack.c.h.b16 %v3335
    %v3419 = vunpack.c.l.b16 %v3336
    %v3420 = vunpack.c.h.b16 %v3336
    %v3421 = vunpack.c.l.b16 %v3337
    %v3422 = vunpack.c.h.b16 %v3337
    %v3423 = vunpack.c.l.b16 %v3338
    %v3424 = vunpack.c.h.b16 %v3338
    %v3425 = vunpack.c.l.b16 %v3339
    %v3426 = vunpack.c.h.b16 %v3339
    %v3427 = vunpack.c.l.b16 %v3340
    %v3428 = vunpack.c.h.b16 %v3340
    %v3429 = vunpack.c.l.b16 %v3341
    %v3430 = vunpack.c.h.b16 %v3341
    %v3431 = vunpack.c.l.b16 %v3342
    %v3432 = vunpack.c.h.b16 %v3342
    %v3433 = vunpack.c.l.b16 %v3343
    %v3434 = vunpack.c.h.b16 %v3343
    %v3435 = vunpack.c.l.b16 %v3344
    %v3436 = vunpack.c.h.b16 %v3344
    %v3437 = vunpack.c.l.b16 %v3345
    %v3438 = vunpack.c.h.b16 %v3345
    %v3439 = vunpack.c.l.b16 %v3346
    %v3440 = vunpack.c.h.b16 %v3346
    %v3441 = vunpack.c.l.b16 %v3347
    %v3442 = vunpack.c.h.b16 %v3347
    %v3443 = vunpack.c.l.b16 %v3348
    %v3444 = vunpack.c.h.b16 %v3348
    %v3445 = vpack.c.b16 %v3385, %v3381
    %v3446 = vpack.c.b16 %v3386, %v3382
    %v3447 = vpack.c.b16 %v3387, %v3383
    %v3448 = vpack.c.b16 %v3388, %v3384
    %v3449 = vpack.c.b16 %v3393, %v3389
    %v3450 = vpack.c.b16 %v3394, %v3390
    %v3451 = vpack.c.b16 %v3395, %v3391
    %v3452 = vpack.c.b16 %v3396, %v3392
    %v3453 = vpack.c.b16 %v3401, %v3397
    %v3454 = vpack.c.b16 %v3402, %v3398
    %v3455 = vpack.c.b16 %v3403, %v3399
    %v3456 = vpack.c.b16 %v3404, %v3400
    %v3457 = vpack.c.b16 %v3409, %v3405
    %v3458 = vpack.c.b16 %v3410, %v3406
    %v3459 = vpack.c.b16 %v3411, %v3407
    %v3460 = vpack.c.b16 %v3412, %v3408
    %v3461 = vpack.c.b16 %v3417, %v3413
    %v3462 = vpack.c.b16 %v3418, %v3414
    %v3463 = vpack.c.b16 %v3419, %v3415
    %v3464 = vpack.c.b16 %v3420, %v3416
    %v3465 = vpack.c.b16 %v3425, %v3421
    %v3466 = vpack.c.b16 %v3426, %v3422
    %v3467 = vpack.c.b16 %v3427, %v3423
    %v3468 = vpack.c.b16 %v3428, %v3424
    %v3469 = vpack.c.b16 %v3433, %v3429
    %v3470 = vpack.c.b16 %v3434, %v3430
    %v3471 = vpack.c.b16 %v3435, %v3431
    %v3472 = vpack.c.b16 %v3436, %v3432
    %v3473 = vpack.c.b16 %v3441, %v3437
    %v3474 = vpack.c.b16 %v3442, %v3438
    %v3475 = vpack.c.b16 %v3443, %v3439
    %v3476 = vpack.c.b16 %v3444, %v3440
    %3509 = vmatpush.bf16.msra.mxu0 %v3473
    %3510 = vmatpush.bf16.msra.mxu0 %v3469
    %3511 = vmatpush.bf16.msra.mxu0 %v3465
    %3512 = vmatpush.bf16.msra.mxu0 %v3461
    %3513 = vmatpush.bf16.msra.mxu0 %v3457
    %3514 = vmatpush.bf16.msra.mxu0 %v3453
    %3515 = vmatpush.bf16.msra.mxu0 %v3449
    %3516 = vmatpush.bf16.msra.mxu0 %v3445
    %3517 = vmatmul.bf16.gmra.mxu0 %v3316
    %v3518 = vpop.f32.mrf.mxu0
    %v3519 = vadd.f32 0.0, %v3518
    %v3520 = vpop.f32.mrf.mxu0
    %v3521 = vadd.f32 0.0, %v3520
    %3522 = vdwg.mxu0
    %3523 = vmatpush.bf16.msra.mxu0 %v3474
    %3524 = vmatpush.bf16.msra.mxu0 %v3470
    %3525 = vmatpush.bf16.msra.mxu0 %v3466
    %3526 = vmatpush.bf16.msra.mxu0 %v3462
    %3527 = vmatpush.bf16.msra.mxu0 %v3458
    %3528 = vmatpush.bf16.msra.mxu0 %v3454
    %3529 = vmatpush.bf16.msra.mxu0 %v3450
    %3530 = vmatpush.bf16.msra.mxu0 %v3446
    %3531 = vmatmul.bf16.gmra.mxu0 %v3316
    %v3532 = vpop.f32.mrf.mxu0
    %v3533 = vadd.f32 0.0, %v3532
    %v3534 = vpop.f32.mrf.mxu0
    %v3535 = vadd.f32 0.0, %v3534
    %3536 = vdwg.mxu0
    %3537 = vmatpush.bf16.msra.mxu0 %v3475
    %3538 = vmatpush.bf16.msra.mxu0 %v3471
    %3539 = vmatpush.bf16.msra.mxu0 %v3467
    %3540 = vmatpush.bf16.msra.mxu0 %v3463
    %3541 = vmatpush.bf16.msra.mxu0 %v3459
    %3542 = vmatpush.bf16.msra.mxu0 %v3455
    %3543 = vmatpush.bf16.msra.mxu0 %v3451
    %3544 = vmatpush.bf16.msra.mxu0 %v3447
    %3545 = vmatmul.bf16.gmra.mxu0 %v3316
    %v3546 = vpop.f32.mrf.mxu0
    %v3547 = vadd.f32 0.0, %v3546
    %v3548 = vpop.f32.mrf.mxu0
    %v3549 = vadd.f32 0.0, %v3548
    %3550 = vdwg.mxu0
    %3551 = vmatpush.bf16.msra.mxu0 %v3476
    %3552 = vmatpush.bf16.msra.mxu0 %v3472
    %3553 = vmatpush.bf16.msra.mxu0 %v3468
    %3554 = vmatpush.bf16.msra.mxu0 %v3464
    %3555 = vmatpush.bf16.msra.mxu0 %v3460
    %3556 = vmatpush.bf16.msra.mxu0 %v3456
    %3557 = vmatpush.bf16.msra.mxu0 %v3452
    %3558 = vmatpush.bf16.msra.mxu0 %v3448
    %3559 = vmatmul.bf16.gmra.mxu0 %v3316
    %v3560 = vpop.f32.mrf.mxu0
    %v3561 = vadd.f32 0.0, %v3560
    %v3562 = vpop.f32.mrf.mxu0
    %v3563 = vadd.f32 0.0, %v3562
    %3564 = vdwg.mxu0
    %v3565 = vmul.f32 %v3519, %v3519
    %v3566 = vmul.f32 %v3533, %v3533
    %v3567 = vmul.f32 %v3521, %v3521
    %v3568 = vmul.f32 %v3535, %v3535
    %v3569 = vmul.f32 %v3519, %v3565
    %v3570 = vmul.f32 %v3533, %v3566
    %v3571 = vmul.f32 %v3521, %v3567
    %v3572 = vmul.f32 %v3535, %v3568
    %v3573 = vmul.f32 %v3569, 0.044715
    %v3574 = vmul.f32 %v3570, 0.044715
    %v3575 = vmul.f32 %v3571, 0.044715
    %v3576 = vmul.f32 %v3572, 0.044715
    %v3577 = vadd.f32 %v3519, %v3573
    %v3578 = vadd.f32 %v3533, %v3574
    %v3579 = vadd.f32 %v3521, %v3575
    %v3580 = vadd.f32 %v3535, %v3576
    %v3581 = vmul.f32 %v3577, 0.7978846
    %v3582 = vmul.f32 %v3578, 0.7978846
    %v3583 = vmul.f32 %v3579, 0.7978846
    %v3584 = vmul.f32 %v3580, 0.7978846
    %v3585 = vtanh.pop %v3581
    %v3586 = vtanh.pop %v3582
    %v3587 = vtanh.pop %v3583
    %v3588 = vtanh.pop %v3584
    %v3589 = vadd.f32 %v3585, 1.0
    %v3590 = vadd.f32 %v3586, 1.0
    %v3591 = vadd.f32 %v3587, 1.0
    %v3592 = vadd.f32 %v3588, 1.0
    %v3593 = vmul.f32 %v3589, 0.5
    %v3594 = vmul.f32 %v3590, 0.5
    %v3595 = vmul.f32 %v3591, 0.5
    %v3596 = vmul.f32 %v3592, 0.5
    %v3597 = vmul.f32 %v3519, %v3593
    %v3598 = vmul.f32 %v3533, %v3594
    %v3599 = vmul.f32 %v3521, %v3595
    %v3600 = vmul.f32 %v3535, %v3596
    %v3601 = vmul.f32 %v3597, %v3547
    %v3602 = vmul.f32 %v3598, %v3561
    %v3603 = vmul.f32 %v3599, %v3549
    %v3604 = vmul.f32 %v3600, %v3563
    %v3605 = vpack.c.bf16 %v3603, %v3601
    %v3606 = vpack.c.bf16 %v3604, %v3602
    %v3607 = vld [vmem:[#allocation10 + $0x4] sm:$0xf]
    %v3608 = vld [vmem:[#allocation10 + $0xc] sm:$0xf]
    %v3609 = vld [vmem:[#allocation10 + $0x14] sm:$0xf]
    %v3610 = vld [vmem:[#allocation10 + $0x1c] sm:$0xf]
    %v3611 = vld [vmem:[#allocation10 + $0x24] sm:$0xf]
    %v3612 = vld [vmem:[#allocation10 + $0x2c] sm:$0xf]
    %v3613 = vld [vmem:[#allocation10 + $0x34] sm:$0xf]
    %v3614 = vld [vmem:[#allocation10 + $0x3c] sm:$0xf]
    %v3615 = vld [vmem:[#allocation10 + $0x44] sm:$0xf]
    %v3616 = vld [vmem:[#allocation10 + $0x4c] sm:$0xf]
    %v3617 = vld [vmem:[#allocation10 + $0x54] sm:$0xf]
    %v3618 = vld [vmem:[#allocation10 + $0x5c] sm:$0xf]
    %v3619 = vld [vmem:[#allocation10 + $0x64] sm:$0xf]
    %v3620 = vld [vmem:[#allocation10 + $0x6c] sm:$0xf]
    %v3621 = vld [vmem:[#allocation10 + $0x74] sm:$0xf]
    %v3622 = vld [vmem:[#allocation10 + $0x7c] sm:$0xf]
    %v3623 = vld [vmem:[#allocation10 + $0x84] sm:$0xf]
    %v3624 = vld [vmem:[#allocation10 + $0x8c] sm:$0xf]
    %v3625 = vld [vmem:[#allocation10 + $0x94] sm:$0xf]
    %v3626 = vld [vmem:[#allocation10 + $0x9c] sm:$0xf]
    %v3627 = vld [vmem:[#allocation10 + $0xa4] sm:$0xf]
    %v3628 = vld [vmem:[#allocation10 + $0xac] sm:$0xf]
    %v3629 = vld [vmem:[#allocation10 + $0xb4] sm:$0xf]
    %v3630 = vld [vmem:[#allocation10 + $0xbc] sm:$0xf]
    %v3631 = vld [vmem:[#allocation10 + $0xc4] sm:$0xf]
    %v3632 = vld [vmem:[#allocation10 + $0xcc] sm:$0xf]
    %v3633 = vld [vmem:[#allocation10 + $0xd4] sm:$0xf]
    %v3634 = vld [vmem:[#allocation10 + $0xdc] sm:$0xf]
    %v3635 = vld [vmem:[#allocation10 + $0xe4] sm:$0xf]
    %v3636 = vld [vmem:[#allocation10 + $0xec] sm:$0xf]
    %v3637 = vld [vmem:[#allocation10 + $0xf4] sm:$0xf]
    %v3638 = vld [vmem:[#allocation10 + $0xfc] sm:$0xf]
    %v3671 = vunpack.c.l.b16 %v3607
    %v3672 = vunpack.c.l.b16 %v3608
    %v3673 = vunpack.c.l.b16 %v3609
    %v3674 = vunpack.c.l.b16 %v3610
    %v3675 = vunpack.c.l.b16 %v3611
    %v3676 = vunpack.c.l.b16 %v3612
    %v3677 = vunpack.c.l.b16 %v3613
    %v3678 = vunpack.c.l.b16 %v3614
    %v3679 = vunpack.c.l.b16 %v3615
    %v3680 = vunpack.c.l.b16 %v3616
    %v3681 = vunpack.c.l.b16 %v3617
    %v3682 = vunpack.c.l.b16 %v3618
    %v3683 = vunpack.c.l.b16 %v3619
    %v3684 = vunpack.c.l.b16 %v3620
    %v3685 = vunpack.c.l.b16 %v3621
    %v3686 = vunpack.c.l.b16 %v3622
    %v3687 = vunpack.c.l.b16 %v3623
    %v3688 = vunpack.c.l.b16 %v3624
    %v3689 = vunpack.c.l.b16 %v3625
    %v3690 = vunpack.c.l.b16 %v3626
    %v3691 = vunpack.c.l.b16 %v3627
    %v3692 = vunpack.c.l.b16 %v3628
    %v3693 = vunpack.c.l.b16 %v3629
    %v3694 = vunpack.c.l.b16 %v3630
    %v3695 = vunpack.c.l.b16 %v3631
    %v3696 = vunpack.c.l.b16 %v3632
    %v3697 = vunpack.c.l.b16 %v3633
    %v3698 = vunpack.c.l.b16 %v3634
    %v3699 = vunpack.c.l.b16 %v3635
    %v3700 = vunpack.c.l.b16 %v3636
    %v3701 = vunpack.c.l.b16 %v3637
    %v3702 = vunpack.c.l.b16 %v3638
    %v3703 = vpack.c.b16 %v3672, %v3671
    %v3704 = vpack.c.b16 %v3674, %v3673
    %v3705 = vpack.c.b16 %v3676, %v3675
    %v3706 = vpack.c.b16 %v3678, %v3677
    %v3707 = vpack.c.b16 %v3680, %v3679
    %v3708 = vpack.c.b16 %v3682, %v3681
    %v3709 = vpack.c.b16 %v3684, %v3683
    %v3710 = vpack.c.b16 %v3686, %v3685
    %v3711 = vpack.c.b16 %v3688, %v3687
    %v3712 = vpack.c.b16 %v3690, %v3689
    %v3713 = vpack.c.b16 %v3692, %v3691
    %v3714 = vpack.c.b16 %v3694, %v3693
    %v3715 = vpack.c.b16 %v3696, %v3695
    %v3716 = vpack.c.b16 %v3698, %v3697
    %v3717 = vpack.c.b16 %v3700, %v3699
    %v3718 = vpack.c.b16 %v3702, %v3701
    %3735 = vmatpush.bf16.msra.mxu0 %v3710
    %3736 = vmatpush.bf16.msra.mxu0 %v3709
    %3737 = vmatpush.bf16.msra.mxu0 %v3708
    %3738 = vmatpush.bf16.msra.mxu0 %v3707
    %3739 = vmatpush.bf16.msra.mxu0 %v3706
    %3740 = vmatpush.bf16.msra.mxu0 %v3705
    %3741 = vmatpush.bf16.msra.mxu0 %v3704
    %3742 = vmatpush.bf16.msra.mxu0 %v3703
    %3743 = vmatmul.bf16.gmra.mxu0 %v3605
    %v3744 = vpop.f32.mrf.mxu0
    %v3745 = vadd.f32 0.0, %v3744
    %v3746 = vpop.f32.mrf.mxu0
    %v3747 = vadd.f32 0.0, %v3746
    %3748 = vdwg.mxu0
    %3749 = vmatpush.bf16.msra.mxu0 %v3718
    %3750 = vmatpush.bf16.msra.mxu0 %v3717
    %3751 = vmatpush.bf16.msra.mxu0 %v3716
    %3752 = vmatpush.bf16.msra.mxu0 %v3715
    %3753 = vmatpush.bf16.msra.mxu0 %v3714
    %3754 = vmatpush.bf16.msra.mxu0 %v3713
    %3755 = vmatpush.bf16.msra.mxu0 %v3712
    %3756 = vmatpush.bf16.msra.mxu0 %v3711
    %3757 = vmatmul.bf16.gmra.mxu0 %v3606
    %v3758 = vpop.f32.mrf.mxu0
    %v3759 = vadd.f32 %v3745, %v3758
    %v3760 = vpop.f32.mrf.mxu0
    %v3761 = vadd.f32 %v3747, %v3760
    %3762 = vdwg.mxu0
    %v3763 = vadd.f32 %v3278, %v3759
    %v3764 = vadd.f32 %v3279, %v3761
    %v3765 = vmul.f32 %v3763, %v3763
    %v3766 = vmul.f32 %v3764, %v3764
    %3767 = vadd.xlane.f32.xlu0 %v3765
    %v3768 = vpop.xlane.xlu0 %3767
    %3769 = vadd.xlane.f32.xlu0 %v3766
    %v3770 = vpop.xlane.xlu0 %3769
    %v3771 = vmul.f32 %v3768, %v231
    %v3772 = vmul.f32 %v3770, %v231
    %v3773 = vadd.f32 %v3771, 1e-06
    %v3774 = vadd.f32 %v3772, 1e-06
    %v3775 = vrsqrt.pop %v3773
    %v3776 = vmul.f32 %v3775, %v3773
    %v3777 = vmul.f32 %v3776, %v3775
    %v3778 = vmul.f32 0.5, %v3777
    %v3779 = vsub.f32 1.5, %v3778
    %v3780 = vmul.f32 %v3775, %v3779
    %vm3781 = vweird.f32 %v3773
    %vm3782 = vweird.f32 %v3775
    %vm3783 = vmor %vm3781, %vm3782
    %v3784 = vsel %vm3783, %v3775, %v3780
    %v3785 = vrsqrt.pop %v3774
    %v3786 = vmul.f32 %v3785, %v3774
    %v3787 = vmul.f32 %v3786, %v3785
    %v3788 = vmul.f32 0.5, %v3787
    %v3789 = vsub.f32 1.5, %v3788
    %v3790 = vmul.f32 %v3785, %v3789
    %vm3791 = vweird.f32 %v3774
    %vm3792 = vweird.f32 %v3785
    %vm3793 = vmor %vm3791, %vm3792
    %v3794 = vsel %vm3793, %v3785, %v3790
    %v3795 = vmul.f32 %v3763, %v3784
    %v3796 = vmul.f32 %v3764, %v3794
    %v3797 = vld [vmem:[%s5 + $0x6] sm:$0x1]
    %v3798 = vperm.slane %v3797, 0
    %v3799 = vmul.f32 %v3795, %v3798
    %v3800 = vmul.f32 %v3796, %v3798
    %v3801 = vpack.c.bf16 %v3800, %v3799
    %v3802 = vld [vmem:[#allocation7 + $0xc] sm:$0xf]
    %v3803 = vld [vmem:[#allocation7 + $0x1c] sm:$0xf]
    %v3804 = vld [vmem:[#allocation7 + $0x2c] sm:$0xf]
    %v3805 = vld [vmem:[#allocation7 + $0x3c] sm:$0xf]
    %v3806 = vld [vmem:[#allocation7 + $0x4c] sm:$0xf]
    %v3807 = vld [vmem:[#allocation7 + $0x5c] sm:$0xf]
    %v3808 = vld [vmem:[#allocation7 + $0x6c] sm:$0xf]
    %v3809 = vld [vmem:[#allocation7 + $0x7c] sm:$0xf]
    %v3810 = vld [vmem:[#allocation7 + $0x8c] sm:$0xf]
    %v3811 = vld [vmem:[#allocation7 + $0x9c] sm:$0xf]
    %v3812 = vld [vmem:[#allocation7 + $0xac] sm:$0xf]
    %v3813 = vld [vmem:[#allocation7 + $0xbc] sm:$0xf]
    %v3814 = vld [vmem:[#allocation7 + $0xcc] sm:$0xf]
    %v3815 = vld [vmem:[#allocation7 + $0xdc] sm:$0xf]
    %v3816 = vld [vmem:[#allocation7 + $0xec] sm:$0xf]
    %v3817 = vld [vmem:[#allocation7 + $0xfc] sm:$0xf]
    %v3834 = vunpack.c.l.b16 %v3802
    %v3835 = vunpack.c.l.b16 %v3803
    %v3836 = vunpack.c.l.b16 %v3804
    %v3837 = vunpack.c.l.b16 %v3805
    %v3838 = vunpack.c.l.b16 %v3806
    %v3839 = vunpack.c.l.b16 %v3807
    %v3840 = vunpack.c.l.b16 %v3808
    %v3841 = vunpack.c.l.b16 %v3809
    %v3842 = vunpack.c.l.b16 %v3810
    %v3843 = vunpack.c.l.b16 %v3811
    %v3844 = vunpack.c.l.b16 %v3812
    %v3845 = vunpack.c.l.b16 %v3813
    %v3846 = vunpack.c.l.b16 %v3814
    %v3847 = vunpack.c.l.b16 %v3815
    %v3848 = vunpack.c.l.b16 %v3816
    %v3849 = vunpack.c.l.b16 %v3817
    %v3850 = vpack.c.b16 %v3835, %v3834
    %v3851 = vpack.c.b16 %v3837, %v3836
    %v3852 = vpack.c.b16 %v3839, %v3838
    %v3853 = vpack.c.b16 %v3841, %v3840
    %v3854 = vpack.c.b16 %v3843, %v3842
    %v3855 = vpack.c.b16 %v3845, %v3844
    %v3856 = vpack.c.b16 %v3847, %v3846
    %v3857 = vpack.c.b16 %v3849, %v3848
    %3866 = vmatpush.bf16.msra.mxu0 %v3857
    %3867 = vmatpush.bf16.msra.mxu0 %v3856
    %3868 = vmatpush.bf16.msra.mxu0 %v3855
    %3869 = vmatpush.bf16.msra.mxu0 %v3854
    %3870 = vmatpush.bf16.msra.mxu0 %v3853
    %3871 = vmatpush.bf16.msra.mxu0 %v3852
    %3872 = vmatpush.bf16.msra.mxu0 %v3851
    %3873 = vmatpush.bf16.msra.mxu0 %v3850
    %3874 = vmatmul.bf16.gmra.mxu0 %v3801
    %v3875 = vpop.f32.mrf.mxu0
    %v3876 = vadd.f32 0.0, %v3875
    %v3877 = vpop.f32.mrf.mxu0
    %v3878 = vadd.f32 0.0, %v3877
    %3879 = vdwg.mxu0
    %v3880 = vld [vmem:[%s2] sm:$0xff]
    %v3881 = vld [vmem:[%s2 + $0x8] sm:$0xff]
    %3882 = vmax.xlane.f32.xlu0 %v3876
    %v3883 = vpop.xlane.xlu0 %3882
    %3884 = vmax.xlane.f32.xlu0 %v3878
    %v3885 = vpop.xlane.xlu0 %3884
    %v3886 = vsub.f32 %v3876, %v3883
    %v3887 = vsub.f32 %v3878, %v3885
    %v3888 = vmul.f32 %v3886, 1.442695
    %v3889 = vpow.pop %v3888
    %v3890 = vmul.f32 %v3887, 1.442695
    %v3891 = vpow.pop %v3890
    %3892 = vadd.xlane.f32.xlu0 %v3889
    %v3893 = vpop.xlane.xlu0 %3892
    %3894 = vadd.xlane.f32.xlu0 %v3891
    %v3895 = vpop.xlane.xlu0 %3894
    %v3896 = vlog2.pop %v3893
    %v3897 = vmul.f32 %v3896, 0.6931472
    %v3898 = vlog2.pop %v3895
    %v3899 = vmul.f32 %v3898, 0.6931472
    %v3900 = vadd.f32 %v3897, %v3883
    %v3901 = vadd.f32 %v3899, %v3885
    %3902 = vset.pattern.permute.xlu0 0
    %3903 = vperm.xlu0 %3902, %v3880
    %v3904 = vpop.permute.xlu0 %3903
    %3905 = vset.pattern.permute.xlu0 0
    %3906 = vperm.xlu0 %3905, %v3881
    %v3907 = vpop.permute.xlu0 %3906
    %vm3908 = vcmp.eq.s32.totalorder %v123, %v3904
    %vm3909 = vcmp.eq.s32.totalorder %v123, %v3907
    %v3910 = vsel %vm3908, %v3876, 0.0
    %v3911 = vsel %vm3909, %v3878, 0.0
    %3912 = vadd.xlane.f32.xlu0 %v3910
    %v3913 = vpop.xlane.xlu0 %3912
    %3914 = vadd.xlane.f32.xlu0 %v3911
    %v3915 = vpop.xlane.xlu0 %3914
    %vm3916 = vcmp.ne.s32.totalorder %v3880, 4294967196
    %vm3917 = vcmp.ne.s32.totalorder %v3881, 4294967196
    %v3918 = vsel %vm3916, 1, 0
    %v3919 = vsel %vm3917, 1, 0
    %v3920 = vcvt.s32.f32 %v3918
    %v3921 = vcvt.s32.f32 %v3919
    %v3922 = vsub.f32 %v3900, %v3913
    %v3923 = vsub.f32 %v3901, %v3915
    %v3924 = vmul.f32 %v3922, %v3920
    %v3925 = vmul.f32 %v3923, %v3921
    %vm3926 = vcmask 7168
    %v3927 = vsel %vm3926, %v3924, 0.0
    %v3928 = vsel %vm3926, %v3925, 0.0
    %v3929 = vadd.f32 %v3927, %v3928
    %3930 = vadd.xlane.f32.xlu0 %v3929
    %v3931 = vpop.xlane.xlu0 %3930
    %v3932 = vrot.slane %v3931, 4
    %v3933 = vadd.f32 %v3931, %v3932
    %v3934 = vrot.slane %v3933, 2
    %v3935 = vadd.f32 %v3933, %v3934
    %v3936 = vrot.slane %v3935, 1
    %v3937 = vadd.f32 %v3935, %v3936
    %s3938 = vtos %v3937
    %v3939 = vstv %s3938
    %v3940 = vsel %vm3926, %v3920, 0.0
    %v3941 = vsel %vm3926, %v3921, 0.0
    %v3942 = vadd.f32 %v3940, %v3941
    %3943 = vadd.xlane.f32.xlu0 %v3942
    %v3944 = vpop.xlane.xlu0 %3943
    %v3945 = vrot.slane %v3944, 4
    %v3946 = vadd.f32 %v3944, %v3945
    %v3947 = vrot.slane %v3946, 2
    %v3948 = vadd.f32 %v3946, %v3947
    %v3949 = vrot.slane %v3948, 1
    %v3950 = vadd.f32 %v3948, %v3949
    %s3951 = vtos %v3950
    %v3952 = vstv %s3951
    %v3953 = vmax.f32 %v3952, 1.0
    %v3954 = vrcp.pop %v3953
    %v3955 = vmul.f32 %v3939, %v3954
    %s3956 = vtos %v3955
    %s3957 = scalar_lea.smem [#allocation11], 0
    %3958 = sst [smem:[%s3957]] %s3956
    // Predicated region
    $region62: #{tpu_custom_call.1} parent=1 // pred_check
      _
    $region63: #{tpu_custom_call.1} parent=1 // pred_check_branch
      %3960 = sbr.rel (0) target = $region65
    $region64: #{tpu_custom_call.1} parent=1 // pred_region
      %3962 = vsyncadd [#allocation4], 0
      %s3964 = sshll.u32 %s10, 4
      %s3965 = int_to_ptr.hbm [resolvable:$true] %s3964
      %3967 = dma.smem_to_hbm [#allocation11], 16, %s3965, [#allocation4]
    $region65: #{tpu_custom_call.1} parent=1 // pred_fallthru
      _
    // Predicated region
    $region66: #{tpu_custom_call.1} parent=1 // pred_check
      _
    $region67: #{tpu_custom_call.1} parent=1 // pred_check_branch
      %3969 = sbr.rel (0) target = $region69
    $region68: #{tpu_custom_call.1} parent=1 // pred_region
      %3971 = dma.done [#allocation4], 16
    $region69: #{tpu_custom_call.1} parent=1 // pred_fallthru
      _
    %3972 = sfence
    %3973 = vsyncpa [#allocation3], 1
    %3974 = vsyncpa [#allocation6], 1
    %3975 = vsyncpa [#allocation9], 1
    %3976 = vsyncpa [#allocation4], 1

</llo_original>
